<compile_context>
chip_gen: v5e
topology: v5e:2x2
jax: 0.10.0
libtpu: 0.0.40
codegen_flags: <defaults>
</compile_context>

<pallas_src>
import functools

import jax
import jax.numpy as jnp
from jax import lax
from jax.experimental import pallas as pl
from jax.experimental.pallas import tpu as pltpu

EXPANSION = 4
BN_EPS = 1e-5
LANE = 128                     # channel padding unit == vreg lane width
ACT_DTYPE = jnp.bfloat16       # activation / matmul-weight storage dtype


def _round_up(x, m):
    return (x + m - 1) // m * m


@functools.lru_cache(maxsize=None)
def _vmem_limit_bytes():
    """Generation-aware scoped-VMEM limit (headroom under physical VMEM, esp. v7x)."""
    cap = 128 * 1024 * 1024
    try:
        cap = int(pltpu.get_tpu_info().vmem_capacity_bytes)
    except Exception:  # best-effort query; fall back to v5e/v6e capacity
        pass
    return int(min(max(cap - 16 * 1024 * 1024, 32 * 1024 * 1024), 96 * 1024 * 1024))


# ---------------------------------------------------------------------------
# Fused SeparableConvBnRelu kernel (depthwise 3x3 -> 1x1 + folded BN + ReLU [+ residual])
# ---------------------------------------------------------------------------
def _sep_conv_body(x_ref, dw_ref, w_ref, b_ref, r_ref, o_ref, xpad_ref, *,
                   stride, padding, dilation):
    """One image per grid step.

    x_ref   : (H, W, Cin_p)    bf16 input tile
    dw_ref  : (16, Cin_p)      f32 depthwise taps, rows 0..8 (row-major 3x3), rest zero
    w_ref   : (Cin_p, Cout_p)  bf16 1x1 weights with the BN scale folded in
    b_ref   : (1, Cout_p)      f32 folded bias (conv bias + BN shift)
    r_ref   : (Ho, Wo, Cout_p) optional residual (Block shortcut), or None
    o_ref   : (Ho, Wo, Cout_p) output tile
    xpad_ref: (Hp, Wp, Cin_p)  f32 scratch holding the zero-padded input (halo in VMEM)
    """
    h, w, cin = x_ref.shape
    ho, wo, cout = o_ref.shape

    # Halo handled on-chip: zero the padded scratch, up-cast the input tile exactly once.
    xpad_ref[...] = jnp.zeros_like(xpad_ref)
    xpad_ref[pl.ds(padding, h), pl.ds(padding, w), :] = x_ref[...].astype(jnp.float32)

    # Depthwise 3x3: nine (strided) window loads from VMEM, accumulated in f32.
    acc = jnp.zeros((ho, wo, cin), jnp.float32)
    for i in range(3):
        for j in range(3):
            r0, c0 = i * dilation, j * dilation
            if stride == 1:
                win = xpad_ref[pl.ds(r0, ho), pl.ds(c0, wo), :]
            else:
                # TODO(synk): stride-2 on the sublane (W) axis lowers to strided loads;
                # an even/odd-W deinterleave would keep the vld slots dense.
                win = xpad_ref[pl.ds(r0, ho, stride), pl.ds(c0, wo, stride), :]
            tap = dw_ref[pl.ds(i * 3 + j, 1), :].reshape(1, 1, cin)
            acc = acc + win * tap

    # Pointwise 1x1 conv on the MXU (bf16 x bf16 -> f32 accumulation), bias + ReLU.
    y = jnp.dot(acc.reshape(ho * wo, cin).astype(ACT_DTYPE), w_ref[...],
                preferred_element_type=jnp.float32)
    y = jnp.maximum(y + b_ref[...], 0.0)                       # CBR bias + ReLU
    y = y.reshape(ho, wo, cout)
    if r_ref is not None:                                       # Block: relu(shortcut + residual)
        y = jnp.maximum(y + r_ref[...].astype(jnp.float32), 0.0)
    o_ref[...] = y.astype(o_ref.dtype)


def _sep_conv_kernel(x_ref, dw_ref, w_ref, b_ref, o_ref, xpad_ref, **kw):
    _sep_conv_body(x_ref, dw_ref, w_ref, b_ref, None, o_ref, xpad_ref, **kw)


def _sep_conv_residual_kernel(x_ref, dw_ref, w_ref, b_ref, r_ref, o_ref, xpad_ref, **kw):
    _sep_conv_body(x_ref, dw_ref, w_ref, b_ref, r_ref, o_ref, xpad_ref, **kw)


# ---------------------------------------------------------------------------
# Pallas wrapper
# ---------------------------------------------------------------------------
def separable_conv_bn_relu(x, p, *, stride, padding, dilation,
                           residual=None, out_dtype=ACT_DTYPE):
    """x: (N, H, W, Cin_p) padded NHWC bf16.  Returns (N, Ho, Wo, Cout_p)."""
    n, h, w, cin_p = x.shape
    cout_p = p["w"].shape[1]
    hp, wp = h + 2 * padding, w + 2 * padding
    span = 2 * dilation + 1
    ho = (hp - span) // stride + 1
    wo = (wp - span) // stride + 1

    args = [x, p["dw"], p["w"], p["b"]]
    in_specs = [
        pl.BlockSpec((None, h, w, cin_p), lambda b: (b, 0, 0, 0)),
        pl.BlockSpec((16, cin_p), lambda b: (0, 0)),
        pl.BlockSpec((cin_p, cout_p), lambda b: (0, 0)),
        pl.BlockSpec((1, cout_p), lambda b: (0, 0)),
    ]
    if residual is not None:
        args.append(residual)
        in_specs.append(pl.BlockSpec((None, ho, wo, cout_p), lambda b: (b, 0, 0, 0)))
        kernel = _sep_conv_residual_kernel
    else:
        kernel = _sep_conv_kernel

    # Cost hint counts the padded (lane-dense) work that actually executes on the HW.
    flops = 2 * n * ho * wo * cin_p * (9 + cout_p)
    bytes_accessed = sum(int(a.size) * a.dtype.itemsize for a in args)
    bytes_accessed += n * ho * wo * cout_p * jnp.dtype(out_dtype).itemsize

    return pl.pallas_call(
        functools.partial(kernel, stride=stride, padding=padding, dilation=dilation),
        out_shape=jax.ShapeDtypeStruct((n, ho, wo, cout_p), out_dtype),
        grid=(n,),
        in_specs=in_specs,
        out_specs=pl.BlockSpec((None, ho, wo, cout_p), lambda b: (b, 0, 0, 0)),
        scratch_shapes=[pltpu.VMEM((hp, wp, cin_p), jnp.float32)],
        compiler_params=pltpu.CompilerParams(
            dimension_semantics=("parallel",),
            vmem_limit_bytes=_vmem_limit_bytes(),
        ),
        cost_estimate=pl.CostEstimate(
            flops=flops, transcendentals=0, bytes_accessed=bytes_accessed),
    )(*args)


# ---------------------------------------------------------------------------
# Deterministic parameter init (inference-mode BN folded into the 1x1 weights)
# ---------------------------------------------------------------------------
def init_separable_conv(key, cin, cout):
    """Returns (kernel-ready padded params, full-f32 params for the pure-JAX reference)."""
    k1, k2, k3, k4, k5, k6, k7 = jax.random.split(key, 7)
    dw = jax.random.normal(k1, (3, 3, cin), jnp.float32) / 3.0            # depthwise, no bias
    pw = jax.random.normal(k2, (cin, cout), jnp.float32) / jnp.sqrt(cin)   # 1x1 conv weight
    pw_b = 0.1 * jax.random.normal(k3, (cout,), jnp.float32)               # 1x1 conv bias
    gamma = 1.0 + 0.1 * jax.random.normal(k4, (cout,), jnp.float32)
    beta = 0.1 * jax.random.normal(k5, (cout,), jnp.float32)
    mean = 0.1 * jax.random.normal(k6, (cout,), jnp.float32)
    var = 0.9 + 0.1 * jnp.abs(jax.random.normal(k7, (cout,), jnp.float32))

    scale = gamma * lax.rsqrt(var + BN_EPS)
    w_folded = pw * scale[None, :]                  # BN scale folded into weight columns
    b_folded = beta + (pw_b - mean) * scale         # conv bias + BN shift folded

    cin_p, cout_p = _round_up(cin, LANE), _round_up(cout, LANE)
    dw_pad = jnp.zeros((16, cin_p), jnp.float32).at[:9, :cin].set(dw.reshape(9, cin))
    w_pad = jnp.zeros((cin_p, cout_p), ACT_DTYPE).at[:cin, :cout].set(w_folded.astype(ACT_DTYPE))
    b_pad = jnp.zeros((1, cout_p), jnp.float32).at[:, :cout].set(b_folded)

    kernel_params = {"dw": dw_pad, "w": w_pad, "b": b_pad}
    raw_params = {"dw": dw, "w": w_folded, "b": b_folded}     # true f32 reference params
    return kernel_params, raw_params


def init_block(key, in_channels, mid_out_channels, has_proj, stride, dilation=1):
    if not has_proj:
        assert in_channels == mid_out_channels * EXPANSION and stride == 1, (
            "identity shortcut requires in_channels == mid*4 and stride == 1")
    keys = jax.random.split(key, 4)
    cfg = dict(in_channels=in_channels, mid=mid_out_channels, has_proj=has_proj,
               stride=stride, dilation=dilation)
    kparams, rparams = {}, {}
    kparams["b1"], rparams["b1"] = init_separable_conv(keys[0], in_channels, mid_out_channels)
    kparams["b2"], rparams["b2"] = init_separable_conv(keys[1], mid_out_channels, mid_out_channels)
    kparams["b3"], rparams["b3"] = init_separable_conv(
        keys[2], mid_out_channels, mid_out_channels * EXPANSION)
    if has_proj:
        kparams["proj"], rparams["proj"] = init_separable_conv(
            keys[3], in_channels, mid_out_channels * EXPANSION)
    return cfg, kparams, rparams


# ---------------------------------------------------------------------------
# Forward pass (Pallas): Blocks chain in internal padded-NHWC bf16
# ---------------------------------------------------------------------------
def block_forward(x, cfg, p, out_dtype=ACT_DTYPE):
    """`Block` forward; x: (N, H, W, round_up(Cin,128)) bf16 NHWC (lane-padded)."""
    s, d = cfg["stride"], cfg["dilation"]
    if cfg["has_proj"]:
        shortcut = separable_conv_bn_relu(x, p["proj"], stride=s, padding=1, dilation=1)
    else:
        shortcut = x   # identity path (validated in init_block: Cin == mid*4, stride == 1)
    r = separable_conv_bn_relu(x, p["b1"], stride=s, padding=d, dilation=d)
    r = separable_conv_bn_relu(r, p["b2"], stride=1, padding=1, dilation=1)
    # Last separable conv fuses the Block's relu(shortcut + residual) into its epilogue.
    return separable_conv_bn_relu(r, p["b3"], stride=1, padding=1, dilation=1,
                                  residual=shortcut, out_dtype=out_dtype)


def blocks_forward(x_nchw, blocks):
    """Chain of Blocks. NCHW f32 in/out; layout conversion happens once per boundary."""
    cin = blocks[0][0]["in_channels"]
    cin_p = _round_up(cin, LANE)
    x = jnp.transpose(x_nchw, (0, 2, 3, 1)).astype(ACT_DTYPE)        # NCHW -> NHWC (once)
    if cin_p != cin:
        x = jnp.pad(x, ((0, 0), (0, 0), (0, 0), (0, cin_p - cin)))   # channel pad (once)
    for idx, (cfg, p) in enumerate(blocks):
        last = idx == len(blocks) - 1
        x = block_forward(x, cfg, p, out_dtype=jnp.float32 if last else ACT_DTYPE)
    cout = blocks[-1][0]["mid"] * EXPANSION
    return jnp.transpose(x[..., :cout], (0, 3, 1, 2))                # NHWC -> NCHW (once)


# ---------------------------------------------------------------------------
# Pure-JAX f32 reference (verification only)
# ---------------------------------------------------------------------------
def _ref_separable(x, raw, *, stride, padding, dilation):
    cin = x.shape[-1]
    y = lax.conv_general_dilated(
        x, raw["dw"].reshape(3, 3, 1, cin),
        window_strides=(stride, stride),
        padding=[(padding, padding), (padding, padding)],
        rhs_dilation=(dilation, dilation),
        dimension_numbers=("NHWC", "HWIO", "NHWC"),
        feature_group_count=cin)
    y = jnp.tensordot(y, raw["w"], axes=([3], [0])) + raw["b"]
    return jnp.maximum(y, 0.0)


def block_reference(x_nchw, cfg, raw):
    s, d = cfg["stride"], cfg["dilation"]
    x = jnp.transpose(x_nchw, (0, 2, 3, 1)).astype(jnp.float32)
    shortcut = (_ref_separable(x, raw["proj"], stride=s, padding=1, dilation=1)
                if cfg["has_proj"] else x)
    r = _ref_separable(x, raw["b1"], stride=s, padding=d, dilation=d)
    r = _ref_separable(r, raw["b2"], stride=1, padding=1, dilation=1)
    r = _ref_separable(r, raw["b3"], stride=1, padding=1, dilation=1)
    out = jnp.maximum(shortcut + r, 0.0)
    return jnp.transpose(out, (0, 3, 1, 2))


# ---------------------------------------------------------------------------
if __name__ == "__main__":
    key = jax.random.PRNGKey(0)
    kp1, kp2, kx = jax.random.split(key, 3)

    # Block 1: projection shortcut, stride 2 (typical first block of a stage).
    cfg1, params1, raw1 = init_block(kp1, in_channels=32, mid_out_channels=16,
                                     has_proj=True, stride=2, dilation=1)
    # Block 2: identity shortcut, stride 1 (subsequent block of the same stage).
    cfg2, params2, raw2 = init_block(kp2, in_channels=64, mid_out_channels=16,
                                     has_proj=False, stride=1, dilation=1)

    x = jax.random.normal(kx, (2, 32, 16, 16), jnp.float32)   # NCHW, like PyTorch

    fwd = jax.jit(lambda inp: blocks_forward(inp, [(cfg1, params1), (cfg2, params2)]))
    out = jax.block_until_ready(fwd(x))
    assert out.shape == (2, 16 * EXPANSION, 8, 8), out.shape

    # Validate against the TRUE f32-weight reference.  Tolerance documents the kernel's
    # bf16 activation/weight storage (f32 accumulation) over 7 chained conv stages.
    ref = block_reference(block_reference(x, cfg1, raw1), cfg2, raw2)
    max_err = float(jnp.max(jnp.abs(out - ref)))
    max_ref = float(jnp.max(jnp.abs(ref)))
    assert bool(jnp.all(jnp.isfinite(out)))
    assert max_err <= 1e-1 + 8e-2 * max_ref, (max_err, max_ref)

    print("KERNEL_OK")
</pallas_src>

<mosaic_0001>
module attributes {stable_mosaic.version = 11 : i64} {
  func.func @_sep_conv_kernel(%arg0: i32, %arg1: memref<1x16x16x128xbf16, #tpu.memory_space<vmem>>, %arg2: memref<16x128xf32, #tpu.memory_space<vmem>>, %arg3: memref<128x128xbf16, #tpu.memory_space<vmem>>, %arg4: memref<1x128xf32, #tpu.memory_space<vmem>>, %arg5: memref<1x8x8x128xbf16, #tpu.memory_space<vmem>>, %arg6: memref<18x18x128xf32, #tpu.memory_space<vmem>>) attributes {dimension_semantics = [#tpu.dimension_semantics<parallel>], iteration_bounds = array<i64: 2>, scalar_prefetch = 0 : i64, scratch_operands = 1 : i64, tpu.core_type = #tpu.core_type<tc>, window_params = [{transform_indices = @transform_0, window_bounds = array<i64: 1, 16, 16, 128>}, {pipeline_mode = #tpu.pipeline_mode<synchronous>, transform_indices = @transform_1, window_bounds = array<i64: 16, 128>}, {pipeline_mode = #tpu.pipeline_mode<synchronous>, transform_indices = @transform_2, window_bounds = array<i64: 128, 128>}, {pipeline_mode = #tpu.pipeline_mode<synchronous>, transform_indices = @transform_3, window_bounds = array<i64: 1, 128>}, {transform_indices = @transform_4, window_bounds = array<i64: 1, 8, 8, 128>}]} {
    %cst = arith.constant 0.000000e+00 : f32
    %0 = vector.broadcast %cst : f32 to vector<18x18x128xf32>
    %c0 = arith.constant 0 : index
    %c0_0 = arith.constant 0 : index
    %c0_1 = arith.constant 0 : index
    %1 = vector.load %arg6[%c0, %c0_0, %c0_1] : memref<18x18x128xf32, #tpu.memory_space<vmem>>, vector<18x18x128xf32>
    tpu.vector_store %arg6[%c0, %c0_0, %c0_1], %0 {strides = array<i32>} : memref<18x18x128xf32, #tpu.memory_space<vmem>>, vector<18x18x128xf32>,
    %c0_2 = arith.constant 0 : index
    %c0_3 = arith.constant 0 : index
    %c0_4 = arith.constant 0 : index
    %c0_5 = arith.constant 0 : index
    %2 = vector.load %arg1[%c0_2, %c0_3, %c0_4, %c0_5] : memref<1x16x16x128xbf16, #tpu.memory_space<vmem>>, vector<1x16x16x128xbf16>
    %3 = vector.shape_cast %2 : vector<1x16x16x128xbf16> to vector<16x16x128xbf16>
    %4 = arith.extf %3 : vector<16x16x128xbf16> to vector<16x16x128xf32>
    %c1 = arith.constant 1 : index
    %c1_6 = arith.constant 1 : index
    %c0_7 = arith.constant 0 : index
    %5 = vector.load %arg6[%c1, %c1_6, %c0_7] : memref<18x18x128xf32, #tpu.memory_space<vmem>>, vector<16x16x128xf32>
    tpu.vector_store %arg6[%c1, %c1_6, %c0_7], %4 {strides = array<i32>} : memref<18x18x128xf32, #tpu.memory_space<vmem>>, vector<16x16x128xf32>,
    %cst_8 = arith.constant 0.000000e+00 : f32
    %6 = vector.broadcast %cst_8 : f32 to vector<8x8x128xf32>
    %c0_9 = arith.constant 0 : index
    %c0_10 = arith.constant 0 : index
    %c0_11 = arith.constant 0 : index
    %7 = tpu.strided_load %arg6[%c0_9, %c0_10, %c0_11] {strides = array<i32: 2, 2, 1>} : memref<18x18x128xf32, #tpu.memory_space<vmem>>, vector<8x8x128xf32>
    %c0_12 = arith.constant 0 : index
    %c0_13 = arith.constant 0 : index
    %8 = vector.load %arg2[%c0_12, %c0_13] : memref<16x128xf32, #tpu.memory_space<vmem>>, vector<1x128xf32>
    %9 = vector.shape_cast %8 : vector<1x128xf32> to vector<1x1x128xf32>
    %10 = vector.broadcast %9 : vector<1x1x128xf32> to vector<8x8x128xf32>
    %11 = arith.mulf %7, %10 : vector<8x8x128xf32>
    %12 = arith.addf %6, %11 : vector<8x8x128xf32>
    %c0_14 = arith.constant 0 : index
    %c1_15 = arith.constant 1 : index
    %c0_16 = arith.constant 0 : index
    %13 = tpu.strided_load %arg6[%c0_14, %c1_15, %c0_16] {strides = array<i32: 2, 2, 1>} : memref<18x18x128xf32, #tpu.memory_space<vmem>>, vector<8x8x128xf32>
    %c1_17 = arith.constant 1 : index
    %c0_18 = arith.constant 0 : index
    %14 = vector.load %arg2[%c1_17, %c0_18] : memref<16x128xf32, #tpu.memory_space<vmem>>, vector<1x128xf32>
    %15 = vector.shape_cast %14 : vector<1x128xf32> to vector<1x1x128xf32>
    %16 = vector.broadcast %15 : vector<1x1x128xf32> to vector<8x8x128xf32>
    %17 = arith.mulf %13, %16 : vector<8x8x128xf32>
    %18 = arith.addf %12, %17 : vector<8x8x128xf32>
    %c0_19 = arith.constant 0 : index
    %c2 = arith.constant 2 : index
    %c0_20 = arith.constant 0 : index
    %19 = tpu.strided_load %arg6[%c0_19, %c2, %c0_20] {strides = array<i32: 2, 2, 1>} : memref<18x18x128xf32, #tpu.memory_space<vmem>>, vector<8x8x128xf32>
    %c2_21 = arith.constant 2 : index
    %c0_22 = arith.constant 0 : index
    %20 = vector.load %arg2[%c2_21, %c0_22] : memref<16x128xf32, #tpu.memory_space<vmem>>, vector<1x128xf32>
    %21 = vector.shape_cast %20 : vector<1x128xf32> to vector<1x1x128xf32>
    %22 = vector.broadcast %21 : vector<1x1x128xf32> to vector<8x8x128xf32>
    %23 = arith.mulf %19, %22 : vector<8x8x128xf32>
    %24 = arith.addf %18, %23 : vector<8x8x128xf32>
    %c1_23 = arith.constant 1 : index
    %c0_24 = arith.constant 0 : index
    %c0_25 = arith.constant 0 : index
    %25 = tpu.strided_load %arg6[%c1_23, %c0_24, %c0_25] {strides = array<i32: 2, 2, 1>} : memref<18x18x128xf32, #tpu.memory_space<vmem>>, vector<8x8x128xf32>
    %c3 = arith.constant 3 : index
    %c0_26 = arith.constant 0 : index
    %26 = vector.load %arg2[%c3, %c0_26] : memref<16x128xf32, #tpu.memory_space<vmem>>, vector<1x128xf32>
    %27 = vector.shape_cast %26 : vector<1x128xf32> to vector<1x1x128xf32>
    %28 = vector.broadcast %27 : vector<1x1x128xf32> to vector<8x8x128xf32>
    %29 = arith.mulf %25, %28 : vector<8x8x128xf32>
    %30 = arith.addf %24, %29 : vector<8x8x128xf32>
    %c1_27 = arith.constant 1 : index
    %c1_28 = arith.constant 1 : index
    %c0_29 = arith.constant 0 : index
    %31 = tpu.strided_load %arg6[%c1_27, %c1_28, %c0_29] {strides = array<i32: 2, 2, 1>} : memref<18x18x128xf32, #tpu.memory_space<vmem>>, vector<8x8x128xf32>
    %c4 = arith.constant 4 : index
    %c0_30 = arith.constant 0 : index
    %32 = vector.load %arg2[%c4, %c0_30] : memref<16x128xf32, #tpu.memory_space<vmem>>, vector<1x128xf32>
    %33 = vector.shape_cast %32 : vector<1x128xf32> to vector<1x1x128xf32>
    %34 = vector.broadcast %33 : vector<1x1x128xf32> to vector<8x8x128xf32>
    %35 = arith.mulf %31, %34 : vector<8x8x128xf32>
    %36 = arith.addf %30, %35 : vector<8x8x128xf32>
    %c1_31 = arith.constant 1 : index
    %c2_32 = arith.constant 2 : index
    %c0_33 = arith.constant 0 : index
    %37 = tpu.strided_load %arg6[%c1_31, %c2_32, %c0_33] {strides = array<i32: 2, 2, 1>} : memref<18x18x128xf32, #tpu.memory_space<vmem>>, vector<8x8x128xf32>
    %c5 = arith.constant 5 : index
    %c0_34 = arith.constant 0 : index
    %38 = vector.load %arg2[%c5, %c0_34] : memref<16x128xf32, #tpu.memory_space<vmem>>, vector<1x128xf32>
    %39 = vector.shape_cast %38 : vector<1x128xf32> to vector<1x1x128xf32>
    %40 = vector.broadcast %39 : vector<1x1x128xf32> to vector<8x8x128xf32>
    %41 = arith.mulf %37, %40 : vector<8x8x128xf32>
    %42 = arith.addf %36, %41 : vector<8x8x128xf32>
    %c2_35 = arith.constant 2 : index
    %c0_36 = arith.constant 0 : index
    %c0_37 = arith.constant 0 : index
    %43 = tpu.strided_load %arg6[%c2_35, %c0_36, %c0_37] {strides = array<i32: 2, 2, 1>} : memref<18x18x128xf32, #tpu.memory_space<vmem>>, vector<8x8x128xf32>
    %c6 = arith.constant 6 : index
    %c0_38 = arith.constant 0 : index
    %44 = vector.load %arg2[%c6, %c0_38] : memref<16x128xf32, #tpu.memory_space<vmem>>, vector<1x128xf32>
    %45 = vector.shape_cast %44 : vector<1x128xf32> to vector<1x1x128xf32>
    %46 = vector.broadcast %45 : vector<1x1x128xf32> to vector<8x8x128xf32>
    %47 = arith.mulf %43, %46 : vector<8x8x128xf32>
    %48 = arith.addf %42, %47 : vector<8x8x128xf32>
    %c2_39 = arith.constant 2 : index
    %c1_40 = arith.constant 1 : index
    %c0_41 = arith.constant 0 : index
    %49 = tpu.strided_load %arg6[%c2_39, %c1_40, %c0_41] {strides = array<i32: 2, 2, 1>} : memref<18x18x128xf32, #tpu.memory_space<vmem>>, vector<8x8x128xf32>
    %c7 = arith.constant 7 : index
    %c0_42 = arith.constant 0 : index
    %50 = vector.load %arg2[%c7, %c0_42] : memref<16x128xf32, #tpu.memory_space<vmem>>, vector<1x128xf32>
    %51 = vector.shape_cast %50 : vector<1x128xf32> to vector<1x1x128xf32>
    %52 = vector.broadcast %51 : vector<1x1x128xf32> to vector<8x8x128xf32>
    %53 = arith.mulf %49, %52 : vector<8x8x128xf32>
    %54 = arith.addf %48, %53 : vector<8x8x128xf32>
    %c2_43 = arith.constant 2 : index
    %c2_44 = arith.constant 2 : index
    %c0_45 = arith.constant 0 : index
    %55 = tpu.strided_load %arg6[%c2_43, %c2_44, %c0_45] {strides = array<i32: 2, 2, 1>} : memref<18x18x128xf32, #tpu.memory_space<vmem>>, vector<8x8x128xf32>
    %c8 = arith.constant 8 : index
    %c0_46 = arith.constant 0 : index
    %56 = vector.load %arg2[%c8, %c0_46] : memref<16x128xf32, #tpu.memory_space<vmem>>, vector<1x128xf32>
    %57 = vector.shape_cast %56 : vector<1x128xf32> to vector<1x1x128xf32>
    %58 = vector.broadcast %57 : vector<1x1x128xf32> to vector<8x8x128xf32>
    %59 = arith.mulf %55, %58 : vector<8x8x128xf32>
    %60 = arith.addf %54, %59 : vector<8x8x128xf32>
    %61 = vector.shape_cast %60 : vector<8x8x128xf32> to vector<64x128xf32>
    %62 = arith.truncf %61 : vector<64x128xf32> to vector<64x128xbf16>
    %c0_47 = arith.constant 0 : index
    %c0_48 = arith.constant 0 : index
    %63 = vector.load %arg3[%c0_47, %c0_48] : memref<128x128xbf16, #tpu.memory_space<vmem>>, vector<128x128xbf16>
    %cst_49 = arith.constant dense<0.000000e+00> : vector<64x128xf32>
    %64 = tpu.matmul %62, %63, %cst_49 {dimension_numbers = #tpu.dot_dimension_numbers<[1], [0], [0], [1], [0, 0, 1, 1], [], []>} : vector<64x128xbf16>, vector<128x128xbf16>, vector<64x128xf32> -> vector<64x128xf32>
    %c0_50 = arith.constant 0 : index
    %c0_51 = arith.constant 0 : index
    %65 = vector.load %arg4[%c0_50, %c0_51] : memref<1x128xf32, #tpu.memory_space<vmem>>, vector<1x128xf32>
    %66 = vector.broadcast %65 : vector<1x128xf32> to vector<64x128xf32>
    %67 = arith.addf %64, %66 : vector<64x128xf32>
    %cst_52 = arith.constant 0.000000e+00 : f32
    %68 = vector.broadcast %cst_52 : f32 to vector<64x128xf32>
    %69 = arith.maximumf %67, %68 : vector<64x128xf32>
    %70 = vector.shape_cast %69 : vector<64x128xf32> to vector<8x8x128xf32>
    %71 = arith.truncf %70 : vector<8x8x128xf32> to vector<8x8x128xbf16>
    %c0_53 = arith.constant 0 : index
    %c0_54 = arith.constant 0 : index
    %c0_55 = arith.constant 0 : index
    %c0_56 = arith.constant 0 : index
    %72 = vector.load %arg5[%c0_53, %c0_54, %c0_55, %c0_56] : memref<1x8x8x128xbf16, #tpu.memory_space<vmem>>, vector<1x8x8x128xbf16>
    %73 = vector.shape_cast %72 : vector<1x8x8x128xbf16> to vector<8x8x128xbf16>
    %74 = vector.shape_cast %71 : vector<8x8x128xbf16> to vector<1x8x8x128xbf16>
    tpu.vector_store %arg5[%c0_53, %c0_54, %c0_55, %c0_56], %74 {strides = array<i32>} : memref<1x8x8x128xbf16, #tpu.memory_space<vmem>>, vector<1x8x8x128xbf16>,
    return
  }
  func.func @transform_0(%arg0: i32) -> (i32, i32, i32, i32) {
    %c0_i32 = arith.constant 0 : i32
    %c0_i32_0 = arith.constant 0 : i32
    %c0_i32_1 = arith.constant 0 : i32
    %c0_i32_2 = arith.constant 0 : i32
    return %arg0, %c0_i32, %c0_i32_0, %c0_i32_1 : i32, i32, i32, i32
  }
  func.func @transform_1(%arg0: i32) -> (i32, i32) {
    %c0_i32 = arith.constant 0 : i32
    %c0_i32_0 = arith.constant 0 : i32
    %c0_i32_1 = arith.constant 0 : i32
    return %c0_i32, %c0_i32_0 : i32, i32
  }
  func.func @transform_2(%arg0: i32) -> (i32, i32) {
    %c0_i32 = arith.constant 0 : i32
    %c0_i32_0 = arith.constant 0 : i32
    %c0_i32_1 = arith.constant 0 : i32
    return %c0_i32, %c0_i32_0 : i32, i32
  }
  func.func @transform_3(%arg0: i32) -> (i32, i32) {
    %c0_i32 = arith.constant 0 : i32
    %c0_i32_0 = arith.constant 0 : i32
    %c0_i32_1 = arith.constant 0 : i32
    return %c0_i32, %c0_i32_0 : i32, i32
  }
  func.func @transform_4(%arg0: i32) -> (i32, i32, i32, i32) {
    %c0_i32 = arith.constant 0 : i32
    %c0_i32_0 = arith.constant 0 : i32
    %c0_i32_1 = arith.constant 0 : i32
    %c0_i32_2 = arith.constant 0 : i32
    return %arg0, %c0_i32, %c0_i32_0, %c0_i32_1 : i32, i32, i32, i32
  }
}

module attributes {stable_mosaic.version = 11 : i64} {
  func.func @_sep_conv_kernel(%arg0: i32, %arg1: memref<1x8x8x128xbf16, #tpu.memory_space<vmem>>, %arg2: memref<16x128xf32, #tpu.memory_space<vmem>>, %arg3: memref<128x128xbf16, #tpu.memory_space<vmem>>, %arg4: memref<1x128xf32, #tpu.memory_space<vmem>>, %arg5: memref<1x8x8x128xbf16, #tpu.memory_space<vmem>>, %arg6: memref<10x10x128xf32, #tpu.memory_space<vmem>>) attributes {dimension_semantics = [#tpu.dimension_semantics<parallel>], iteration_bounds = array<i64: 2>, scalar_prefetch = 0 : i64, scratch_operands = 1 : i64, tpu.core_type = #tpu.core_type<tc>, window_params = [{transform_indices = @transform_0, window_bounds = array<i64: 1, 8, 8, 128>}, {pipeline_mode = #tpu.pipeline_mode<synchronous>, transform_indices = @transform_1, window_bounds = array<i64: 16, 128>}, {pipeline_mode = #tpu.pipeline_mode<synchronous>, transform_indices = @transform_2, window_bounds = array<i64: 128, 128>}, {pipeline_mode = #tpu.pipeline_mode<synchronous>, transform_indices = @transform_3, window_bounds = array<i64: 1, 128>}, {transform_indices = @transform_4, window_bounds = array<i64: 1, 8, 8, 128>}]} {
    %cst = arith.constant 0.000000e+00 : f32
    %0 = vector.broadcast %cst : f32 to vector<10x10x128xf32>
    %c0 = arith.constant 0 : index
    %c0_0 = arith.constant 0 : index
    %c0_1 = arith.constant 0 : index
    %1 = vector.load %arg6[%c0, %c0_0, %c0_1] : memref<10x10x128xf32, #tpu.memory_space<vmem>>, vector<10x10x128xf32>
    tpu.vector_store %arg6[%c0, %c0_0, %c0_1], %0 {strides = array<i32>} : memref<10x10x128xf32, #tpu.memory_space<vmem>>, vector<10x10x128xf32>,
    %c0_2 = arith.constant 0 : index
    %c0_3 = arith.constant 0 : index
    %c0_4 = arith.constant 0 : index
    %c0_5 = arith.constant 0 : index
    %2 = vector.load %arg1[%c0_2, %c0_3, %c0_4, %c0_5] : memref<1x8x8x128xbf16, #tpu.memory_space<vmem>>, vector<1x8x8x128xbf16>
    %3 = vector.shape_cast %2 : vector<1x8x8x128xbf16> to vector<8x8x128xbf16>
    %4 = arith.extf %3 : vector<8x8x128xbf16> to vector<8x8x128xf32>
    %c1 = arith.constant 1 : index
    %c1_6 = arith.constant 1 : index
    %c0_7 = arith.constant 0 : index
    %5 = vector.load %arg6[%c1, %c1_6, %c0_7] : memref<10x10x128xf32, #tpu.memory_space<vmem>>, vector<8x8x128xf32>
    tpu.vector_store %arg6[%c1, %c1_6, %c0_7], %4 {strides = array<i32>} : memref<10x10x128xf32, #tpu.memory_space<vmem>>, vector<8x8x128xf32>,
    %cst_8 = arith.constant 0.000000e+00 : f32
    %6 = vector.broadcast %cst_8 : f32 to vector<8x8x128xf32>
    %c0_9 = arith.constant 0 : index
    %c0_10 = arith.constant 0 : index
    %c0_11 = arith.constant 0 : index
    %7 = vector.load %arg6[%c0_9, %c0_10, %c0_11] : memref<10x10x128xf32, #tpu.memory_space<vmem>>, vector<8x8x128xf32>
    %c0_12 = arith.constant 0 : index
    %c0_13 = arith.constant 0 : index
    %8 = vector.load %arg2[%c0_12, %c0_13] : memref<16x128xf32, #tpu.memory_space<vmem>>, vector<1x128xf32>
    %9 = vector.shape_cast %8 : vector<1x128xf32> to vector<1x1x128xf32>
    %10 = vector.broadcast %9 : vector<1x1x128xf32> to vector<8x8x128xf32>
    %11 = arith.mulf %7, %10 : vector<8x8x128xf32>
    %12 = arith.addf %6, %11 : vector<8x8x128xf32>
    %c0_14 = arith.constant 0 : index
    %c1_15 = arith.constant 1 : index
    %c0_16 = arith.constant 0 : index
    %13 = vector.load %arg6[%c0_14, %c1_15, %c0_16] : memref<10x10x128xf32, #tpu.memory_space<vmem>>, vector<8x8x128xf32>
    %c1_17 = arith.constant 1 : index
    %c0_18 = arith.constant 0 : index
    %14 = vector.load %arg2[%c1_17, %c0_18] : memref<16x128xf32, #tpu.memory_space<vmem>>, vector<1x128xf32>
    %15 = vector.shape_cast %14 : vector<1x128xf32> to vector<1x1x128xf32>
    %16 = vector.broadcast %15 : vector<1x1x128xf32> to vector<8x8x128xf32>
    %17 = arith.mulf %13, %16 : vector<8x8x128xf32>
    %18 = arith.addf %12, %17 : vector<8x8x128xf32>
    %c0_19 = arith.constant 0 : index
    %c2 = arith.constant 2 : index
    %c0_20 = arith.constant 0 : index
    %19 = vector.load %arg6[%c0_19, %c2, %c0_20] : memref<10x10x128xf32, #tpu.memory_space<vmem>>, vector<8x8x128xf32>
    %c2_21 = arith.constant 2 : index
    %c0_22 = arith.constant 0 : index
    %20 = vector.load %arg2[%c2_21, %c0_22] : memref<16x128xf32, #tpu.memory_space<vmem>>, vector<1x128xf32>
    %21 = vector.shape_cast %20 : vector<1x128xf32> to vector<1x1x128xf32>
    %22 = vector.broadcast %21 : vector<1x1x128xf32> to vector<8x8x128xf32>
    %23 = arith.mulf %19, %22 : vector<8x8x128xf32>
    %24 = arith.addf %18, %23 : vector<8x8x128xf32>
    %c1_23 = arith.constant 1 : index
    %c0_24 = arith.constant 0 : index
    %c0_25 = arith.constant 0 : index
    %25 = vector.load %arg6[%c1_23, %c0_24, %c0_25] : memref<10x10x128xf32, #tpu.memory_space<vmem>>, vector<8x8x128xf32>
    %c3 = arith.constant 3 : index
    %c0_26 = arith.constant 0 : index
    %26 = vector.load %arg2[%c3, %c0_26] : memref<16x128xf32, #tpu.memory_space<vmem>>, vector<1x128xf32>
    %27 = vector.shape_cast %26 : vector<1x128xf32> to vector<1x1x128xf32>
    %28 = vector.broadcast %27 : vector<1x1x128xf32> to vector<8x8x128xf32>
    %29 = arith.mulf %25, %28 : vector<8x8x128xf32>
    %30 = arith.addf %24, %29 : vector<8x8x128xf32>
    %c1_27 = arith.constant 1 : index
    %c1_28 = arith.constant 1 : index
    %c0_29 = arith.constant 0 : index
    %31 = vector.load %arg6[%c1_27, %c1_28, %c0_29] : memref<10x10x128xf32, #tpu.memory_space<vmem>>, vector<8x8x128xf32>
    %c4 = arith.constant 4 : index
    %c0_30 = arith.constant 0 : index
    %32 = vector.load %arg2[%c4, %c0_30] : memref<16x128xf32, #tpu.memory_space<vmem>>, vector<1x128xf32>
    %33 = vector.shape_cast %32 : vector<1x128xf32> to vector<1x1x128xf32>
    %34 = vector.broadcast %33 : vector<1x1x128xf32> to vector<8x8x128xf32>
    %35 = arith.mulf %31, %34 : vector<8x8x128xf32>
    %36 = arith.addf %30, %35 : vector<8x8x128xf32>
    %c1_31 = arith.constant 1 : index
    %c2_32 = arith.constant 2 : index
    %c0_33 = arith.constant 0 : index
    %37 = vector.load %arg6[%c1_31, %c2_32, %c0_33] : memref<10x10x128xf32, #tpu.memory_space<vmem>>, vector<8x8x128xf32>
    %c5 = arith.constant 5 : index
    %c0_34 = arith.constant 0 : index
    %38 = vector.load %arg2[%c5, %c0_34] : memref<16x128xf32, #tpu.memory_space<vmem>>, vector<1x128xf32>
    %39 = vector.shape_cast %38 : vector<1x128xf32> to vector<1x1x128xf32>
    %40 = vector.broadcast %39 : vector<1x1x128xf32> to vector<8x8x128xf32>
    %41 = arith.mulf %37, %40 : vector<8x8x128xf32>
    %42 = arith.addf %36, %41 : vector<8x8x128xf32>
    %c2_35 = arith.constant 2 : index
    %c0_36 = arith.constant 0 : index
    %c0_37 = arith.constant 0 : index
    %43 = vector.load %arg6[%c2_35, %c0_36, %c0_37] : memref<10x10x128xf32, #tpu.memory_space<vmem>>, vector<8x8x128xf32>
    %c6 = arith.constant 6 : index
    %c0_38 = arith.constant 0 : index
    %44 = vector.load %arg2[%c6, %c0_38] : memref<16x128xf32, #tpu.memory_space<vmem>>, vector<1x128xf32>
    %45 = vector.shape_cast %44 : vector<1x128xf32> to vector<1x1x128xf32>
    %46 = vector.broadcast %45 : vector<1x1x128xf32> to vector<8x8x128xf32>
    %47 = arith.mulf %43, %46 : vector<8x8x128xf32>
    %48 = arith.addf %42, %47 : vector<8x8x128xf32>
    %c2_39 = arith.constant 2 : index
    %c1_40 = arith.constant 1 : index
    %c0_41 = arith.constant 0 : index
    %49 = vector.load %arg6[%c2_39, %c1_40, %c0_41] : memref<10x10x128xf32, #tpu.memory_space<vmem>>, vector<8x8x128xf32>
    %c7 = arith.constant 7 : index
    %c0_42 = arith.constant 0 : index
    %50 = vector.load %arg2[%c7, %c0_42] : memref<16x128xf32, #tpu.memory_space<vmem>>, vector<1x128xf32>
    %51 = vector.shape_cast %50 : vector<1x128xf32> to vector<1x1x128xf32>
    %52 = vector.broadcast %51 : vector<1x1x128xf32> to vector<8x8x128xf32>
    %53 = arith.mulf %49, %52 : vector<8x8x128xf32>
    %54 = arith.addf %48, %53 : vector<8x8x128xf32>
    %c2_43 = arith.constant 2 : index
    %c2_44 = arith.constant 2 : index
    %c0_45 = arith.constant 0 : index
    %55 = vector.load %arg6[%c2_43, %c2_44, %c0_45] : memref<10x10x128xf32, #tpu.memory_space<vmem>>, vector<8x8x128xf32>
    %c8 = arith.constant 8 : index
    %c0_46 = arith.constant 0 : index
    %56 = vector.load %arg2[%c8, %c0_46] : memref<16x128xf32, #tpu.memory_space<vmem>>, vector<1x128xf32>
    %57 = vector.shape_cast %56 : vector<1x128xf32> to vector<1x1x128xf32>
    %58 = vector.broadcast %57 : vector<1x1x128xf32> to vector<8x8x128xf32>
    %59 = arith.mulf %55, %58 : vector<8x8x128xf32>
    %60 = arith.addf %54, %59 : vector<8x8x128xf32>
    %61 = vector.shape_cast %60 : vector<8x8x128xf32> to vector<64x128xf32>
    %62 = arith.truncf %61 : vector<64x128xf32> to vector<64x128xbf16>
    %c0_47 = arith.constant 0 : index
    %c0_48 = arith.constant 0 : index
    %63 = vector.load %arg3[%c0_47, %c0_48] : memref<128x128xbf16, #tpu.memory_space<vmem>>, vector<128x128xbf16>
    %cst_49 = arith.constant dense<0.000000e+00> : vector<64x128xf32>
    %64 = tpu.matmul %62, %63, %cst_49 {dimension_numbers = #tpu.dot_dimension_numbers<[1], [0], [0], [1], [0, 0, 1, 1], [], []>} : vector<64x128xbf16>, vector<128x128xbf16>, vector<64x128xf32> -> vector<64x128xf32>
    %c0_50 = arith.constant 0 : index
    %c0_51 = arith.constant 0 : index
    %65 = vector.load %arg4[%c0_50, %c0_51] : memref<1x128xf32, #tpu.memory_space<vmem>>, vector<1x128xf32>
    %66 = vector.broadcast %65 : vector<1x128xf32> to vector<64x128xf32>
    %67 = arith.addf %64, %66 : vector<64x128xf32>
    %cst_52 = arith.constant 0.000000e+00 : f32
    %68 = vector.broadcast %cst_52 : f32 to vector<64x128xf32>
    %69 = arith.maximumf %67, %68 : vector<64x128xf32>
    %70 = vector.shape_cast %69 : vector<64x128xf32> to vector<8x8x128xf32>
    %71 = arith.truncf %70 : vector<8x8x128xf32> to vector<8x8x128xbf16>
    %c0_53 = arith.constant 0 : index
    %c0_54 = arith.constant 0 : index
    %c0_55 = arith.constant 0 : index
    %c0_56 = arith.constant 0 : index
    %72 = vector.load %arg5[%c0_53, %c0_54, %c0_55, %c0_56] : memref<1x8x8x128xbf16, #tpu.memory_space<vmem>>, vector<1x8x8x128xbf16>
    %73 = vector.shape_cast %72 : vector<1x8x8x128xbf16> to vector<8x8x128xbf16>
    %74 = vector.shape_cast %71 : vector<8x8x128xbf16> to vector<1x8x8x128xbf16>
    tpu.vector_store %arg5[%c0_53, %c0_54, %c0_55, %c0_56], %74 {strides = array<i32>} : memref<1x8x8x128xbf16, #tpu.memory_space<vmem>>, vector<1x8x8x128xbf16>,
    return
  }
  func.func @transform_0(%arg0: i32) -> (i32, i32, i32, i32) {
    %c0_i32 = arith.constant 0 : i32
    %c0_i32_0 = arith.constant 0 : i32
    %c0_i32_1 = arith.constant 0 : i32
    %c0_i32_2 = arith.constant 0 : i32
    return %arg0, %c0_i32, %c0_i32_0, %c0_i32_1 : i32, i32, i32, i32
  }
  func.func @transform_1(%arg0: i32) -> (i32, i32) {
    %c0_i32 = arith.constant 0 : i32
    %c0_i32_0 = arith.constant 0 : i32
    %c0_i32_1 = arith.constant 0 : i32
    return %c0_i32, %c0_i32_0 : i32, i32
  }
  func.func @transform_2(%arg0: i32) -> (i32, i32) {
    %c0_i32 = arith.constant 0 : i32
    %c0_i32_0 = arith.constant 0 : i32
    %c0_i32_1 = arith.constant 0 : i32
    return %c0_i32, %c0_i32_0 : i32, i32
  }
  func.func @transform_3(%arg0: i32) -> (i32, i32) {
    %c0_i32 = arith.constant 0 : i32
    %c0_i32_0 = arith.constant 0 : i32
    %c0_i32_1 = arith.constant 0 : i32
    return %c0_i32, %c0_i32_0 : i32, i32
  }
  func.func @transform_4(%arg0: i32) -> (i32, i32, i32, i32) {
    %c0_i32 = arith.constant 0 : i32
    %c0_i32_0 = arith.constant 0 : i32
    %c0_i32_1 = arith.constant 0 : i32
    %c0_i32_2 = arith.constant 0 : i32
    return %arg0, %c0_i32, %c0_i32_0, %c0_i32_1 : i32, i32, i32, i32
  }
}

module attributes {stable_mosaic.version = 11 : i64} {
  func.func @_sep_conv_residual_kernel(%arg0: i32, %arg1: memref<1x8x8x128xbf16, #tpu.memory_space<vmem>>, %arg2: memref<16x128xf32, #tpu.memory_space<vmem>>, %arg3: memref<128x128xbf16, #tpu.memory_space<vmem>>, %arg4: memref<1x128xf32, #tpu.memory_space<vmem>>, %arg5: memref<1x8x8x128xbf16, #tpu.memory_space<vmem>>, %arg6: memref<1x8x8x128xbf16, #tpu.memory_space<vmem>>, %arg7: memref<10x10x128xf32, #tpu.memory_space<vmem>>) attributes {dimension_semantics = [#tpu.dimension_semantics<parallel>], iteration_bounds = array<i64: 2>, scalar_prefetch = 0 : i64, scratch_operands = 1 : i64, tpu.core_type = #tpu.core_type<tc>, window_params = [{transform_indices = @transform_0, window_bounds = array<i64: 1, 8, 8, 128>}, {pipeline_mode = #tpu.pipeline_mode<synchronous>, transform_indices = @transform_1, window_bounds = array<i64: 16, 128>}, {pipeline_mode = #tpu.pipeline_mode<synchronous>, transform_indices = @transform_2, window_bounds = array<i64: 128, 128>}, {pipeline_mode = #tpu.pipeline_mode<synchronous>, transform_indices = @transform_3, window_bounds = array<i64: 1, 128>}, {transform_indices = @transform_4, window_bounds = array<i64: 1, 8, 8, 128>}, {transform_indices = @transform_5, window_bounds = array<i64: 1, 8, 8, 128>}]} {
    %cst = arith.constant 0.000000e+00 : f32
    %0 = vector.broadcast %cst : f32 to vector<10x10x128xf32>
    %c0 = arith.constant 0 : index
    %c0_0 = arith.constant 0 : index
    %c0_1 = arith.constant 0 : index
    %1 = vector.load %arg7[%c0, %c0_0, %c0_1] : memref<10x10x128xf32, #tpu.memory_space<vmem>>, vector<10x10x128xf32>
    tpu.vector_store %arg7[%c0, %c0_0, %c0_1], %0 {strides = array<i32>} : memref<10x10x128xf32, #tpu.memory_space<vmem>>, vector<10x10x128xf32>,
    %c0_2 = arith.constant 0 : index
    %c0_3 = arith.constant 0 : index
    %c0_4 = arith.constant 0 : index
    %c0_5 = arith.constant 0 : index
    %2 = vector.load %arg1[%c0_2, %c0_3, %c0_4, %c0_5] : memref<1x8x8x128xbf16, #tpu.memory_space<vmem>>, vector<1x8x8x128xbf16>
    %3 = vector.shape_cast %2 : vector<1x8x8x128xbf16> to vector<8x8x128xbf16>
    %4 = arith.extf %3 : vector<8x8x128xbf16> to vector<8x8x128xf32>
    %c1 = arith.constant 1 : index
    %c1_6 = arith.constant 1 : index
    %c0_7 = arith.constant 0 : index
    %5 = vector.load %arg7[%c1, %c1_6, %c0_7] : memref<10x10x128xf32, #tpu.memory_space<vmem>>, vector<8x8x128xf32>
    tpu.vector_store %arg7[%c1, %c1_6, %c0_7], %4 {strides = array<i32>} : memref<10x10x128xf32, #tpu.memory_space<vmem>>, vector<8x8x128xf32>,
    %cst_8 = arith.constant 0.000000e+00 : f32
    %6 = vector.broadcast %cst_8 : f32 to vector<8x8x128xf32>
    %c0_9 = arith.constant 0 : index
    %c0_10 = arith.constant 0 : index
    %c0_11 = arith.constant 0 : index
    %7 = vector.load %arg7[%c0_9, %c0_10, %c0_11] : memref<10x10x128xf32, #tpu.memory_space<vmem>>, vector<8x8x128xf32>
    %c0_12 = arith.constant 0 : index
    %c0_13 = arith.constant 0 : index
    %8 = vector.load %arg2[%c0_12, %c0_13] : memref<16x128xf32, #tpu.memory_space<vmem>>, vector<1x128xf32>
    %9 = vector.shape_cast %8 : vector<1x128xf32> to vector<1x1x128xf32>
    %10 = vector.broadcast %9 : vector<1x1x128xf32> to vector<8x8x128xf32>
    %11 = arith.mulf %7, %10 : vector<8x8x128xf32>
    %12 = arith.addf %6, %11 : vector<8x8x128xf32>
    %c0_14 = arith.constant 0 : index
    %c1_15 = arith.constant 1 : index
    %c0_16 = arith.constant 0 : index
    %13 = vector.load %arg7[%c0_14, %c1_15, %c0_16] : memref<10x10x128xf32, #tpu.memory_space<vmem>>, vector<8x8x128xf32>
    %c1_17 = arith.constant 1 : index
    %c0_18 = arith.constant 0 : index
    %14 = vector.load %arg2[%c1_17, %c0_18] : memref<16x128xf32, #tpu.memory_space<vmem>>, vector<1x128xf32>
    %15 = vector.shape_cast %14 : vector<1x128xf32> to vector<1x1x128xf32>
    %16 = vector.broadcast %15 : vector<1x1x128xf32> to vector<8x8x128xf32>
    %17 = arith.mulf %13, %16 : vector<8x8x128xf32>
    %18 = arith.addf %12, %17 : vector<8x8x128xf32>
    %c0_19 = arith.constant 0 : index
    %c2 = arith.constant 2 : index
    %c0_20 = arith.constant 0 : index
    %19 = vector.load %arg7[%c0_19, %c2, %c0_20] : memref<10x10x128xf32, #tpu.memory_space<vmem>>, vector<8x8x128xf32>
    %c2_21 = arith.constant 2 : index
    %c0_22 = arith.constant 0 : index
    %20 = vector.load %arg2[%c2_21, %c0_22] : memref<16x128xf32, #tpu.memory_space<vmem>>, vector<1x128xf32>
    %21 = vector.shape_cast %20 : vector<1x128xf32> to vector<1x1x128xf32>
    %22 = vector.broadcast %21 : vector<1x1x128xf32> to vector<8x8x128xf32>
    %23 = arith.mulf %19, %22 : vector<8x8x128xf32>
    %24 = arith.addf %18, %23 : vector<8x8x128xf32>
    %c1_23 = arith.constant 1 : index
    %c0_24 = arith.constant 0 : index
    %c0_25 = arith.constant 0 : index
    %25 = vector.load %arg7[%c1_23, %c0_24, %c0_25] : memref<10x10x128xf32, #tpu.memory_space<vmem>>, vector<8x8x128xf32>
    %c3 = arith.constant 3 : index
    %c0_26 = arith.constant 0 : index
    %26 = vector.load %arg2[%c3, %c0_26] : memref<16x128xf32, #tpu.memory_space<vmem>>, vector<1x128xf32>
    %27 = vector.shape_cast %26 : vector<1x128xf32> to vector<1x1x128xf32>
    %28 = vector.broadcast %27 : vector<1x1x128xf32> to vector<8x8x128xf32>
    %29 = arith.mulf %25, %28 : vector<8x8x128xf32>
    %30 = arith.addf %24, %29 : vector<8x8x128xf32>
    %c1_27 = arith.constant 1 : index
    %c1_28 = arith.constant 1 : index
    %c0_29 = arith.constant 0 : index
    %31 = vector.load %arg7[%c1_27, %c1_28, %c0_29] : memref<10x10x128xf32, #tpu.memory_space<vmem>>, vector<8x8x128xf32>
    %c4 = arith.constant 4 : index
    %c0_30 = arith.constant 0 : index
    %32 = vector.load %arg2[%c4, %c0_30] : memref<16x128xf32, #tpu.memory_space<vmem>>, vector<1x128xf32>
    %33 = vector.shape_cast %32 : vector<1x128xf32> to vector<1x1x128xf32>
    %34 = vector.broadcast %33 : vector<1x1x128xf32> to vector<8x8x128xf32>
    %35 = arith.mulf %31, %34 : vector<8x8x128xf32>
    %36 = arith.addf %30, %35 : vector<8x8x128xf32>
    %c1_31 = arith.constant 1 : index
    %c2_32 = arith.constant 2 : index
    %c0_33 = arith.constant 0 : index
    %37 = vector.load %arg7[%c1_31, %c2_32, %c0_33] : memref<10x10x128xf32, #tpu.memory_space<vmem>>, vector<8x8x128xf32>
    %c5 = arith.constant 5 : index
    %c0_34 = arith.constant 0 : index
    %38 = vector.load %arg2[%c5, %c0_34] : memref<16x128xf32, #tpu.memory_space<vmem>>, vector<1x128xf32>
    %39 = vector.shape_cast %38 : vector<1x128xf32> to vector<1x1x128xf32>
    %40 = vector.broadcast %39 : vector<1x1x128xf32> to vector<8x8x128xf32>
    %41 = arith.mulf %37, %40 : vector<8x8x128xf32>
    %42 = arith.addf %36, %41 : vector<8x8x128xf32>
    %c2_35 = arith.constant 2 : index
    %c0_36 = arith.constant 0 : index
    %c0_37 = arith.constant 0 : index
    %43 = vector.load %arg7[%c2_35, %c0_36, %c0_37] : memref<10x10x128xf32, #tpu.memory_space<vmem>>, vector<8x8x128xf32>
    %c6 = arith.constant 6 : index
    %c0_38 = arith.constant 0 : index
    %44 = vector.load %arg2[%c6, %c0_38] : memref<16x128xf32, #tpu.memory_space<vmem>>, vector<1x128xf32>
    %45 = vector.shape_cast %44 : vector<1x128xf32> to vector<1x1x128xf32>
    %46 = vector.broadcast %45 : vector<1x1x128xf32> to vector<8x8x128xf32>
    %47 = arith.mulf %43, %46 : vector<8x8x128xf32>
    %48 = arith.addf %42, %47 : vector<8x8x128xf32>
    %c2_39 = arith.constant 2 : index
    %c1_40 = arith.constant 1 : index
    %c0_41 = arith.constant 0 : index
    %49 = vector.load %arg7[%c2_39, %c1_40, %c0_41] : memref<10x10x128xf32, #tpu.memory_space<vmem>>, vector<8x8x128xf32>
    %c7 = arith.constant 7 : index
    %c0_42 = arith.constant 0 : index
    %50 = vector.load %arg2[%c7, %c0_42] : memref<16x128xf32, #tpu.memory_space<vmem>>, vector<1x128xf32>
    %51 = vector.shape_cast %50 : vector<1x128xf32> to vector<1x1x128xf32>
    %52 = vector.broadcast %51 : vector<1x1x128xf32> to vector<8x8x128xf32>
    %53 = arith.mulf %49, %52 : vector<8x8x128xf32>
    %54 = arith.addf %48, %53 : vector<8x8x128xf32>
    %c2_43 = arith.constant 2 : index
    %c2_44 = arith.constant 2 : index
    %c0_45 = arith.constant 0 : index
    %55 = vector.load %arg7[%c2_43, %c2_44, %c0_45] : memref<10x10x128xf32, #tpu.memory_space<vmem>>, vector<8x8x128xf32>
    %c8 = arith.constant 8 : index
    %c0_46 = arith.constant 0 : index
    %56 = vector.load %arg2[%c8, %c0_46] : memref<16x128xf32, #tpu.memory_space<vmem>>, vector<1x128xf32>
    %57 = vector.shape_cast %56 : vector<1x128xf32> to vector<1x1x128xf32>
    %58 = vector.broadcast %57 : vector<1x1x128xf32> to vector<8x8x128xf32>
    %59 = arith.mulf %55, %58 : vector<8x8x128xf32>
    %60 = arith.addf %54, %59 : vector<8x8x128xf32>
    %61 = vector.shape_cast %60 : vector<8x8x128xf32> to vector<64x128xf32>
    %62 = arith.truncf %61 : vector<64x128xf32> to vector<64x128xbf16>
    %c0_47 = arith.constant 0 : index
    %c0_48 = arith.constant 0 : index
    %63 = vector.load %arg3[%c0_47, %c0_48] : memref<128x128xbf16, #tpu.memory_space<vmem>>, vector<128x128xbf16>
    %cst_49 = arith.constant dense<0.000000e+00> : vector<64x128xf32>
    %64 = tpu.matmul %62, %63, %cst_49 {dimension_numbers = #tpu.dot_dimension_numbers<[1], [0], [0], [1], [0, 0, 1, 1], [], []>} : vector<64x128xbf16>, vector<128x128xbf16>, vector<64x128xf32> -> vector<64x128xf32>
    %c0_50 = arith.constant 0 : index
    %c0_51 = arith.constant 0 : index
    %65 = vector.load %arg4[%c0_50, %c0_51] : memref<1x128xf32, #tpu.memory_space<vmem>>, vector<1x128xf32>
    %66 = vector.broadcast %65 : vector<1x128xf32> to vector<64x128xf32>
    %67 = arith.addf %64, %66 : vector<64x128xf32>
    %cst_52 = arith.constant 0.000000e+00 : f32
    %68 = vector.broadcast %cst_52 : f32 to vector<64x128xf32>
    %69 = arith.maximumf %67, %68 : vector<64x128xf32>
    %70 = vector.shape_cast %69 : vector<64x128xf32> to vector<8x8x128xf32>
    %c0_53 = arith.constant 0 : index
    %c0_54 = arith.constant 0 : index
    %c0_55 = arith.constant 0 : index
    %c0_56 = arith.constant 0 : index
    %71 = vector.load %arg5[%c0_53, %c0_54, %c0_55, %c0_56] : memref<1x8x8x128xbf16, #tpu.memory_space<vmem>>, vector<1x8x8x128xbf16>
    %72 = vector.shape_cast %71 : vector<1x8x8x128xbf16> to vector<8x8x128xbf16>
    %73 = arith.extf %72 : vector<8x8x128xbf16> to vector<8x8x128xf32>
    %74 = arith.addf %70, %73 : vector<8x8x128xf32>
    %cst_57 = arith.constant 0.000000e+00 : f32
    %75 = vector.broadcast %cst_57 : f32 to vector<8x8x128xf32>
    %76 = arith.maximumf %74, %75 : vector<8x8x128xf32>
    %77 = arith.truncf %76 : vector<8x8x128xf32> to vector<8x8x128xbf16>
    %c0_58 = arith.constant 0 : index
    %c0_59 = arith.constant 0 : index
    %c0_60 = arith.constant 0 : index
    %c0_61 = arith.constant 0 : index
    %78 = vector.load %arg6[%c0_58, %c0_59, %c0_60, %c0_61] : memref<1x8x8x128xbf16, #tpu.memory_space<vmem>>, vector<1x8x8x128xbf16>
    %79 = vector.shape_cast %78 : vector<1x8x8x128xbf16> to vector<8x8x128xbf16>
    %80 = vector.shape_cast %77 : vector<8x8x128xbf16> to vector<1x8x8x128xbf16>
    tpu.vector_store %arg6[%c0_58, %c0_59, %c0_60, %c0_61], %80 {strides = array<i32>} : memref<1x8x8x128xbf16, #tpu.memory_space<vmem>>, vector<1x8x8x128xbf16>,
    return
  }
  func.func @transform_0(%arg0: i32) -> (i32, i32, i32, i32) {
    %c0_i32 = arith.constant 0 : i32
    %c0_i32_0 = arith.constant 0 : i32
    %c0_i32_1 = arith.constant 0 : i32
    %c0_i32_2 = arith.constant 0 : i32
    return %arg0, %c0_i32, %c0_i32_0, %c0_i32_1 : i32, i32, i32, i32
  }
  func.func @transform_1(%arg0: i32) -> (i32, i32) {
    %c0_i32 = arith.constant 0 : i32
    %c0_i32_0 = arith.constant 0 : i32
    %c0_i32_1 = arith.constant 0 : i32
    return %c0_i32, %c0_i32_0 : i32, i32
  }
  func.func @transform_2(%arg0: i32) -> (i32, i32) {
    %c0_i32 = arith.constant 0 : i32
    %c0_i32_0 = arith.constant 0 : i32
    %c0_i32_1 = arith.constant 0 : i32
    return %c0_i32, %c0_i32_0 : i32, i32
  }
  func.func @transform_3(%arg0: i32) -> (i32, i32) {
    %c0_i32 = arith.constant 0 : i32
    %c0_i32_0 = arith.constant 0 : i32
    %c0_i32_1 = arith.constant 0 : i32
    return %c0_i32, %c0_i32_0 : i32, i32
  }
  func.func @transform_4(%arg0: i32) -> (i32, i32, i32, i32) {
    %c0_i32 = arith.constant 0 : i32
    %c0_i32_0 = arith.constant 0 : i32
    %c0_i32_1 = arith.constant 0 : i32
    %c0_i32_2 = arith.constant 0 : i32
    return %arg0, %c0_i32, %c0_i32_0, %c0_i32_1 : i32, i32, i32, i32
  }
  func.func @transform_5(%arg0: i32) -> (i32, i32, i32, i32) {
    %c0_i32 = arith.constant 0 : i32
    %c0_i32_0 = arith.constant 0 : i32
    %c0_i32_1 = arith.constant 0 : i32
    %c0_i32_2 = arith.constant 0 : i32
    return %arg0, %c0_i32, %c0_i32_0, %c0_i32_1 : i32, i32, i32, i32
  }
}

module attributes {stable_mosaic.version = 11 : i64} {
  func.func @_sep_conv_residual_kernel(%arg0: i32, %arg1: memref<1x8x8x128xbf16, #tpu.memory_space<vmem>>, %arg2: memref<16x128xf32, #tpu.memory_space<vmem>>, %arg3: memref<128x128xbf16, #tpu.memory_space<vmem>>, %arg4: memref<1x128xf32, #tpu.memory_space<vmem>>, %arg5: memref<1x8x8x128xbf16, #tpu.memory_space<vmem>>, %arg6: memref<1x8x8x128xf32, #tpu.memory_space<vmem>>, %arg7: memref<10x10x128xf32, #tpu.memory_space<vmem>>) attributes {dimension_semantics = [#tpu.dimension_semantics<parallel>], iteration_bounds = array<i64: 2>, scalar_prefetch = 0 : i64, scratch_operands = 1 : i64, tpu.core_type = #tpu.core_type<tc>, window_params = [{transform_indices = @transform_0, window_bounds = array<i64: 1, 8, 8, 128>}, {pipeline_mode = #tpu.pipeline_mode<synchronous>, transform_indices = @transform_1, window_bounds = array<i64: 16, 128>}, {pipeline_mode = #tpu.pipeline_mode<synchronous>, transform_indices = @transform_2, window_bounds = array<i64: 128, 128>}, {pipeline_mode = #tpu.pipeline_mode<synchronous>, transform_indices = @transform_3, window_bounds = array<i64: 1, 128>}, {transform_indices = @transform_4, window_bounds = array<i64: 1, 8, 8, 128>}, {transform_indices = @transform_5, window_bounds = array<i64: 1, 8, 8, 128>}]} {
    %cst = arith.constant 0.000000e+00 : f32
    %0 = vector.broadcast %cst : f32 to vector<10x10x128xf32>
    %c0 = arith.constant 0 : index
    %c0_0 = arith.constant 0 : index
    %c0_1 = arith.constant 0 : index
    %1 = vector.load %arg7[%c0, %c0_0, %c0_1] : memref<10x10x128xf32, #tpu.memory_space<vmem>>, vector<10x10x128xf32>
    tpu.vector_store %arg7[%c0, %c0_0, %c0_1], %0 {strides = array<i32>} : memref<10x10x128xf32, #tpu.memory_space<vmem>>, vector<10x10x128xf32>,
    %c0_2 = arith.constant 0 : index
    %c0_3 = arith.constant 0 : index
    %c0_4 = arith.constant 0 : index
    %c0_5 = arith.constant 0 : index
    %2 = vector.load %arg1[%c0_2, %c0_3, %c0_4, %c0_5] : memref<1x8x8x128xbf16, #tpu.memory_space<vmem>>, vector<1x8x8x128xbf16>
    %3 = vector.shape_cast %2 : vector<1x8x8x128xbf16> to vector<8x8x128xbf16>
    %4 = arith.extf %3 : vector<8x8x128xbf16> to vector<8x8x128xf32>
    %c1 = arith.constant 1 : index
    %c1_6 = arith.constant 1 : index
    %c0_7 = arith.constant 0 : index
    %5 = vector.load %arg7[%c1, %c1_6, %c0_7] : memref<10x10x128xf32, #tpu.memory_space<vmem>>, vector<8x8x128xf32>
    tpu.vector_store %arg7[%c1, %c1_6, %c0_7], %4 {strides = array<i32>} : memref<10x10x128xf32, #tpu.memory_space<vmem>>, vector<8x8x128xf32>,
    %cst_8 = arith.constant 0.000000e+00 : f32
    %6 = vector.broadcast %cst_8 : f32 to vector<8x8x128xf32>
    %c0_9 = arith.constant 0 : index
    %c0_10 = arith.constant 0 : index
    %c0_11 = arith.constant 0 : index
    %7 = vector.load %arg7[%c0_9, %c0_10, %c0_11] : memref<10x10x128xf32, #tpu.memory_space<vmem>>, vector<8x8x128xf32>
    %c0_12 = arith.constant 0 : index
    %c0_13 = arith.constant 0 : index
    %8 = vector.load %arg2[%c0_12, %c0_13] : memref<16x128xf32, #tpu.memory_space<vmem>>, vector<1x128xf32>
    %9 = vector.shape_cast %8 : vector<1x128xf32> to vector<1x1x128xf32>
    %10 = vector.broadcast %9 : vector<1x1x128xf32> to vector<8x8x128xf32>
    %11 = arith.mulf %7, %10 : vector<8x8x128xf32>
    %12 = arith.addf %6, %11 : vector<8x8x128xf32>
    %c0_14 = arith.constant 0 : index
    %c1_15 = arith.constant 1 : index
    %c0_16 = arith.constant 0 : index
    %13 = vector.load %arg7[%c0_14, %c1_15, %c0_16] : memref<10x10x128xf32, #tpu.memory_space<vmem>>, vector<8x8x128xf32>
    %c1_17 = arith.constant 1 : index
    %c0_18 = arith.constant 0 : index
    %14 = vector.load %arg2[%c1_17, %c0_18] : memref<16x128xf32, #tpu.memory_space<vmem>>, vector<1x128xf32>
    %15 = vector.shape_cast %14 : vector<1x128xf32> to vector<1x1x128xf32>
    %16 = vector.broadcast %15 : vector<1x1x128xf32> to vector<8x8x128xf32>
    %17 = arith.mulf %13, %16 : vector<8x8x128xf32>
    %18 = arith.addf %12, %17 : vector<8x8x128xf32>
    %c0_19 = arith.constant 0 : index
    %c2 = arith.constant 2 : index
    %c0_20 = arith.constant 0 : index
    %19 = vector.load %arg7[%c0_19, %c2, %c0_20] : memref<10x10x128xf32, #tpu.memory_space<vmem>>, vector<8x8x128xf32>
    %c2_21 = arith.constant 2 : index
    %c0_22 = arith.constant 0 : index
    %20 = vector.load %arg2[%c2_21, %c0_22] : memref<16x128xf32, #tpu.memory_space<vmem>>, vector<1x128xf32>
    %21 = vector.shape_cast %20 : vector<1x128xf32> to vector<1x1x128xf32>
    %22 = vector.broadcast %21 : vector<1x1x128xf32> to vector<8x8x128xf32>
    %23 = arith.mulf %19, %22 : vector<8x8x128xf32>
    %24 = arith.addf %18, %23 : vector<8x8x128xf32>
    %c1_23 = arith.constant 1 : index
    %c0_24 = arith.constant 0 : index
    %c0_25 = arith.constant 0 : index
    %25 = vector.load %arg7[%c1_23, %c0_24, %c0_25] : memref<10x10x128xf32, #tpu.memory_space<vmem>>, vector<8x8x128xf32>
    %c3 = arith.constant 3 : index
    %c0_26 = arith.constant 0 : index
    %26 = vector.load %arg2[%c3, %c0_26] : memref<16x128xf32, #tpu.memory_space<vmem>>, vector<1x128xf32>
    %27 = vector.shape_cast %26 : vector<1x128xf32> to vector<1x1x128xf32>
    %28 = vector.broadcast %27 : vector<1x1x128xf32> to vector<8x8x128xf32>
    %29 = arith.mulf %25, %28 : vector<8x8x128xf32>
    %30 = arith.addf %24, %29 : vector<8x8x128xf32>
    %c1_27 = arith.constant 1 : index
    %c1_28 = arith.constant 1 : index
    %c0_29 = arith.constant 0 : index
    %31 = vector.load %arg7[%c1_27, %c1_28, %c0_29] : memref<10x10x128xf32, #tpu.memory_space<vmem>>, vector<8x8x128xf32>
    %c4 = arith.constant 4 : index
    %c0_30 = arith.constant 0 : index
    %32 = vector.load %arg2[%c4, %c0_30] : memref<16x128xf32, #tpu.memory_space<vmem>>, vector<1x128xf32>
    %33 = vector.shape_cast %32 : vector<1x128xf32> to vector<1x1x128xf32>
    %34 = vector.broadcast %33 : vector<1x1x128xf32> to vector<8x8x128xf32>
    %35 = arith.mulf %31, %34 : vector<8x8x128xf32>
    %36 = arith.addf %30, %35 : vector<8x8x128xf32>
    %c1_31 = arith.constant 1 : index
    %c2_32 = arith.constant 2 : index
    %c0_33 = arith.constant 0 : index
    %37 = vector.load %arg7[%c1_31, %c2_32, %c0_33] : memref<10x10x128xf32, #tpu.memory_space<vmem>>, vector<8x8x128xf32>
    %c5 = arith.constant 5 : index
    %c0_34 = arith.constant 0 : index
    %38 = vector.load %arg2[%c5, %c0_34] : memref<16x128xf32, #tpu.memory_space<vmem>>, vector<1x128xf32>
    %39 = vector.shape_cast %38 : vector<1x128xf32> to vector<1x1x128xf32>
    %40 = vector.broadcast %39 : vector<1x1x128xf32> to vector<8x8x128xf32>
    %41 = arith.mulf %37, %40 : vector<8x8x128xf32>
    %42 = arith.addf %36, %41 : vector<8x8x128xf32>
    %c2_35 = arith.constant 2 : index
    %c0_36 = arith.constant 0 : index
    %c0_37 = arith.constant 0 : index
    %43 = vector.load %arg7[%c2_35, %c0_36, %c0_37] : memref<10x10x128xf32, #tpu.memory_space<vmem>>, vector<8x8x128xf32>
    %c6 = arith.constant 6 : index
    %c0_38 = arith.constant 0 : index
    %44 = vector.load %arg2[%c6, %c0_38] : memref<16x128xf32, #tpu.memory_space<vmem>>, vector<1x128xf32>
    %45 = vector.shape_cast %44 : vector<1x128xf32> to vector<1x1x128xf32>
    %46 = vector.broadcast %45 : vector<1x1x128xf32> to vector<8x8x128xf32>
    %47 = arith.mulf %43, %46 : vector<8x8x128xf32>
    %48 = arith.addf %42, %47 : vector<8x8x128xf32>
    %c2_39 = arith.constant 2 : index
    %c1_40 = arith.constant 1 : index
    %c0_41 = arith.constant 0 : index
    %49 = vector.load %arg7[%c2_39, %c1_40, %c0_41] : memref<10x10x128xf32, #tpu.memory_space<vmem>>, vector<8x8x128xf32>
    %c7 = arith.constant 7 : index
    %c0_42 = arith.constant 0 : index
    %50 = vector.load %arg2[%c7, %c0_42] : memref<16x128xf32, #tpu.memory_space<vmem>>, vector<1x128xf32>
    %51 = vector.shape_cast %50 : vector<1x128xf32> to vector<1x1x128xf32>
    %52 = vector.broadcast %51 : vector<1x1x128xf32> to vector<8x8x128xf32>
    %53 = arith.mulf %49, %52 : vector<8x8x128xf32>
    %54 = arith.addf %48, %53 : vector<8x8x128xf32>
    %c2_43 = arith.constant 2 : index
    %c2_44 = arith.constant 2 : index
    %c0_45 = arith.constant 0 : index
    %55 = vector.load %arg7[%c2_43, %c2_44, %c0_45] : memref<10x10x128xf32, #tpu.memory_space<vmem>>, vector<8x8x128xf32>
    %c8 = arith.constant 8 : index
    %c0_46 = arith.constant 0 : index
    %56 = vector.load %arg2[%c8, %c0_46] : memref<16x128xf32, #tpu.memory_space<vmem>>, vector<1x128xf32>
    %57 = vector.shape_cast %56 : vector<1x128xf32> to vector<1x1x128xf32>
    %58 = vector.broadcast %57 : vector<1x1x128xf32> to vector<8x8x128xf32>
    %59 = arith.mulf %55, %58 : vector<8x8x128xf32>
    %60 = arith.addf %54, %59 : vector<8x8x128xf32>
    %61 = vector.shape_cast %60 : vector<8x8x128xf32> to vector<64x128xf32>
    %62 = arith.truncf %61 : vector<64x128xf32> to vector<64x128xbf16>
    %c0_47 = arith.constant 0 : index
    %c0_48 = arith.constant 0 : index
    %63 = vector.load %arg3[%c0_47, %c0_48] : memref<128x128xbf16, #tpu.memory_space<vmem>>, vector<128x128xbf16>
    %cst_49 = arith.constant dense<0.000000e+00> : vector<64x128xf32>
    %64 = tpu.matmul %62, %63, %cst_49 {dimension_numbers = #tpu.dot_dimension_numbers<[1], [0], [0], [1], [0, 0, 1, 1], [], []>} : vector<64x128xbf16>, vector<128x128xbf16>, vector<64x128xf32> -> vector<64x128xf32>
    %c0_50 = arith.constant 0 : index
    %c0_51 = arith.constant 0 : index
    %65 = vector.load %arg4[%c0_50, %c0_51] : memref<1x128xf32, #tpu.memory_space<vmem>>, vector<1x128xf32>
    %66 = vector.broadcast %65 : vector<1x128xf32> to vector<64x128xf32>
    %67 = arith.addf %64, %66 : vector<64x128xf32>
    %cst_52 = arith.constant 0.000000e+00 : f32
    %68 = vector.broadcast %cst_52 : f32 to vector<64x128xf32>
    %69 = arith.maximumf %67, %68 : vector<64x128xf32>
    %70 = vector.shape_cast %69 : vector<64x128xf32> to vector<8x8x128xf32>
    %c0_53 = arith.constant 0 : index
    %c0_54 = arith.constant 0 : index
    %c0_55 = arith.constant 0 : index
    %c0_56 = arith.constant 0 : index
    %71 = vector.load %arg5[%c0_53, %c0_54, %c0_55, %c0_56] : memref<1x8x8x128xbf16, #tpu.memory_space<vmem>>, vector<1x8x8x128xbf16>
    %72 = vector.shape_cast %71 : vector<1x8x8x128xbf16> to vector<8x8x128xbf16>
    %73 = arith.extf %72 : vector<8x8x128xbf16> to vector<8x8x128xf32>
    %74 = arith.addf %70, %73 : vector<8x8x128xf32>
    %cst_57 = arith.constant 0.000000e+00 : f32
    %75 = vector.broadcast %cst_57 : f32 to vector<8x8x128xf32>
    %76 = arith.maximumf %74, %75 : vector<8x8x128xf32>
    %c0_58 = arith.constant 0 : index
    %c0_59 = arith.constant 0 : index
    %c0_60 = arith.constant 0 : index
    %c0_61 = arith.constant 0 : index
    %77 = vector.load %arg6[%c0_58, %c0_59, %c0_60, %c0_61] : memref<1x8x8x128xf32, #tpu.memory_space<vmem>>, vector<1x8x8x128xf32>
    %78 = vector.shape_cast %77 : vector<1x8x8x128xf32> to vector<8x8x128xf32>
    %79 = vector.shape_cast %76 : vector<8x8x128xf32> to vector<1x8x8x128xf32>
    tpu.vector_store %arg6[%c0_58, %c0_59, %c0_60, %c0_61], %79 {strides = array<i32>} : memref<1x8x8x128xf32, #tpu.memory_space<vmem>>, vector<1x8x8x128xf32>,
    return
  }
  func.func @transform_0(%arg0: i32) -> (i32, i32, i32, i32) {
    %c0_i32 = arith.constant 0 : i32
    %c0_i32_0 = arith.constant 0 : i32
    %c0_i32_1 = arith.constant 0 : i32
    %c0_i32_2 = arith.constant 0 : i32
    return %arg0, %c0_i32, %c0_i32_0, %c0_i32_1 : i32, i32, i32, i32
  }
  func.func @transform_1(%arg0: i32) -> (i32, i32) {
    %c0_i32 = arith.constant 0 : i32
    %c0_i32_0 = arith.constant 0 : i32
    %c0_i32_1 = arith.constant 0 : i32
    return %c0_i32, %c0_i32_0 : i32, i32
  }
  func.func @transform_2(%arg0: i32) -> (i32, i32) {
    %c0_i32 = arith.constant 0 : i32
    %c0_i32_0 = arith.constant 0 : i32
    %c0_i32_1 = arith.constant 0 : i32
    return %c0_i32, %c0_i32_0 : i32, i32
  }
  func.func @transform_3(%arg0: i32) -> (i32, i32) {
    %c0_i32 = arith.constant 0 : i32
    %c0_i32_0 = arith.constant 0 : i32
    %c0_i32_1 = arith.constant 0 : i32
    return %c0_i32, %c0_i32_0 : i32, i32
  }
  func.func @transform_4(%arg0: i32) -> (i32, i32, i32, i32) {
    %c0_i32 = arith.constant 0 : i32
    %c0_i32_0 = arith.constant 0 : i32
    %c0_i32_1 = arith.constant 0 : i32
    %c0_i32_2 = arith.constant 0 : i32
    return %arg0, %c0_i32, %c0_i32_0, %c0_i32_1 : i32, i32, i32, i32
  }
  func.func @transform_5(%arg0: i32) -> (i32, i32, i32, i32) {
    %c0_i32 = arith.constant 0 : i32
    %c0_i32_0 = arith.constant 0 : i32
    %c0_i32_1 = arith.constant 0 : i32
    %c0_i32_2 = arith.constant 0 : i32
    return %arg0, %c0_i32, %c0_i32_0, %c0_i32_1 : i32, i32, i32, i32
  }
}

</mosaic_0001>

<llo_original>
// kernel: _lambda_.10
$region0: #{_lambda_.10}
  #allocation0 [shape = 'u32[]', space=smem, size = 0x4, offset = 0x4, fixed_abs, tag = 'smem constant byte address 0x4 - core index']
  #allocation1 [shape = 'u32[72,128]{1,0:T(1,128)}', space=vmem, size = 0x9000, scoped, tag = 'internal scratch']
  #allocation2 [shape = 'f32[10,10,128]{2,1,0:T(8,128)}', space=vmem, size = 0x14000, scoped, tag = 'scratch operand']
  %s0 = inlined_call_operand.vmem [shape: bf16[2,8,8,128], index: 0, kind: input, shape index: {}]
  %s1 = inlined_call_operand.vmem [shape: f32[16,128], index: 1, kind: input, shape index: {}]
  %s2 = inlined_call_operand.vmem [shape: bf16[128,128], index: 2, kind: input, shape index: {}]
  %s3 = inlined_call_operand.vmem [shape: f32[1,128], index: 3, kind: input, shape index: {}]
  %s4 = inlined_call_operand.vmem [shape: bf16[2,8,8,128], index: 4, kind: input, shape index: {}]
  %s5 = inlined_call_operand.vmem [shape: bf16[2,8,8,128], index: 5, kind: output, shape index: {}]
  %s6 = sld [smem:[#allocation0]]
  $region53: #{_lambda_.10} parent=0
    _
  %s8 = ssub.s32 1, %s6
  %s9 = scalar_select 0, %s8, %s6
  loop: start=0, step=1, limit=4
  $region2: #{_lambda_.10} parent=0 // loop_pre_header
    _
  $region3: #{_lambda_.10} parent=0 // loop_header
    %s11 = sphi 0, %s15
    %p12 = scmp.ge.s32.totalorder %s11, 4
    %s21 = sphi 0, %s23
    %s24 = sphi 0, %s21
    %s25 = sphi 0, %s24
    %s41 = sphi 0, %s25
    %s45 = sphi 0, %s45
    %s47 = sphi 0, %s45
    %s48 = sphi 0, %s47
    %s62 = sphi 0, %s48
    %s66 = sphi 0, %s66
    %s68 = sphi 0, %s66
    %s69 = sphi 0, %s68
    %s83 = sphi 0, %s69
    %s87 = sphi 0, %s87
    %s89 = sphi 0, %s87
    %s90 = sphi 0, %s89
    %s104 = sphi 0, %s90
    %s110 = sphi 0, %s112
    %s113 = sphi 0, %s110
    %s114 = sphi 0, %s113
    %s130 = sphi 0, %s114
    %s136 = sphi 0, %s138
    %s139 = sphi 0, %s136
    %s140 = sphi 0, %s139
    %s156 = sphi 0, %s140
  $region4: #{_lambda_.10} parent=0 // loop_header_branch
    %14 = sbr.rel (%p12) target = $region8
  $region5: #{_lambda_.10} parent=0 // loop_body
    %s16 = ssub.s32 %s11, 1
    %s17 = ssub.s32 %s11, 2
    %s18 = sadd.s32 %s11, 1
    %s19 = ssub.s32 %s11, %s18
    %p20 = scmp.eq.s32.totalorder %s19, 0
    %s22 = sadd.s32 %s21, 1
    %s23 = scalar_select %p20, %s21, %s22
    %p26 = pneg %p20
    %p27 = scmp.eq.s32.totalorder %s11, 1
    %p28 = por %p26, %p27
    %p29 = scmp.ne.s32.totalorder %s21, %s24
    %p30 = scmp.eq.s32.totalorder %s11, 0
    %p31 = por %p29, %p30
    %p32 = scmp.ne.s32.totalorder %s21, %s24
    %p33 = scmp.eq.s32.totalorder %s16, 1
    %p34 = por %p32, %p33
    %p35 = scmp.ne.s32.totalorder %s24, %s25
    %p36 = scmp.eq.s32.totalorder %s16, 0
    %p37 = por %p35, %p36
    %p38 = scmp.ne.s32.totalorder %s24, %s25
    %p39 = scmp.eq.s32.totalorder %s17, 1
    %p40 = por %p38, %p39
    %p42 = scmp.ne.s32.totalorder %s25, %s41
    %p43 = scmp.eq.s32.totalorder %s17, 0
    %p44 = por %p42, %p43
    %s46 = sadd.s32 %s45, 1
    %p49 = scmp.eq.s32.totalorder %s11, 1
    %p50 = scmp.ne.s32.totalorder %s45, %s47
    %p51 = scmp.eq.s32.totalorder %s11, 0
    %p52 = por %p50, %p51
    %p53 = scmp.ne.s32.totalorder %s45, %s47
    %p54 = scmp.eq.s32.totalorder %s16, 1
    %p55 = por %p53, %p54
    %p56 = scmp.ne.s32.totalorder %s47, %s48
    %p57 = scmp.eq.s32.totalorder %s16, 0
    %p58 = por %p56, %p57
    %p59 = scmp.ne.s32.totalorder %s47, %s48
    %p60 = scmp.eq.s32.totalorder %s17, 1
    %p61 = por %p59, %p60
    %p63 = scmp.ne.s32.totalorder %s48, %s62
    %p64 = scmp.eq.s32.totalorder %s17, 0
    %p65 = por %p63, %p64
    %s67 = sadd.s32 %s66, 1
    %p70 = scmp.eq.s32.totalorder %s11, 1
    %p71 = scmp.ne.s32.totalorder %s66, %s68
    %p72 = scmp.eq.s32.totalorder %s11, 0
    %p73 = por %p71, %p72
    %p74 = scmp.ne.s32.totalorder %s66, %s68
    %p75 = scmp.eq.s32.totalorder %s16, 1
    %p76 = por %p74, %p75
    %p77 = scmp.ne.s32.totalorder %s68, %s69
    %p78 = scmp.eq.s32.totalorder %s16, 0
    %p79 = por %p77, %p78
    %p80 = scmp.ne.s32.totalorder %s68, %s69
    %p81 = scmp.eq.s32.totalorder %s17, 1
    %p82 = por %p80, %p81
    %p84 = scmp.ne.s32.totalorder %s69, %s83
    %p85 = scmp.eq.s32.totalorder %s17, 0
    %p86 = por %p84, %p85
    %s88 = sadd.s32 %s87, 1
    %p91 = scmp.eq.s32.totalorder %s11, 1
    %p92 = scmp.ne.s32.totalorder %s87, %s89
    %p93 = scmp.eq.s32.totalorder %s11, 0
    %p94 = por %p92, %p93
    %p95 = scmp.ne.s32.totalorder %s87, %s89
    %p96 = scmp.eq.s32.totalorder %s16, 1
    %p97 = por %p95, %p96
    %p98 = scmp.ne.s32.totalorder %s89, %s90
    %p99 = scmp.eq.s32.totalorder %s16, 0
    %p100 = por %p98, %p99
    %p101 = scmp.ne.s32.totalorder %s89, %s90
    %p102 = scmp.eq.s32.totalorder %s17, 1
    %p103 = por %p101, %p102
    %p105 = scmp.ne.s32.totalorder %s90, %s104
    %p106 = scmp.eq.s32.totalorder %s17, 0
    %p107 = por %p105, %p106
    %s108 = ssub.s32 %s11, %s18
    %p109 = scmp.eq.s32.totalorder %s108, 0
    %s111 = sadd.s32 %s110, 1
    %s112 = scalar_select %p109, %s110, %s111
    %p115 = pneg %p109
    %p116 = scmp.eq.s32.totalorder %s11, 1
    %p117 = por %p115, %p116
    %p118 = scmp.ne.s32.totalorder %s110, %s113
    %p119 = scmp.eq.s32.totalorder %s11, 0
    %p120 = por %p118, %p119
    %p121 = scmp.ne.s32.totalorder %s110, %s113
    %p122 = scmp.eq.s32.totalorder %s16, 1
    %p123 = por %p121, %p122
    %p124 = scmp.ne.s32.totalorder %s113, %s114
    %p125 = scmp.eq.s32.totalorder %s16, 0
    %p126 = por %p124, %p125
    %p127 = scmp.ne.s32.totalorder %s113, %s114
    %p128 = scmp.eq.s32.totalorder %s17, 1
    %p129 = por %p127, %p128
    %p131 = scmp.ne.s32.totalorder %s114, %s130
    %p132 = scmp.eq.s32.totalorder %s17, 0
    %p133 = por %p131, %p132
    %s134 = ssub.s32 %s11, %s18
    %p135 = scmp.eq.s32.totalorder %s134, 0
    %s137 = sadd.s32 %s136, 1
    %s138 = scalar_select %p135, %s136, %s137
    %p141 = pneg %p135
    %p142 = scmp.eq.s32.totalorder %s11, 1
    %p143 = por %p141, %p142
    %p144 = scmp.ne.s32.totalorder %s136, %s139
    %p145 = scmp.eq.s32.totalorder %s11, 0
    %p146 = por %p144, %p145
    %p147 = scmp.ne.s32.totalorder %s136, %s139
    %p148 = scmp.eq.s32.totalorder %s16, 1
    %p149 = por %p147, %p148
    %p150 = scmp.ne.s32.totalorder %s139, %s140
    %p151 = scmp.eq.s32.totalorder %s16, 0
    %p152 = por %p150, %p151
    %p153 = scmp.ne.s32.totalorder %s139, %s140
    %p154 = scmp.eq.s32.totalorder %s17, 1
    %p155 = por %p153, %p154
    %p157 = scmp.ne.s32.totalorder %s140, %s156
    %p158 = scmp.eq.s32.totalorder %s17, 0
    %p159 = por %p157, %p158
    %p160 = scmp.le.s32.totalorder 1, %s11
    %p161 = scmp.lt.s32.totalorder %s11, 3
    %p162 = pnand %p160, %p161
    %p163 = pneg %p162
    // Predicated region
    $region9: #{_lambda_.10} parent=5 // pred_check
      _
    $region10: #{_lambda_.10} parent=5 // pred_check_branch
      %165 = sbr.rel (%p162) target = $region12
    $region11: #{_lambda_.10} parent=5 // pred_region
      %s166 = ssub.s32 %s11, 1
      // Predicated region
      $region13: #{_lambda_.10} parent=11 // pred_check
        %p167 = pneg %p58
      $region14: #{_lambda_.10} parent=11 // pred_check_branch
        %169 = sbr.rel (%p167) target = $region16
      $region15: #{_lambda_.10} parent=11 // pred_region
        _
      $region16: #{_lambda_.10} parent=11 // pred_fallthru
        _
      // Predicated region
      $region17: #{_lambda_.10} parent=11 // pred_check
        %p170 = pneg %p79
      $region18: #{_lambda_.10} parent=11 // pred_check_branch
        %172 = sbr.rel (%p170) target = $region20
      $region19: #{_lambda_.10} parent=11 // pred_region
        _
      $region20: #{_lambda_.10} parent=11 // pred_fallthru
        _
      // Predicated region
      $region21: #{_lambda_.10} parent=11 // pred_check
        %p173 = pneg %p100
      $region22: #{_lambda_.10} parent=11 // pred_check_branch
        %175 = sbr.rel (%p173) target = $region24
      $region23: #{_lambda_.10} parent=11 // pred_region
        _
      $region24: #{_lambda_.10} parent=11 // pred_fallthru
        _
    $region12: #{_lambda_.10} parent=5 // pred_fallthru
      _
    %p176 = scmp.lt.s32.totalorder %s11, 2
    // Predicated region
    $region25: #{_lambda_.10} parent=5 // pred_check
      %p177 = pneg %p176
    $region26: #{_lambda_.10} parent=5 // pred_check_branch
      %179 = sbr.rel (%p177) target = $region28
    $region27: #{_lambda_.10} parent=5 // pred_region
      // Predicated region
      $region29: #{_lambda_.10} parent=27 // pred_check
        %p180 = pneg %p31
      $region30: #{_lambda_.10} parent=27 // pred_check_branch
        %182 = sbr.rel (%p180) target = $region32
      $region31: #{_lambda_.10} parent=27 // pred_region
        %p183 = scmp.lt.s32.totalorder %s11, 1
        %s184 = scalar_select %p183, %s11, 1
        %s185 = smul.addr %s184, 8
        %s186 = smul.addr %s185, 4
        %s187 = scalar_lea.vmem %s0, %s186
      $region32: #{_lambda_.10} parent=27 // pred_fallthru
        _
      // Predicated region
      $region33: #{_lambda_.10} parent=27 // pred_check
        %p188 = pneg %p120
      $region34: #{_lambda_.10} parent=27 // pred_check_branch
        %190 = sbr.rel (%p188) target = $region36
      $region35: #{_lambda_.10} parent=27 // pred_region
        %p191 = scmp.lt.s32.totalorder %s11, 1
        %s192 = scalar_select %p191, %s11, 1
        %s193 = smul.addr %s192, 8
        %s194 = smul.addr %s193, 4
        %s195 = scalar_lea.vmem %s4, %s194
      $region36: #{_lambda_.10} parent=27 // pred_fallthru
        _
    $region28: #{_lambda_.10} parent=5 // pred_fallthru
      _
    %p196 = scmp.le.s32.totalorder 1, %s11
    %p197 = scmp.lt.s32.totalorder %s11, 3
    %p198 = pnand %p196, %p197
    %p199 = pneg %p198
    // Predicated region
    $region37: #{_lambda_.10} parent=5 // pred_check
      _
    $region38: #{_lambda_.10} parent=5 // pred_check_branch
      %201 = sbr.rel (%p198) target = $region40
    $region39: #{_lambda_.10} parent=5 // pred_region
      %s202 = ssub.s32 %s11, 1
      %p203 = scmp.lt.s32.totalorder %s16, 1
      %s204 = scalar_select %p203, %s16, 1
      %s205 = smul.addr %s204, 8
      %s206 = smul.addr %s205, 4
      %s207 = scalar_lea.vmem %s0, %s206
      %p208 = pneg %p37
      %p209 = pneg %p34
      %p210 = pneg %p58
      %p211 = pneg %p55
      %p212 = pneg %p79
      %p213 = pneg %p76
      %p214 = pneg %p100
      %p215 = pneg %p97
      %p216 = scmp.lt.s32.totalorder %s16, 1
      %s217 = scalar_select %p216, %s16, 1
      %s218 = smul.addr %s217, 8
      %s219 = smul.addr %s218, 4
      %s220 = scalar_lea.vmem %s4, %s219
      %p221 = pneg %p126
      %p222 = pneg %p123
      %p223 = pneg %p152
      %p224 = pneg %p149
      %p225 = scmp.lt.s32.totalorder %s16, 1
      %s226 = scalar_select %p225, %s16, 1
      %s227 = smul.addr %s226, 8
      %s228 = smul.addr %s227, 4
      %s229 = scalar_lea.vmem %s5, %s228
      %p230 = scmp.lt.s32.totalorder %s16, 1
      %s231 = scalar_select %p230, %s16, 1
      %s232 = smul.addr %s231, 8
      %s233 = smul.addr %s232, 4
      %s234 = scalar_lea.vmem %s0, %s233
      %p235 = scmp.lt.s32.totalorder %s16, 1
      %s236 = scalar_select %p235, %s16, 1
      %s237 = smul.addr %s236, 8
      %s238 = smul.addr %s237, 4
      %s239 = scalar_lea.vmem %s4, %s238
      %p240 = scmp.lt.s32.totalorder %s16, 1
      %s241 = scalar_select %p240, %s16, 1
      %s242 = smul.addr %s241, 8
      %s243 = smul.addr %s242, 4
      %s244 = scalar_lea.vmem %s5, %s243
      %245 = vst [vmem:[#allocation2] sm:$0xff] 0.0
      %246 = vst [vmem:[#allocation2 + $0x8] sm:$0x3] 0.0
      %247 = vst [vmem:[#allocation2 + $0x10] sm:$0xff] 0.0
      %248 = vst [vmem:[#allocation2 + $0x18] sm:$0x3] 0.0
      %249 = vst [vmem:[#allocation2 + $0x20] sm:$0xff] 0.0
      %250 = vst [vmem:[#allocation2 + $0x28] sm:$0x3] 0.0
      %251 = vst [vmem:[#allocation2 + $0x30] sm:$0xff] 0.0
      %252 = vst [vmem:[#allocation2 + $0x38] sm:$0x3] 0.0
      %253 = vst [vmem:[#allocation2 + $0x40] sm:$0xff] 0.0
      %254 = vst [vmem:[#allocation2 + $0x48] sm:$0x3] 0.0
      %255 = vst [vmem:[#allocation2 + $0x50] sm:$0xff] 0.0
      %256 = vst [vmem:[#allocation2 + $0x58] sm:$0x3] 0.0
      %257 = vst [vmem:[#allocation2 + $0x60] sm:$0xff] 0.0
      %258 = vst [vmem:[#allocation2 + $0x68] sm:$0x3] 0.0
      %259 = vst [vmem:[#allocation2 + $0x70] sm:$0xff] 0.0
      %260 = vst [vmem:[#allocation2 + $0x78] sm:$0x3] 0.0
      %261 = vst [vmem:[#allocation2 + $0x80] sm:$0xff] 0.0
      %262 = vst [vmem:[#allocation2 + $0x88] sm:$0x3] 0.0
      %263 = vst [vmem:[#allocation2 + $0x90] sm:$0xff] 0.0
      %264 = vst [vmem:[#allocation2 + $0x98] sm:$0x3] 0.0
      %v265 = vld [vmem:[%s234] sm:$0xf]
      %v266 = vld [vmem:[%s234 + $0x4] sm:$0xf]
      %v267 = vld [vmem:[%s234 + $0x8] sm:$0xf]
      %v268 = vld [vmem:[%s234 + $0xc] sm:$0xf]
      %v269 = vld [vmem:[%s234 + $0x10] sm:$0xf]
      %v270 = vld [vmem:[%s234 + $0x14] sm:$0xf]
      %v271 = vld [vmem:[%s234 + $0x18] sm:$0xf]
      %v272 = vld [vmem:[%s234 + $0x1c] sm:$0xf]
      %v273 = vunpack.c.l.bf16 %v265
      %v274 = vunpack.c.l.bf16 %v266
      %v275 = vunpack.c.l.bf16 %v267
      %v276 = vunpack.c.l.bf16 %v268
      %v277 = vunpack.c.l.bf16 %v269
      %v278 = vunpack.c.l.bf16 %v270
      %v279 = vunpack.c.l.bf16 %v271
      %v280 = vunpack.c.l.bf16 %v272
      %s281 = scalar_lea.vmem [#allocation2], 16
      %282 = vst [vmem:[%s281 + $0x1] sm:$0xff] %v273
      %283 = vst [vmem:[%s281 + $0x11] sm:$0xff] %v274
      %284 = vst [vmem:[%s281 + $0x21] sm:$0xff] %v275
      %285 = vst [vmem:[%s281 + $0x31] sm:$0xff] %v276
      %286 = vst [vmem:[%s281 + $0x41] sm:$0xff] %v277
      %287 = vst [vmem:[%s281 + $0x51] sm:$0xff] %v278
      %288 = vst [vmem:[%s281 + $0x61] sm:$0xff] %v279
      %289 = vst [vmem:[%s281 + $0x71] sm:$0xff] %v280
      %v290 = vld [vmem:[#allocation2] sm:$0xff]
      %v291 = vld [vmem:[#allocation2 + $0x10] sm:$0xff]
      %v292 = vld [vmem:[#allocation2 + $0x20] sm:$0xff]
      %v293 = vld [vmem:[#allocation2 + $0x30] sm:$0xff]
      %v294 = vld [vmem:[#allocation2 + $0x40] sm:$0xff]
      %v295 = vld [vmem:[#allocation2 + $0x50] sm:$0xff]
      %v296 = vld [vmem:[#allocation2 + $0x60] sm:$0xff]
      %v297 = vld [vmem:[#allocation2 + $0x70] sm:$0xff]
      %v298 = vld [vmem:[%s1] sm:$0x1]
      %v299 = vperm.slane %v298, 0
      %v300 = vmul.f32 %v290, %v299
      %v301 = vmul.f32 %v291, %v299
      %v302 = vmul.f32 %v292, %v299
      %v303 = vmul.f32 %v293, %v299
      %v304 = vmul.f32 %v294, %v299
      %v305 = vmul.f32 %v295, %v299
      %v306 = vmul.f32 %v296, %v299
      %v307 = vmul.f32 %v297, %v299
      %v308 = vadd.f32 %v300, 0.0
      %v309 = vadd.f32 %v301, 0.0
      %v310 = vadd.f32 %v302, 0.0
      %v311 = vadd.f32 %v303, 0.0
      %v312 = vadd.f32 %v304, 0.0
      %v313 = vadd.f32 %v305, 0.0
      %v314 = vadd.f32 %v306, 0.0
      %v315 = vadd.f32 %v307, 0.0
      %v316 = vld [vmem:[#allocation2 + $0x1] sm:$0xff]
      %v317 = vld [vmem:[#allocation2 + $0x11] sm:$0xff]
      %v318 = vld [vmem:[#allocation2 + $0x21] sm:$0xff]
      %v319 = vld [vmem:[#allocation2 + $0x31] sm:$0xff]
      %v320 = vld [vmem:[#allocation2 + $0x41] sm:$0xff]
      %v321 = vld [vmem:[#allocation2 + $0x51] sm:$0xff]
      %v322 = vld [vmem:[#allocation2 + $0x61] sm:$0xff]
      %v323 = vld [vmem:[#allocation2 + $0x71] sm:$0xff]
      %v324 = vld [vmem:[%s1 + $0x1] sm:$0x1]
      %v325 = vperm.slane %v324, 0
      %v326 = vmul.f32 %v316, %v325
      %v327 = vmul.f32 %v317, %v325
      %v328 = vmul.f32 %v318, %v325
      %v329 = vmul.f32 %v319, %v325
      %v330 = vmul.f32 %v320, %v325
      %v331 = vmul.f32 %v321, %v325
      %v332 = vmul.f32 %v322, %v325
      %v333 = vmul.f32 %v323, %v325
      %v334 = vadd.f32 %v308, %v326
      %v335 = vadd.f32 %v309, %v327
      %v336 = vadd.f32 %v310, %v328
      %v337 = vadd.f32 %v311, %v329
      %v338 = vadd.f32 %v312, %v330
      %v339 = vadd.f32 %v313, %v331
      %v340 = vadd.f32 %v314, %v332
      %v341 = vadd.f32 %v315, %v333
      %v342 = vld [vmem:[#allocation2 + $0x2] sm:$0xff]
      %v343 = vld [vmem:[#allocation2 + $0x12] sm:$0xff]
      %v344 = vld [vmem:[#allocation2 + $0x22] sm:$0xff]
      %v345 = vld [vmem:[#allocation2 + $0x32] sm:$0xff]
      %v346 = vld [vmem:[#allocation2 + $0x42] sm:$0xff]
      %v347 = vld [vmem:[#allocation2 + $0x52] sm:$0xff]
      %v348 = vld [vmem:[#allocation2 + $0x62] sm:$0xff]
      %v349 = vld [vmem:[#allocation2 + $0x72] sm:$0xff]
      %v350 = vld [vmem:[%s1 + $0x2] sm:$0x1]
      %v351 = vperm.slane %v350, 0
      %v352 = vmul.f32 %v342, %v351
      %v353 = vmul.f32 %v343, %v351
      %v354 = vmul.f32 %v344, %v351
      %v355 = vmul.f32 %v345, %v351
      %v356 = vmul.f32 %v346, %v351
      %v357 = vmul.f32 %v347, %v351
      %v358 = vmul.f32 %v348, %v351
      %v359 = vmul.f32 %v349, %v351
      %v360 = vadd.f32 %v334, %v352
      %v361 = vadd.f32 %v335, %v353
      %v362 = vadd.f32 %v336, %v354
      %v363 = vadd.f32 %v337, %v355
      %v364 = vadd.f32 %v338, %v356
      %v365 = vadd.f32 %v339, %v357
      %v366 = vadd.f32 %v340, %v358
      %v367 = vadd.f32 %v341, %v359
      %v368 = vld [vmem:[%s281] sm:$0xff]
      %v369 = vld [vmem:[%s281 + $0x10] sm:$0xff]
      %v370 = vld [vmem:[%s281 + $0x20] sm:$0xff]
      %v371 = vld [vmem:[%s281 + $0x30] sm:$0xff]
      %v372 = vld [vmem:[%s281 + $0x40] sm:$0xff]
      %v373 = vld [vmem:[%s281 + $0x50] sm:$0xff]
      %v374 = vld [vmem:[%s281 + $0x60] sm:$0xff]
      %v375 = vld [vmem:[%s281 + $0x70] sm:$0xff]
      %v376 = vld [vmem:[%s1 + $0x3] sm:$0x1]
      %v377 = vperm.slane %v376, 0
      %v378 = vmul.f32 %v368, %v377
      %v379 = vmul.f32 %v369, %v377
      %v380 = vmul.f32 %v370, %v377
      %v381 = vmul.f32 %v371, %v377
      %v382 = vmul.f32 %v372, %v377
      %v383 = vmul.f32 %v373, %v377
      %v384 = vmul.f32 %v374, %v377
      %v385 = vmul.f32 %v375, %v377
      %v386 = vadd.f32 %v360, %v378
      %v387 = vadd.f32 %v361, %v379
      %v388 = vadd.f32 %v362, %v380
      %v389 = vadd.f32 %v363, %v381
      %v390 = vadd.f32 %v364, %v382
      %v391 = vadd.f32 %v365, %v383
      %v392 = vadd.f32 %v366, %v384
      %v393 = vadd.f32 %v367, %v385
      %v394 = vld [vmem:[%s281 + $0x1] sm:$0xff]
      %v395 = vld [vmem:[%s281 + $0x11] sm:$0xff]
      %v396 = vld [vmem:[%s281 + $0x21] sm:$0xff]
      %v397 = vld [vmem:[%s281 + $0x31] sm:$0xff]
      %v398 = vld [vmem:[%s281 + $0x41] sm:$0xff]
      %v399 = vld [vmem:[%s281 + $0x51] sm:$0xff]
      %v400 = vld [vmem:[%s281 + $0x61] sm:$0xff]
      %v401 = vld [vmem:[%s281 + $0x71] sm:$0xff]
      %v402 = vld [vmem:[%s1 + $0x4] sm:$0x1]
      %v403 = vperm.slane %v402, 0
      %v404 = vmul.f32 %v394, %v403
      %v405 = vmul.f32 %v395, %v403
      %v406 = vmul.f32 %v396, %v403
      %v407 = vmul.f32 %v397, %v403
      %v408 = vmul.f32 %v398, %v403
      %v409 = vmul.f32 %v399, %v403
      %v410 = vmul.f32 %v400, %v403
      %v411 = vmul.f32 %v401, %v403
      %v412 = vadd.f32 %v386, %v404
      %v413 = vadd.f32 %v387, %v405
      %v414 = vadd.f32 %v388, %v406
      %v415 = vadd.f32 %v389, %v407
      %v416 = vadd.f32 %v390, %v408
      %v417 = vadd.f32 %v391, %v409
      %v418 = vadd.f32 %v392, %v410
      %v419 = vadd.f32 %v393, %v411
      %v420 = vld [vmem:[%s281 + $0x2] sm:$0xff]
      %v421 = vld [vmem:[%s281 + $0x12] sm:$0xff]
      %v422 = vld [vmem:[%s281 + $0x22] sm:$0xff]
      %v423 = vld [vmem:[%s281 + $0x32] sm:$0xff]
      %v424 = vld [vmem:[%s281 + $0x42] sm:$0xff]
      %v425 = vld [vmem:[%s281 + $0x52] sm:$0xff]
      %v426 = vld [vmem:[%s281 + $0x62] sm:$0xff]
      %v427 = vld [vmem:[%s281 + $0x72] sm:$0xff]
      %v428 = vld [vmem:[%s1 + $0x5] sm:$0x1]
      %v429 = vperm.slane %v428, 0
      %v430 = vmul.f32 %v420, %v429
      %v431 = vmul.f32 %v421, %v429
      %v432 = vmul.f32 %v422, %v429
      %v433 = vmul.f32 %v423, %v429
      %v434 = vmul.f32 %v424, %v429
      %v435 = vmul.f32 %v425, %v429
      %v436 = vmul.f32 %v426, %v429
      %v437 = vmul.f32 %v427, %v429
      %v438 = vadd.f32 %v412, %v430
      %v439 = vadd.f32 %v413, %v431
      %v440 = vadd.f32 %v414, %v432
      %v441 = vadd.f32 %v415, %v433
      %v442 = vadd.f32 %v416, %v434
      %v443 = vadd.f32 %v417, %v435
      %v444 = vadd.f32 %v418, %v436
      %v445 = vadd.f32 %v419, %v437
      %s446 = scalar_lea.vmem [#allocation2], 32
      %v447 = vld [vmem:[%s446] sm:$0xff]
      %v448 = vld [vmem:[%s446 + $0x10] sm:$0xff]
      %v449 = vld [vmem:[%s446 + $0x20] sm:$0xff]
      %v450 = vld [vmem:[%s446 + $0x30] sm:$0xff]
      %v451 = vld [vmem:[%s446 + $0x40] sm:$0xff]
      %v452 = vld [vmem:[%s446 + $0x50] sm:$0xff]
      %v453 = vld [vmem:[%s446 + $0x60] sm:$0xff]
      %v454 = vld [vmem:[%s446 + $0x70] sm:$0xff]
      %v455 = vld [vmem:[%s1 + $0x6] sm:$0x1]
      %v456 = vperm.slane %v455, 0
      %v457 = vmul.f32 %v447, %v456
      %v458 = vmul.f32 %v448, %v456
      %v459 = vmul.f32 %v449, %v456
      %v460 = vmul.f32 %v450, %v456
      %v461 = vmul.f32 %v451, %v456
      %v462 = vmul.f32 %v452, %v456
      %v463 = vmul.f32 %v453, %v456
      %v464 = vmul.f32 %v454, %v456
      %v465 = vadd.f32 %v438, %v457
      %v466 = vadd.f32 %v439, %v458
      %v467 = vadd.f32 %v440, %v459
      %v468 = vadd.f32 %v441, %v460
      %v469 = vadd.f32 %v442, %v461
      %v470 = vadd.f32 %v443, %v462
      %v471 = vadd.f32 %v444, %v463
      %v472 = vadd.f32 %v445, %v464
      %v473 = vld [vmem:[%s446 + $0x1] sm:$0xff]
      %v474 = vld [vmem:[%s446 + $0x11] sm:$0xff]
      %v475 = vld [vmem:[%s446 + $0x21] sm:$0xff]
      %v476 = vld [vmem:[%s446 + $0x31] sm:$0xff]
      %v477 = vld [vmem:[%s446 + $0x41] sm:$0xff]
      %v478 = vld [vmem:[%s446 + $0x51] sm:$0xff]
      %v479 = vld [vmem:[%s446 + $0x61] sm:$0xff]
      %v480 = vld [vmem:[%s446 + $0x71] sm:$0xff]
      %v481 = vld [vmem:[%s1 + $0x7] sm:$0x1]
      %v482 = vperm.slane %v481, 0
      %v483 = vmul.f32 %v473, %v482
      %v484 = vmul.f32 %v474, %v482
      %v485 = vmul.f32 %v475, %v482
      %v486 = vmul.f32 %v476, %v482
      %v487 = vmul.f32 %v477, %v482
      %v488 = vmul.f32 %v478, %v482
      %v489 = vmul.f32 %v479, %v482
      %v490 = vmul.f32 %v480, %v482
      %v491 = vadd.f32 %v465, %v483
      %v492 = vadd.f32 %v466, %v484
      %v493 = vadd.f32 %v467, %v485
      %v494 = vadd.f32 %v468, %v486
      %v495 = vadd.f32 %v469, %v487
      %v496 = vadd.f32 %v470, %v488
      %v497 = vadd.f32 %v471, %v489
      %v498 = vadd.f32 %v472, %v490
      %v499 = vld [vmem:[%s446 + $0x2] sm:$0xff]
      %v500 = vld [vmem:[%s446 + $0x12] sm:$0xff]
      %v501 = vld [vmem:[%s446 + $0x22] sm:$0xff]
      %v502 = vld [vmem:[%s446 + $0x32] sm:$0xff]
      %v503 = vld [vmem:[%s446 + $0x42] sm:$0xff]
      %v504 = vld [vmem:[%s446 + $0x52] sm:$0xff]
      %v505 = vld [vmem:[%s446 + $0x62] sm:$0xff]
      %v506 = vld [vmem:[%s446 + $0x72] sm:$0xff]
      %v507 = vld [vmem:[%s1 + $0x8] sm:$0x1]
      %v508 = vperm.slane %v507, 0
      %v509 = vmul.f32 %v499, %v508
      %v510 = vmul.f32 %v500, %v508
      %v511 = vmul.f32 %v501, %v508
      %v512 = vmul.f32 %v502, %v508
      %v513 = vmul.f32 %v503, %v508
      %v514 = vmul.f32 %v504, %v508
      %v515 = vmul.f32 %v505, %v508
      %v516 = vmul.f32 %v506, %v508
      %v517 = vadd.f32 %v491, %v509
      %v518 = vadd.f32 %v492, %v510
      %v519 = vadd.f32 %v493, %v511
      %v520 = vadd.f32 %v494, %v512
      %v521 = vadd.f32 %v495, %v513
      %v522 = vadd.f32 %v496, %v514
      %v523 = vadd.f32 %v497, %v515
      %v524 = vadd.f32 %v498, %v516
      %v525 = vpack.c.bf16 %v518, %v517
      %v526 = vpack.c.bf16 %v520, %v519
      %v527 = vpack.c.bf16 %v522, %v521
      %v528 = vpack.c.bf16 %v524, %v523
      %v529 = vld [vmem:[%s2] sm:$0xf]
      %v530 = vld [vmem:[%s2 + $0x4] sm:$0xf]
      %v531 = vld [vmem:[%s2 + $0x8] sm:$0xf]
      %v532 = vld [vmem:[%s2 + $0xc] sm:$0xf]
      %v533 = vld [vmem:[%s2 + $0x10] sm:$0xf]
      %v534 = vld [vmem:[%s2 + $0x14] sm:$0xf]
      %v535 = vld [vmem:[%s2 + $0x18] sm:$0xf]
      %v536 = vld [vmem:[%s2 + $0x1c] sm:$0xf]
      %v537 = vld [vmem:[%s2 + $0x20] sm:$0xf]
      %v538 = vld [vmem:[%s2 + $0x24] sm:$0xf]
      %v539 = vld [vmem:[%s2 + $0x28] sm:$0xf]
      %v540 = vld [vmem:[%s2 + $0x2c] sm:$0xf]
      %v541 = vld [vmem:[%s2 + $0x30] sm:$0xf]
      %v542 = vld [vmem:[%s2 + $0x34] sm:$0xf]
      %v543 = vld [vmem:[%s2 + $0x38] sm:$0xf]
      %v544 = vld [vmem:[%s2 + $0x3c] sm:$0xf]
      %v545 = vld [vmem:[%s3] sm:$0x1]
      %v547 = vperm.slane %v545, 0
      %v565 = vunpack.c.l.b16 %v529
      %v566 = vunpack.c.l.b16 %v530
      %v567 = vunpack.c.l.b16 %v531
      %v568 = vunpack.c.l.b16 %v532
      %v569 = vunpack.c.l.b16 %v533
      %v570 = vunpack.c.l.b16 %v534
      %v571 = vunpack.c.l.b16 %v535
      %v572 = vunpack.c.l.b16 %v536
      %v573 = vunpack.c.l.b16 %v537
      %v574 = vunpack.c.l.b16 %v538
      %v575 = vunpack.c.l.b16 %v539
      %v576 = vunpack.c.l.b16 %v540
      %v577 = vunpack.c.l.b16 %v541
      %v578 = vunpack.c.l.b16 %v542
      %v579 = vunpack.c.l.b16 %v543
      %v580 = vunpack.c.l.b16 %v544
      %v581 = vpack.c.b16 %v566, %v565
      %v582 = vpack.c.b16 %v568, %v567
      %v583 = vpack.c.b16 %v570, %v569
      %v584 = vpack.c.b16 %v572, %v571
      %v585 = vpack.c.b16 %v574, %v573
      %v586 = vpack.c.b16 %v576, %v575
      %v587 = vpack.c.b16 %v578, %v577
      %v588 = vpack.c.b16 %v580, %v579
      %597 = vmatpush.bf16.msra.mxu0 %v588
      %598 = vmatpush.bf16.msra.mxu0 %v587
      %599 = vmatpush.bf16.msra.mxu0 %v586
      %600 = vmatpush.bf16.msra.mxu0 %v585
      %601 = vmatpush.bf16.msra.mxu0 %v584
      %602 = vmatpush.bf16.msra.mxu0 %v583
      %603 = vmatpush.bf16.msra.mxu0 %v582
      %604 = vmatpush.bf16.msra.mxu0 %v581
      %605 = vmatmul.bf16.gmra.mxu0 %v525
      %v606 = vpop.f32.mrf.mxu0
      %v607 = vadd.f32 %v547, %v606
      %v608 = vpop.f32.mrf.mxu0
      %v609 = vadd.f32 %v547, %v608
      %610 = vmatmul.bf16.gmra.mxu0 %v526
      %v611 = vpop.f32.mrf.mxu0
      %v612 = vadd.f32 %v547, %v611
      %v613 = vpop.f32.mrf.mxu0
      %v614 = vadd.f32 %v547, %v613
      %615 = vmatmul.bf16.gmra.mxu0 %v527
      %v616 = vpop.f32.mrf.mxu0
      %v617 = vadd.f32 %v547, %v616
      %v618 = vpop.f32.mrf.mxu0
      %v619 = vadd.f32 %v547, %v618
      %620 = vmatmul.bf16.gmra.mxu0 %v528
      %v621 = vpop.f32.mrf.mxu0
      %v622 = vadd.f32 %v547, %v621
      %v623 = vpop.f32.mrf.mxu0
      %v624 = vadd.f32 %v547, %v623
      %625 = vdwg.mxu0
      %v626 = vmax.f32 %v607, 0.0
      %v627 = vmax.f32 %v609, 0.0
      %v628 = vmax.f32 %v612, 0.0
      %v629 = vmax.f32 %v614, 0.0
      %v630 = vmax.f32 %v617, 0.0
      %v631 = vmax.f32 %v619, 0.0
      %v632 = vmax.f32 %v622, 0.0
      %v633 = vmax.f32 %v624, 0.0
      %v634 = vld [vmem:[%s239] sm:$0xf]
      %v635 = vld [vmem:[%s239 + $0x4] sm:$0xf]
      %v636 = vld [vmem:[%s239 + $0x8] sm:$0xf]
      %v637 = vld [vmem:[%s239 + $0xc] sm:$0xf]
      %v638 = vld [vmem:[%s239 + $0x10] sm:$0xf]
      %v639 = vld [vmem:[%s239 + $0x14] sm:$0xf]
      %v640 = vld [vmem:[%s239 + $0x18] sm:$0xf]
      %v641 = vld [vmem:[%s239 + $0x1c] sm:$0xf]
      %v642 = vunpack.c.l.bf16 %v634
      %v643 = vunpack.c.l.bf16 %v635
      %v644 = vunpack.c.l.bf16 %v636
      %v645 = vunpack.c.l.bf16 %v637
      %v646 = vunpack.c.l.bf16 %v638
      %v647 = vunpack.c.l.bf16 %v639
      %v648 = vunpack.c.l.bf16 %v640
      %v649 = vunpack.c.l.bf16 %v641
      %v650 = vadd.f32 %v626, %v642
      %v651 = vadd.f32 %v627, %v643
      %v652 = vadd.f32 %v628, %v644
      %v653 = vadd.f32 %v629, %v645
      %v654 = vadd.f32 %v630, %v646
      %v655 = vadd.f32 %v631, %v647
      %v656 = vadd.f32 %v632, %v648
      %v657 = vadd.f32 %v633, %v649
      %v658 = vmax.f32 %v650, 0.0
      %v659 = vmax.f32 %v651, 0.0
      %v660 = vmax.f32 %v652, 0.0
      %v661 = vmax.f32 %v653, 0.0
      %v662 = vmax.f32 %v654, 0.0
      %v663 = vmax.f32 %v655, 0.0
      %v664 = vmax.f32 %v656, 0.0
      %v665 = vmax.f32 %v657, 0.0
      %v666 = vpack.c.bf16 %v658, %v658
      %v667 = vpack.c.bf16 %v659, %v659
      %v668 = vpack.c.bf16 %v660, %v660
      %v669 = vpack.c.bf16 %v661, %v661
      %v670 = vpack.c.bf16 %v662, %v662
      %v671 = vpack.c.bf16 %v663, %v663
      %v672 = vpack.c.bf16 %v664, %v664
      %v673 = vpack.c.bf16 %v665, %v665
      %674 = vst [vmem:[%s244] sm:$0xf] %v666
      %675 = vst [vmem:[%s244 + $0x4] sm:$0xf] %v667
      %676 = vst [vmem:[%s244 + $0x8] sm:$0xf] %v668
      %677 = vst [vmem:[%s244 + $0xc] sm:$0xf] %v669
      %678 = vst [vmem:[%s244 + $0x10] sm:$0xf] %v670
      %679 = vst [vmem:[%s244 + $0x14] sm:$0xf] %v671
      %680 = vst [vmem:[%s244 + $0x18] sm:$0xf] %v672
      %681 = vst [vmem:[%s244 + $0x1c] sm:$0xf] %v673
      %p682 = scmp.lt.s32.totalorder %s16, 1
      %s683 = scalar_select %p682, %s16, 1
      %s684 = smul.addr %s683, 8
      %s685 = smul.addr %s684, 4
      %s686 = scalar_lea.vmem %s5, %s685
      // Predicated region
      $region41: #{_lambda_.10} parent=39 // pred_check
        %p687 = pneg %p149
      $region42: #{_lambda_.10} parent=39 // pred_check_branch
        %689 = sbr.rel (%p687) target = $region44
      $region43: #{_lambda_.10} parent=39 // pred_region
        _
      $region44: #{_lambda_.10} parent=39 // pred_fallthru
        _
    $region40: #{_lambda_.10} parent=5 // pred_fallthru
      _
    %p690 = scmp.le.s32.totalorder 2, %s11
    // Predicated region
    $region45: #{_lambda_.10} parent=5 // pred_check
      %p691 = pneg %p690
    $region46: #{_lambda_.10} parent=5 // pred_check_branch
      %693 = sbr.rel (%p691) target = $region48
    $region47: #{_lambda_.10} parent=5 // pred_region
      %s694 = ssub.s32 %s11, 2
      // Predicated region
      $region49: #{_lambda_.10} parent=47 // pred_check
        %p695 = pneg %p155
      $region50: #{_lambda_.10} parent=47 // pred_check_branch
        %697 = sbr.rel (%p695) target = $region52
      $region51: #{_lambda_.10} parent=47 // pred_region
        %p698 = scmp.lt.s32.totalorder %s17, 1
        %s699 = scalar_select %p698, %s17, 1
        %s700 = smul.addr %s699, 8
        %s701 = smul.addr %s700, 4
        %s702 = scalar_lea.vmem %s5, %s701
      $region52: #{_lambda_.10} parent=47 // pred_fallthru
        _
    $region48: #{_lambda_.10} parent=5 // pred_fallthru
      _
  $region6: #{_lambda_.10} parent=0 // loop_footer
    %s15 = sadd.s32 1, %s11
  $region7: #{_lambda_.10} parent=0 // loop_footer_branch
    %10 = sbr.rel target = $region3
  $region8: #{_lambda_.10} parent=0 // loop_exit
    _

// kernel: _lambda_.13
$region0: #{_lambda_.13}
  #allocation0 [shape = 'u32[]', space=smem, size = 0x4, offset = 0x4, fixed_abs, tag = 'smem constant byte address 0x4 - core index']
  #allocation1 [shape = 'u32[72,128]{1,0:T(1,128)}', space=vmem, size = 0x9000, scoped, tag = 'internal scratch']
  #allocation2 [shape = 'f32[10,10,128]{2,1,0:T(8,128)}', space=vmem, size = 0x14000, scoped, tag = 'scratch operand']
  %s0 = inlined_call_operand.vmem [shape: bf16[2,8,8,128], index: 0, kind: input, shape index: {}]
  %s1 = inlined_call_operand.vmem [shape: f32[16,128], index: 1, kind: input, shape index: {}]
  %s2 = inlined_call_operand.vmem [shape: bf16[128,128], index: 2, kind: input, shape index: {}]
  %s3 = inlined_call_operand.vmem [shape: f32[1,128], index: 3, kind: input, shape index: {}]
  %s4 = inlined_call_operand.vmem [shape: bf16[2,8,8,128], index: 4, kind: input, shape index: {}]
  %s5 = inlined_call_operand.vmem [shape: f32[2,8,8,128], index: 5, kind: output, shape index: {}]
  %s6 = sld [smem:[#allocation0]]
  $region53: #{_lambda_.13} parent=0
    _
  %s8 = ssub.s32 1, %s6
  %s9 = scalar_select 0, %s8, %s6
  loop: start=0, step=1, limit=4
  $region2: #{_lambda_.13} parent=0 // loop_pre_header
    _
  $region3: #{_lambda_.13} parent=0 // loop_header
    %s11 = sphi 0, %s15
    %p12 = scmp.ge.s32.totalorder %s11, 4
    %s21 = sphi 0, %s23
    %s24 = sphi 0, %s21
    %s25 = sphi 0, %s24
    %s41 = sphi 0, %s25
    %s45 = sphi 0, %s45
    %s47 = sphi 0, %s45
    %s48 = sphi 0, %s47
    %s62 = sphi 0, %s48
    %s66 = sphi 0, %s66
    %s68 = sphi 0, %s66
    %s69 = sphi 0, %s68
    %s83 = sphi 0, %s69
    %s87 = sphi 0, %s87
    %s89 = sphi 0, %s87
    %s90 = sphi 0, %s89
    %s104 = sphi 0, %s90
    %s110 = sphi 0, %s112
    %s113 = sphi 0, %s110
    %s114 = sphi 0, %s113
    %s130 = sphi 0, %s114
    %s136 = sphi 0, %s138
    %s139 = sphi 0, %s136
    %s140 = sphi 0, %s139
    %s156 = sphi 0, %s140
  $region4: #{_lambda_.13} parent=0 // loop_header_branch
    %14 = sbr.rel (%p12) target = $region8
  $region5: #{_lambda_.13} parent=0 // loop_body
    %s16 = ssub.s32 %s11, 1
    %s17 = ssub.s32 %s11, 2
    %s18 = sadd.s32 %s11, 1
    %s19 = ssub.s32 %s11, %s18
    %p20 = scmp.eq.s32.totalorder %s19, 0
    %s22 = sadd.s32 %s21, 1
    %s23 = scalar_select %p20, %s21, %s22
    %p26 = pneg %p20
    %p27 = scmp.eq.s32.totalorder %s11, 1
    %p28 = por %p26, %p27
    %p29 = scmp.ne.s32.totalorder %s21, %s24
    %p30 = scmp.eq.s32.totalorder %s11, 0
    %p31 = por %p29, %p30
    %p32 = scmp.ne.s32.totalorder %s21, %s24
    %p33 = scmp.eq.s32.totalorder %s16, 1
    %p34 = por %p32, %p33
    %p35 = scmp.ne.s32.totalorder %s24, %s25
    %p36 = scmp.eq.s32.totalorder %s16, 0
    %p37 = por %p35, %p36
    %p38 = scmp.ne.s32.totalorder %s24, %s25
    %p39 = scmp.eq.s32.totalorder %s17, 1
    %p40 = por %p38, %p39
    %p42 = scmp.ne.s32.totalorder %s25, %s41
    %p43 = scmp.eq.s32.totalorder %s17, 0
    %p44 = por %p42, %p43
    %s46 = sadd.s32 %s45, 1
    %p49 = scmp.eq.s32.totalorder %s11, 1
    %p50 = scmp.ne.s32.totalorder %s45, %s47
    %p51 = scmp.eq.s32.totalorder %s11, 0
    %p52 = por %p50, %p51
    %p53 = scmp.ne.s32.totalorder %s45, %s47
    %p54 = scmp.eq.s32.totalorder %s16, 1
    %p55 = por %p53, %p54
    %p56 = scmp.ne.s32.totalorder %s47, %s48
    %p57 = scmp.eq.s32.totalorder %s16, 0
    %p58 = por %p56, %p57
    %p59 = scmp.ne.s32.totalorder %s47, %s48
    %p60 = scmp.eq.s32.totalorder %s17, 1
    %p61 = por %p59, %p60
    %p63 = scmp.ne.s32.totalorder %s48, %s62
    %p64 = scmp.eq.s32.totalorder %s17, 0
    %p65 = por %p63, %p64
    %s67 = sadd.s32 %s66, 1
    %p70 = scmp.eq.s32.totalorder %s11, 1
    %p71 = scmp.ne.s32.totalorder %s66, %s68
    %p72 = scmp.eq.s32.totalorder %s11, 0
    %p73 = por %p71, %p72
    %p74 = scmp.ne.s32.totalorder %s66, %s68
    %p75 = scmp.eq.s32.totalorder %s16, 1
    %p76 = por %p74, %p75
    %p77 = scmp.ne.s32.totalorder %s68, %s69
    %p78 = scmp.eq.s32.totalorder %s16, 0
    %p79 = por %p77, %p78
    %p80 = scmp.ne.s32.totalorder %s68, %s69
    %p81 = scmp.eq.s32.totalorder %s17, 1
    %p82 = por %p80, %p81
    %p84 = scmp.ne.s32.totalorder %s69, %s83
    %p85 = scmp.eq.s32.totalorder %s17, 0
    %p86 = por %p84, %p85
    %s88 = sadd.s32 %s87, 1
    %p91 = scmp.eq.s32.totalorder %s11, 1
    %p92 = scmp.ne.s32.totalorder %s87, %s89
    %p93 = scmp.eq.s32.totalorder %s11, 0
    %p94 = por %p92, %p93
    %p95 = scmp.ne.s32.totalorder %s87, %s89
    %p96 = scmp.eq.s32.totalorder %s16, 1
    %p97 = por %p95, %p96
    %p98 = scmp.ne.s32.totalorder %s89, %s90
    %p99 = scmp.eq.s32.totalorder %s16, 0
    %p100 = por %p98, %p99
    %p101 = scmp.ne.s32.totalorder %s89, %s90
    %p102 = scmp.eq.s32.totalorder %s17, 1
    %p103 = por %p101, %p102
    %p105 = scmp.ne.s32.totalorder %s90, %s104
    %p106 = scmp.eq.s32.totalorder %s17, 0
    %p107 = por %p105, %p106
    %s108 = ssub.s32 %s11, %s18
    %p109 = scmp.eq.s32.totalorder %s108, 0
    %s111 = sadd.s32 %s110, 1
    %s112 = scalar_select %p109, %s110, %s111
    %p115 = pneg %p109
    %p116 = scmp.eq.s32.totalorder %s11, 1
    %p117 = por %p115, %p116
    %p118 = scmp.ne.s32.totalorder %s110, %s113
    %p119 = scmp.eq.s32.totalorder %s11, 0
    %p120 = por %p118, %p119
    %p121 = scmp.ne.s32.totalorder %s110, %s113
    %p122 = scmp.eq.s32.totalorder %s16, 1
    %p123 = por %p121, %p122
    %p124 = scmp.ne.s32.totalorder %s113, %s114
    %p125 = scmp.eq.s32.totalorder %s16, 0
    %p126 = por %p124, %p125
    %p127 = scmp.ne.s32.totalorder %s113, %s114
    %p128 = scmp.eq.s32.totalorder %s17, 1
    %p129 = por %p127, %p128
    %p131 = scmp.ne.s32.totalorder %s114, %s130
    %p132 = scmp.eq.s32.totalorder %s17, 0
    %p133 = por %p131, %p132
    %s134 = ssub.s32 %s11, %s18
    %p135 = scmp.eq.s32.totalorder %s134, 0
    %s137 = sadd.s32 %s136, 1
    %s138 = scalar_select %p135, %s136, %s137
    %p141 = pneg %p135
    %p142 = scmp.eq.s32.totalorder %s11, 1
    %p143 = por %p141, %p142
    %p144 = scmp.ne.s32.totalorder %s136, %s139
    %p145 = scmp.eq.s32.totalorder %s11, 0
    %p146 = por %p144, %p145
    %p147 = scmp.ne.s32.totalorder %s136, %s139
    %p148 = scmp.eq.s32.totalorder %s16, 1
    %p149 = por %p147, %p148
    %p150 = scmp.ne.s32.totalorder %s139, %s140
    %p151 = scmp.eq.s32.totalorder %s16, 0
    %p152 = por %p150, %p151
    %p153 = scmp.ne.s32.totalorder %s139, %s140
    %p154 = scmp.eq.s32.totalorder %s17, 1
    %p155 = por %p153, %p154
    %p157 = scmp.ne.s32.totalorder %s140, %s156
    %p158 = scmp.eq.s32.totalorder %s17, 0
    %p159 = por %p157, %p158
    %p160 = scmp.le.s32.totalorder 1, %s11
    %p161 = scmp.lt.s32.totalorder %s11, 3
    %p162 = pnand %p160, %p161
    %p163 = pneg %p162
    // Predicated region
    $region9: #{_lambda_.13} parent=5 // pred_check
      _
    $region10: #{_lambda_.13} parent=5 // pred_check_branch
      %165 = sbr.rel (%p162) target = $region12
    $region11: #{_lambda_.13} parent=5 // pred_region
      %s166 = ssub.s32 %s11, 1
      // Predicated region
      $region13: #{_lambda_.13} parent=11 // pred_check
        %p167 = pneg %p58
      $region14: #{_lambda_.13} parent=11 // pred_check_branch
        %169 = sbr.rel (%p167) target = $region16
      $region15: #{_lambda_.13} parent=11 // pred_region
        _
      $region16: #{_lambda_.13} parent=11 // pred_fallthru
        _
      // Predicated region
      $region17: #{_lambda_.13} parent=11 // pred_check
        %p170 = pneg %p79
      $region18: #{_lambda_.13} parent=11 // pred_check_branch
        %172 = sbr.rel (%p170) target = $region20
      $region19: #{_lambda_.13} parent=11 // pred_region
        _
      $region20: #{_lambda_.13} parent=11 // pred_fallthru
        _
      // Predicated region
      $region21: #{_lambda_.13} parent=11 // pred_check
        %p173 = pneg %p100
      $region22: #{_lambda_.13} parent=11 // pred_check_branch
        %175 = sbr.rel (%p173) target = $region24
      $region23: #{_lambda_.13} parent=11 // pred_region
        _
      $region24: #{_lambda_.13} parent=11 // pred_fallthru
        _
    $region12: #{_lambda_.13} parent=5 // pred_fallthru
      _
    %p176 = scmp.lt.s32.totalorder %s11, 2
    // Predicated region
    $region25: #{_lambda_.13} parent=5 // pred_check
      %p177 = pneg %p176
    $region26: #{_lambda_.13} parent=5 // pred_check_branch
      %179 = sbr.rel (%p177) target = $region28
    $region27: #{_lambda_.13} parent=5 // pred_region
      // Predicated region
      $region29: #{_lambda_.13} parent=27 // pred_check
        %p180 = pneg %p31
      $region30: #{_lambda_.13} parent=27 // pred_check_branch
        %182 = sbr.rel (%p180) target = $region32
      $region31: #{_lambda_.13} parent=27 // pred_region
        %p183 = scmp.lt.s32.totalorder %s11, 1
        %s184 = scalar_select %p183, %s11, 1
        %s185 = smul.addr %s184, 8
        %s186 = smul.addr %s185, 4
        %s187 = scalar_lea.vmem %s0, %s186
      $region32: #{_lambda_.13} parent=27 // pred_fallthru
        _
      // Predicated region
      $region33: #{_lambda_.13} parent=27 // pred_check
        %p188 = pneg %p120
      $region34: #{_lambda_.13} parent=27 // pred_check_branch
        %190 = sbr.rel (%p188) target = $region36
      $region35: #{_lambda_.13} parent=27 // pred_region
        %p191 = scmp.lt.s32.totalorder %s11, 1
        %s192 = scalar_select %p191, %s11, 1
        %s193 = smul.addr %s192, 8
        %s194 = smul.addr %s193, 4
        %s195 = scalar_lea.vmem %s4, %s194
      $region36: #{_lambda_.13} parent=27 // pred_fallthru
        _
    $region28: #{_lambda_.13} parent=5 // pred_fallthru
      _
    %p196 = scmp.le.s32.totalorder 1, %s11
    %p197 = scmp.lt.s32.totalorder %s11, 3
    %p198 = pnand %p196, %p197
    %p199 = pneg %p198
    // Predicated region
    $region37: #{_lambda_.13} parent=5 // pred_check
      _
    $region38: #{_lambda_.13} parent=5 // pred_check_branch
      %201 = sbr.rel (%p198) target = $region40
    $region39: #{_lambda_.13} parent=5 // pred_region
      %s202 = ssub.s32 %s11, 1
      %p203 = scmp.lt.s32.totalorder %s16, 1
      %s204 = scalar_select %p203, %s16, 1
      %s205 = smul.addr %s204, 8
      %s206 = smul.addr %s205, 4
      %s207 = scalar_lea.vmem %s0, %s206
      %p208 = pneg %p37
      %p209 = pneg %p34
      %p210 = pneg %p58
      %p211 = pneg %p55
      %p212 = pneg %p79
      %p213 = pneg %p76
      %p214 = pneg %p100
      %p215 = pneg %p97
      %p216 = scmp.lt.s32.totalorder %s16, 1
      %s217 = scalar_select %p216, %s16, 1
      %s218 = smul.addr %s217, 8
      %s219 = smul.addr %s218, 4
      %s220 = scalar_lea.vmem %s4, %s219
      %p221 = pneg %p126
      %p222 = pneg %p123
      %p223 = pneg %p152
      %p224 = pneg %p149
      %p225 = scmp.lt.s32.totalorder %s16, 1
      %s226 = scalar_select %p225, %s16, 1
      %s227 = smul.addr %s226, 8
      %s228 = smul.addr %s227, 8
      %s229 = scalar_lea.vmem %s5, %s228
      %p230 = scmp.lt.s32.totalorder %s16, 1
      %s231 = scalar_select %p230, %s16, 1
      %s232 = smul.addr %s231, 8
      %s233 = smul.addr %s232, 4
      %s234 = scalar_lea.vmem %s0, %s233
      %p235 = scmp.lt.s32.totalorder %s16, 1
      %s236 = scalar_select %p235, %s16, 1
      %s237 = smul.addr %s236, 8
      %s238 = smul.addr %s237, 4
      %s239 = scalar_lea.vmem %s4, %s238
      %p240 = scmp.lt.s32.totalorder %s16, 1
      %s241 = scalar_select %p240, %s16, 1
      %s242 = smul.addr %s241, 8
      %s243 = smul.addr %s242, 8
      %s244 = scalar_lea.vmem %s5, %s243
      %245 = vst [vmem:[#allocation2] sm:$0xff] 0.0
      %246 = vst [vmem:[#allocation2 + $0x8] sm:$0x3] 0.0
      %247 = vst [vmem:[#allocation2 + $0x10] sm:$0xff] 0.0
      %248 = vst [vmem:[#allocation2 + $0x18] sm:$0x3] 0.0
      %249 = vst [vmem:[#allocation2 + $0x20] sm:$0xff] 0.0
      %250 = vst [vmem:[#allocation2 + $0x28] sm:$0x3] 0.0
      %251 = vst [vmem:[#allocation2 + $0x30] sm:$0xff] 0.0
      %252 = vst [vmem:[#allocation2 + $0x38] sm:$0x3] 0.0
      %253 = vst [vmem:[#allocation2 + $0x40] sm:$0xff] 0.0
      %254 = vst [vmem:[#allocation2 + $0x48] sm:$0x3] 0.0
      %255 = vst [vmem:[#allocation2 + $0x50] sm:$0xff] 0.0
      %256 = vst [vmem:[#allocation2 + $0x58] sm:$0x3] 0.0
      %257 = vst [vmem:[#allocation2 + $0x60] sm:$0xff] 0.0
      %258 = vst [vmem:[#allocation2 + $0x68] sm:$0x3] 0.0
      %259 = vst [vmem:[#allocation2 + $0x70] sm:$0xff] 0.0
      %260 = vst [vmem:[#allocation2 + $0x78] sm:$0x3] 0.0
      %261 = vst [vmem:[#allocation2 + $0x80] sm:$0xff] 0.0
      %262 = vst [vmem:[#allocation2 + $0x88] sm:$0x3] 0.0
      %263 = vst [vmem:[#allocation2 + $0x90] sm:$0xff] 0.0
      %264 = vst [vmem:[#allocation2 + $0x98] sm:$0x3] 0.0
      %v265 = vld [vmem:[%s234] sm:$0xf]
      %v266 = vld [vmem:[%s234 + $0x4] sm:$0xf]
      %v267 = vld [vmem:[%s234 + $0x8] sm:$0xf]
      %v268 = vld [vmem:[%s234 + $0xc] sm:$0xf]
      %v269 = vld [vmem:[%s234 + $0x10] sm:$0xf]
      %v270 = vld [vmem:[%s234 + $0x14] sm:$0xf]
      %v271 = vld [vmem:[%s234 + $0x18] sm:$0xf]
      %v272 = vld [vmem:[%s234 + $0x1c] sm:$0xf]
      %v273 = vunpack.c.l.bf16 %v265
      %v274 = vunpack.c.l.bf16 %v266
      %v275 = vunpack.c.l.bf16 %v267
      %v276 = vunpack.c.l.bf16 %v268
      %v277 = vunpack.c.l.bf16 %v269
      %v278 = vunpack.c.l.bf16 %v270
      %v279 = vunpack.c.l.bf16 %v271
      %v280 = vunpack.c.l.bf16 %v272
      %s281 = scalar_lea.vmem [#allocation2], 16
      %282 = vst [vmem:[%s281 + $0x1] sm:$0xff] %v273
      %283 = vst [vmem:[%s281 + $0x11] sm:$0xff] %v274
      %284 = vst [vmem:[%s281 + $0x21] sm:$0xff] %v275
      %285 = vst [vmem:[%s281 + $0x31] sm:$0xff] %v276
      %286 = vst [vmem:[%s281 + $0x41] sm:$0xff] %v277
      %287 = vst [vmem:[%s281 + $0x51] sm:$0xff] %v278
      %288 = vst [vmem:[%s281 + $0x61] sm:$0xff] %v279
      %289 = vst [vmem:[%s281 + $0x71] sm:$0xff] %v280
      %v290 = vld [vmem:[#allocation2] sm:$0xff]
      %v291 = vld [vmem:[#allocation2 + $0x10] sm:$0xff]
      %v292 = vld [vmem:[#allocation2 + $0x20] sm:$0xff]
      %v293 = vld [vmem:[#allocation2 + $0x30] sm:$0xff]
      %v294 = vld [vmem:[#allocation2 + $0x40] sm:$0xff]
      %v295 = vld [vmem:[#allocation2 + $0x50] sm:$0xff]
      %v296 = vld [vmem:[#allocation2 + $0x60] sm:$0xff]
      %v297 = vld [vmem:[#allocation2 + $0x70] sm:$0xff]
      %v298 = vld [vmem:[%s1] sm:$0x1]
      %v299 = vperm.slane %v298, 0
      %v300 = vmul.f32 %v290, %v299
      %v301 = vmul.f32 %v291, %v299
      %v302 = vmul.f32 %v292, %v299
      %v303 = vmul.f32 %v293, %v299
      %v304 = vmul.f32 %v294, %v299
      %v305 = vmul.f32 %v295, %v299
      %v306 = vmul.f32 %v296, %v299
      %v307 = vmul.f32 %v297, %v299
      %v308 = vadd.f32 %v300, 0.0
      %v309 = vadd.f32 %v301, 0.0
      %v310 = vadd.f32 %v302, 0.0
      %v311 = vadd.f32 %v303, 0.0
      %v312 = vadd.f32 %v304, 0.0
      %v313 = vadd.f32 %v305, 0.0
      %v314 = vadd.f32 %v306, 0.0
      %v315 = vadd.f32 %v307, 0.0
      %v316 = vld [vmem:[#allocation2 + $0x1] sm:$0xff]
      %v317 = vld [vmem:[#allocation2 + $0x11] sm:$0xff]
      %v318 = vld [vmem:[#allocation2 + $0x21] sm:$0xff]
      %v319 = vld [vmem:[#allocation2 + $0x31] sm:$0xff]
      %v320 = vld [vmem:[#allocation2 + $0x41] sm:$0xff]
      %v321 = vld [vmem:[#allocation2 + $0x51] sm:$0xff]
      %v322 = vld [vmem:[#allocation2 + $0x61] sm:$0xff]
      %v323 = vld [vmem:[#allocation2 + $0x71] sm:$0xff]
      %v324 = vld [vmem:[%s1 + $0x1] sm:$0x1]
      %v325 = vperm.slane %v324, 0
      %v326 = vmul.f32 %v316, %v325
      %v327 = vmul.f32 %v317, %v325
      %v328 = vmul.f32 %v318, %v325
      %v329 = vmul.f32 %v319, %v325
      %v330 = vmul.f32 %v320, %v325
      %v331 = vmul.f32 %v321, %v325
      %v332 = vmul.f32 %v322, %v325
      %v333 = vmul.f32 %v323, %v325
      %v334 = vadd.f32 %v308, %v326
      %v335 = vadd.f32 %v309, %v327
      %v336 = vadd.f32 %v310, %v328
      %v337 = vadd.f32 %v311, %v329
      %v338 = vadd.f32 %v312, %v330
      %v339 = vadd.f32 %v313, %v331
      %v340 = vadd.f32 %v314, %v332
      %v341 = vadd.f32 %v315, %v333
      %v342 = vld [vmem:[#allocation2 + $0x2] sm:$0xff]
      %v343 = vld [vmem:[#allocation2 + $0x12] sm:$0xff]
      %v344 = vld [vmem:[#allocation2 + $0x22] sm:$0xff]
      %v345 = vld [vmem:[#allocation2 + $0x32] sm:$0xff]
      %v346 = vld [vmem:[#allocation2 + $0x42] sm:$0xff]
      %v347 = vld [vmem:[#allocation2 + $0x52] sm:$0xff]
      %v348 = vld [vmem:[#allocation2 + $0x62] sm:$0xff]
      %v349 = vld [vmem:[#allocation2 + $0x72] sm:$0xff]
      %v350 = vld [vmem:[%s1 + $0x2] sm:$0x1]
      %v351 = vperm.slane %v350, 0
      %v352 = vmul.f32 %v342, %v351
      %v353 = vmul.f32 %v343, %v351
      %v354 = vmul.f32 %v344, %v351
      %v355 = vmul.f32 %v345, %v351
      %v356 = vmul.f32 %v346, %v351
      %v357 = vmul.f32 %v347, %v351
      %v358 = vmul.f32 %v348, %v351
      %v359 = vmul.f32 %v349, %v351
      %v360 = vadd.f32 %v334, %v352
      %v361 = vadd.f32 %v335, %v353
      %v362 = vadd.f32 %v336, %v354
      %v363 = vadd.f32 %v337, %v355
      %v364 = vadd.f32 %v338, %v356
      %v365 = vadd.f32 %v339, %v357
      %v366 = vadd.f32 %v340, %v358
      %v367 = vadd.f32 %v341, %v359
      %v368 = vld [vmem:[%s281] sm:$0xff]
      %v369 = vld [vmem:[%s281 + $0x10] sm:$0xff]
      %v370 = vld [vmem:[%s281 + $0x20] sm:$0xff]
      %v371 = vld [vmem:[%s281 + $0x30] sm:$0xff]
      %v372 = vld [vmem:[%s281 + $0x40] sm:$0xff]
      %v373 = vld [vmem:[%s281 + $0x50] sm:$0xff]
      %v374 = vld [vmem:[%s281 + $0x60] sm:$0xff]
      %v375 = vld [vmem:[%s281 + $0x70] sm:$0xff]
      %v376 = vld [vmem:[%s1 + $0x3] sm:$0x1]
      %v377 = vperm.slane %v376, 0
      %v378 = vmul.f32 %v368, %v377
      %v379 = vmul.f32 %v369, %v377
      %v380 = vmul.f32 %v370, %v377
      %v381 = vmul.f32 %v371, %v377
      %v382 = vmul.f32 %v372, %v377
      %v383 = vmul.f32 %v373, %v377
      %v384 = vmul.f32 %v374, %v377
      %v385 = vmul.f32 %v375, %v377
      %v386 = vadd.f32 %v360, %v378
      %v387 = vadd.f32 %v361, %v379
      %v388 = vadd.f32 %v362, %v380
      %v389 = vadd.f32 %v363, %v381
      %v390 = vadd.f32 %v364, %v382
      %v391 = vadd.f32 %v365, %v383
      %v392 = vadd.f32 %v366, %v384
      %v393 = vadd.f32 %v367, %v385
      %v394 = vld [vmem:[%s281 + $0x1] sm:$0xff]
      %v395 = vld [vmem:[%s281 + $0x11] sm:$0xff]
      %v396 = vld [vmem:[%s281 + $0x21] sm:$0xff]
      %v397 = vld [vmem:[%s281 + $0x31] sm:$0xff]
      %v398 = vld [vmem:[%s281 + $0x41] sm:$0xff]
      %v399 = vld [vmem:[%s281 + $0x51] sm:$0xff]
      %v400 = vld [vmem:[%s281 + $0x61] sm:$0xff]
      %v401 = vld [vmem:[%s281 + $0x71] sm:$0xff]
      %v402 = vld [vmem:[%s1 + $0x4] sm:$0x1]
      %v403 = vperm.slane %v402, 0
      %v404 = vmul.f32 %v394, %v403
      %v405 = vmul.f32 %v395, %v403
      %v406 = vmul.f32 %v396, %v403
      %v407 = vmul.f32 %v397, %v403
      %v408 = vmul.f32 %v398, %v403
      %v409 = vmul.f32 %v399, %v403
      %v410 = vmul.f32 %v400, %v403
      %v411 = vmul.f32 %v401, %v403
      %v412 = vadd.f32 %v386, %v404
      %v413 = vadd.f32 %v387, %v405
      %v414 = vadd.f32 %v388, %v406
      %v415 = vadd.f32 %v389, %v407
      %v416 = vadd.f32 %v390, %v408
      %v417 = vadd.f32 %v391, %v409
      %v418 = vadd.f32 %v392, %v410
      %v419 = vadd.f32 %v393, %v411
      %v420 = vld [vmem:[%s281 + $0x2] sm:$0xff]
      %v421 = vld [vmem:[%s281 + $0x12] sm:$0xff]
      %v422 = vld [vmem:[%s281 + $0x22] sm:$0xff]
      %v423 = vld [vmem:[%s281 + $0x32] sm:$0xff]
      %v424 = vld [vmem:[%s281 + $0x42] sm:$0xff]
      %v425 = vld [vmem:[%s281 + $0x52] sm:$0xff]
      %v426 = vld [vmem:[%s281 + $0x62] sm:$0xff]
      %v427 = vld [vmem:[%s281 + $0x72] sm:$0xff]
      %v428 = vld [vmem:[%s1 + $0x5] sm:$0x1]
      %v429 = vperm.slane %v428, 0
      %v430 = vmul.f32 %v420, %v429
      %v431 = vmul.f32 %v421, %v429
      %v432 = vmul.f32 %v422, %v429
      %v433 = vmul.f32 %v423, %v429
      %v434 = vmul.f32 %v424, %v429
      %v435 = vmul.f32 %v425, %v429
      %v436 = vmul.f32 %v426, %v429
      %v437 = vmul.f32 %v427, %v429
      %v438 = vadd.f32 %v412, %v430
      %v439 = vadd.f32 %v413, %v431
      %v440 = vadd.f32 %v414, %v432
      %v441 = vadd.f32 %v415, %v433
      %v442 = vadd.f32 %v416, %v434
      %v443 = vadd.f32 %v417, %v435
      %v444 = vadd.f32 %v418, %v436
      %v445 = vadd.f32 %v419, %v437
      %s446 = scalar_lea.vmem [#allocation2], 32
      %v447 = vld [vmem:[%s446] sm:$0xff]
      %v448 = vld [vmem:[%s446 + $0x10] sm:$0xff]
      %v449 = vld [vmem:[%s446 + $0x20] sm:$0xff]
      %v450 = vld [vmem:[%s446 + $0x30] sm:$0xff]
      %v451 = vld [vmem:[%s446 + $0x40] sm:$0xff]
      %v452 = vld [vmem:[%s446 + $0x50] sm:$0xff]
      %v453 = vld [vmem:[%s446 + $0x60] sm:$0xff]
      %v454 = vld [vmem:[%s446 + $0x70] sm:$0xff]
      %v455 = vld [vmem:[%s1 + $0x6] sm:$0x1]
      %v456 = vperm.slane %v455, 0
      %v457 = vmul.f32 %v447, %v456
      %v458 = vmul.f32 %v448, %v456
      %v459 = vmul.f32 %v449, %v456
      %v460 = vmul.f32 %v450, %v456
      %v461 = vmul.f32 %v451, %v456
      %v462 = vmul.f32 %v452, %v456
      %v463 = vmul.f32 %v453, %v456
      %v464 = vmul.f32 %v454, %v456
      %v465 = vadd.f32 %v438, %v457
      %v466 = vadd.f32 %v439, %v458
      %v467 = vadd.f32 %v440, %v459
      %v468 = vadd.f32 %v441, %v460
      %v469 = vadd.f32 %v442, %v461
      %v470 = vadd.f32 %v443, %v462
      %v471 = vadd.f32 %v444, %v463
      %v472 = vadd.f32 %v445, %v464
      %v473 = vld [vmem:[%s446 + $0x1] sm:$0xff]
      %v474 = vld [vmem:[%s446 + $0x11] sm:$0xff]
      %v475 = vld [vmem:[%s446 + $0x21] sm:$0xff]
      %v476 = vld [vmem:[%s446 + $0x31] sm:$0xff]
      %v477 = vld [vmem:[%s446 + $0x41] sm:$0xff]
      %v478 = vld [vmem:[%s446 + $0x51] sm:$0xff]
      %v479 = vld [vmem:[%s446 + $0x61] sm:$0xff]
      %v480 = vld [vmem:[%s446 + $0x71] sm:$0xff]
      %v481 = vld [vmem:[%s1 + $0x7] sm:$0x1]
      %v482 = vperm.slane %v481, 0
      %v483 = vmul.f32 %v473, %v482
      %v484 = vmul.f32 %v474, %v482
      %v485 = vmul.f32 %v475, %v482
      %v486 = vmul.f32 %v476, %v482
      %v487 = vmul.f32 %v477, %v482
      %v488 = vmul.f32 %v478, %v482
      %v489 = vmul.f32 %v479, %v482
      %v490 = vmul.f32 %v480, %v482
      %v491 = vadd.f32 %v465, %v483
      %v492 = vadd.f32 %v466, %v484
      %v493 = vadd.f32 %v467, %v485
      %v494 = vadd.f32 %v468, %v486
      %v495 = vadd.f32 %v469, %v487
      %v496 = vadd.f32 %v470, %v488
      %v497 = vadd.f32 %v471, %v489
      %v498 = vadd.f32 %v472, %v490
      %v499 = vld [vmem:[%s446 + $0x2] sm:$0xff]
      %v500 = vld [vmem:[%s446 + $0x12] sm:$0xff]
      %v501 = vld [vmem:[%s446 + $0x22] sm:$0xff]
      %v502 = vld [vmem:[%s446 + $0x32] sm:$0xff]
      %v503 = vld [vmem:[%s446 + $0x42] sm:$0xff]
      %v504 = vld [vmem:[%s446 + $0x52] sm:$0xff]
      %v505 = vld [vmem:[%s446 + $0x62] sm:$0xff]
      %v506 = vld [vmem:[%s446 + $0x72] sm:$0xff]
      %v507 = vld [vmem:[%s1 + $0x8] sm:$0x1]
      %v508 = vperm.slane %v507, 0
      %v509 = vmul.f32 %v499, %v508
      %v510 = vmul.f32 %v500, %v508
      %v511 = vmul.f32 %v501, %v508
      %v512 = vmul.f32 %v502, %v508
      %v513 = vmul.f32 %v503, %v508
      %v514 = vmul.f32 %v504, %v508
      %v515 = vmul.f32 %v505, %v508
      %v516 = vmul.f32 %v506, %v508
      %v517 = vadd.f32 %v491, %v509
      %v518 = vadd.f32 %v492, %v510
      %v519 = vadd.f32 %v493, %v511
      %v520 = vadd.f32 %v494, %v512
      %v521 = vadd.f32 %v495, %v513
      %v522 = vadd.f32 %v496, %v514
      %v523 = vadd.f32 %v497, %v515
      %v524 = vadd.f32 %v498, %v516
      %v525 = vpack.c.bf16 %v518, %v517
      %v526 = vpack.c.bf16 %v520, %v519
      %v527 = vpack.c.bf16 %v522, %v521
      %v528 = vpack.c.bf16 %v524, %v523
      %v529 = vld [vmem:[%s2] sm:$0xf]
      %v530 = vld [vmem:[%s2 + $0x4] sm:$0xf]
      %v531 = vld [vmem:[%s2 + $0x8] sm:$0xf]
      %v532 = vld [vmem:[%s2 + $0xc] sm:$0xf]
      %v533 = vld [vmem:[%s2 + $0x10] sm:$0xf]
      %v534 = vld [vmem:[%s2 + $0x14] sm:$0xf]
      %v535 = vld [vmem:[%s2 + $0x18] sm:$0xf]
      %v536 = vld [vmem:[%s2 + $0x1c] sm:$0xf]
      %v537 = vld [vmem:[%s2 + $0x20] sm:$0xf]
      %v538 = vld [vmem:[%s2 + $0x24] sm:$0xf]
      %v539 = vld [vmem:[%s2 + $0x28] sm:$0xf]
      %v540 = vld [vmem:[%s2 + $0x2c] sm:$0xf]
      %v541 = vld [vmem:[%s2 + $0x30] sm:$0xf]
      %v542 = vld [vmem:[%s2 + $0x34] sm:$0xf]
      %v543 = vld [vmem:[%s2 + $0x38] sm:$0xf]
      %v544 = vld [vmem:[%s2 + $0x3c] sm:$0xf]
      %v545 = vld [vmem:[%s3] sm:$0x1]
      %v547 = vperm.slane %v545, 0
      %v565 = vunpack.c.l.b16 %v529
      %v566 = vunpack.c.l.b16 %v530
      %v567 = vunpack.c.l.b16 %v531
      %v568 = vunpack.c.l.b16 %v532
      %v569 = vunpack.c.l.b16 %v533
      %v570 = vunpack.c.l.b16 %v534
      %v571 = vunpack.c.l.b16 %v535
      %v572 = vunpack.c.l.b16 %v536
      %v573 = vunpack.c.l.b16 %v537
      %v574 = vunpack.c.l.b16 %v538
      %v575 = vunpack.c.l.b16 %v539
      %v576 = vunpack.c.l.b16 %v540
      %v577 = vunpack.c.l.b16 %v541
      %v578 = vunpack.c.l.b16 %v542
      %v579 = vunpack.c.l.b16 %v543
      %v580 = vunpack.c.l.b16 %v544
      %v581 = vpack.c.b16 %v566, %v565
      %v582 = vpack.c.b16 %v568, %v567
      %v583 = vpack.c.b16 %v570, %v569
      %v584 = vpack.c.b16 %v572, %v571
      %v585 = vpack.c.b16 %v574, %v573
      %v586 = vpack.c.b16 %v576, %v575
      %v587 = vpack.c.b16 %v578, %v577
      %v588 = vpack.c.b16 %v580, %v579
      %597 = vmatpush.bf16.msra.mxu0 %v588
      %598 = vmatpush.bf16.msra.mxu0 %v587
      %599 = vmatpush.bf16.msra.mxu0 %v586
      %600 = vmatpush.bf16.msra.mxu0 %v585
      %601 = vmatpush.bf16.msra.mxu0 %v584
      %602 = vmatpush.bf16.msra.mxu0 %v583
      %603 = vmatpush.bf16.msra.mxu0 %v582
      %604 = vmatpush.bf16.msra.mxu0 %v581
      %605 = vmatmul.bf16.gmra.mxu0 %v525
      %v606 = vpop.f32.mrf.mxu0
      %v607 = vadd.f32 %v547, %v606
      %v608 = vpop.f32.mrf.mxu0
      %v609 = vadd.f32 %v547, %v608
      %610 = vmatmul.bf16.gmra.mxu0 %v526
      %v611 = vpop.f32.mrf.mxu0
      %v612 = vadd.f32 %v547, %v611
      %v613 = vpop.f32.mrf.mxu0
      %v614 = vadd.f32 %v547, %v613
      %615 = vmatmul.bf16.gmra.mxu0 %v527
      %v616 = vpop.f32.mrf.mxu0
      %v617 = vadd.f32 %v547, %v616
      %v618 = vpop.f32.mrf.mxu0
      %v619 = vadd.f32 %v547, %v618
      %620 = vmatmul.bf16.gmra.mxu0 %v528
      %v621 = vpop.f32.mrf.mxu0
      %v622 = vadd.f32 %v547, %v621
      %v623 = vpop.f32.mrf.mxu0
      %v624 = vadd.f32 %v547, %v623
      %625 = vdwg.mxu0
      %v626 = vmax.f32 %v607, 0.0
      %v627 = vmax.f32 %v609, 0.0
      %v628 = vmax.f32 %v612, 0.0
      %v629 = vmax.f32 %v614, 0.0
      %v630 = vmax.f32 %v617, 0.0
      %v631 = vmax.f32 %v619, 0.0
      %v632 = vmax.f32 %v622, 0.0
      %v633 = vmax.f32 %v624, 0.0
      %v634 = vld [vmem:[%s239] sm:$0xf]
      %v635 = vld [vmem:[%s239 + $0x4] sm:$0xf]
      %v636 = vld [vmem:[%s239 + $0x8] sm:$0xf]
      %v637 = vld [vmem:[%s239 + $0xc] sm:$0xf]
      %v638 = vld [vmem:[%s239 + $0x10] sm:$0xf]
      %v639 = vld [vmem:[%s239 + $0x14] sm:$0xf]
      %v640 = vld [vmem:[%s239 + $0x18] sm:$0xf]
      %v641 = vld [vmem:[%s239 + $0x1c] sm:$0xf]
      %v642 = vunpack.c.l.bf16 %v634
      %v643 = vunpack.c.l.bf16 %v635
      %v644 = vunpack.c.l.bf16 %v636
      %v645 = vunpack.c.l.bf16 %v637
      %v646 = vunpack.c.l.bf16 %v638
      %v647 = vunpack.c.l.bf16 %v639
      %v648 = vunpack.c.l.bf16 %v640
      %v649 = vunpack.c.l.bf16 %v641
      %v650 = vadd.f32 %v626, %v642
      %v651 = vadd.f32 %v627, %v643
      %v652 = vadd.f32 %v628, %v644
      %v653 = vadd.f32 %v629, %v645
      %v654 = vadd.f32 %v630, %v646
      %v655 = vadd.f32 %v631, %v647
      %v656 = vadd.f32 %v632, %v648
      %v657 = vadd.f32 %v633, %v649
      %v658 = vmax.f32 %v650, 0.0
      %v659 = vmax.f32 %v651, 0.0
      %v660 = vmax.f32 %v652, 0.0
      %v661 = vmax.f32 %v653, 0.0
      %v662 = vmax.f32 %v654, 0.0
      %v663 = vmax.f32 %v655, 0.0
      %v664 = vmax.f32 %v656, 0.0
      %v665 = vmax.f32 %v657, 0.0
      %666 = vst [vmem:[%s244] sm:$0xff] %v658
      %667 = vst [vmem:[%s244 + $0x8] sm:$0xff] %v659
      %668 = vst [vmem:[%s244 + $0x10] sm:$0xff] %v660
      %669 = vst [vmem:[%s244 + $0x18] sm:$0xff] %v661
      %670 = vst [vmem:[%s244 + $0x20] sm:$0xff] %v662
      %671 = vst [vmem:[%s244 + $0x28] sm:$0xff] %v663
      %672 = vst [vmem:[%s244 + $0x30] sm:$0xff] %v664
      %673 = vst [vmem:[%s244 + $0x38] sm:$0xff] %v665
      %p674 = scmp.lt.s32.totalorder %s16, 1
      %s675 = scalar_select %p674, %s16, 1
      %s676 = smul.addr %s675, 8
      %s677 = smul.addr %s676, 8
      %s678 = scalar_lea.vmem %s5, %s677
      // Predicated region
      $region41: #{_lambda_.13} parent=39 // pred_check
        %p679 = pneg %p149
      $region42: #{_lambda_.13} parent=39 // pred_check_branch
        %681 = sbr.rel (%p679) target = $region44
      $region43: #{_lambda_.13} parent=39 // pred_region
        _
      $region44: #{_lambda_.13} parent=39 // pred_fallthru
        _
    $region40: #{_lambda_.13} parent=5 // pred_fallthru
      _
    %p682 = scmp.le.s32.totalorder 2, %s11
    // Predicated region
    $region45: #{_lambda_.13} parent=5 // pred_check
      %p683 = pneg %p682
    $region46: #{_lambda_.13} parent=5 // pred_check_branch
      %685 = sbr.rel (%p683) target = $region48
    $region47: #{_lambda_.13} parent=5 // pred_region
      %s686 = ssub.s32 %s11, 2
      // Predicated region
      $region49: #{_lambda_.13} parent=47 // pred_check
        %p687 = pneg %p155
      $region50: #{_lambda_.13} parent=47 // pred_check_branch
        %689 = sbr.rel (%p687) target = $region52
      $region51: #{_lambda_.13} parent=47 // pred_region
        %p690 = scmp.lt.s32.totalorder %s17, 1
        %s691 = scalar_select %p690, %s17, 1
        %s692 = smul.addr %s691, 8
        %s693 = smul.addr %s692, 8
        %s694 = scalar_lea.vmem %s5, %s693
      $region52: #{_lambda_.13} parent=47 // pred_fallthru
        _
    $region48: #{_lambda_.13} parent=5 // pred_fallthru
      _
  $region6: #{_lambda_.13} parent=0 // loop_footer
    %s15 = sadd.s32 1, %s11
  $region7: #{_lambda_.13} parent=0 // loop_footer_branch
    %10 = sbr.rel target = $region3
  $region8: #{_lambda_.13} parent=0 // loop_exit
    _

// kernel: _lambda_.9
$region0: #{_lambda_.9}
  #allocation0 [shape = 'u32[]', space=smem, size = 0x4, offset = 0x4, fixed_abs, tag = 'smem constant byte address 0x4 - core index']
  #allocation1 [shape = 'u32[72,128]{1,0:T(1,128)}', space=vmem, size = 0x9000, scoped, tag = 'internal scratch']
  #allocation2 [shape = 'f32[10,10,128]{2,1,0:T(8,128)}', space=vmem, size = 0x14000, scoped, tag = 'scratch operand']
  %s0 = inlined_call_operand.vmem [shape: bf16[2,8,8,128], index: 0, kind: input, shape index: {}]
  %s1 = inlined_call_operand.vmem [shape: f32[16,128], index: 1, kind: input, shape index: {}]
  %s2 = inlined_call_operand.vmem [shape: bf16[128,128], index: 2, kind: input, shape index: {}]
  %s3 = inlined_call_operand.vmem [shape: f32[1,128], index: 3, kind: input, shape index: {}]
  %s4 = inlined_call_operand.vmem [shape: bf16[2,8,8,128], index: 4, kind: output, shape index: {}]
  %s5 = sld [smem:[#allocation0]]
  $region49: #{_lambda_.9} parent=0
    _
  %s7 = ssub.s32 1, %s5
  %s8 = scalar_select 0, %s7, %s5
  loop: start=0, step=1, limit=4
  $region2: #{_lambda_.9} parent=0 // loop_pre_header
    _
  $region3: #{_lambda_.9} parent=0 // loop_header
    %s10 = sphi 0, %s14
    %p11 = scmp.ge.s32.totalorder %s10, 4
    %s20 = sphi 0, %s22
    %s23 = sphi 0, %s20
    %s24 = sphi 0, %s23
    %s40 = sphi 0, %s24
    %s44 = sphi 0, %s44
    %s46 = sphi 0, %s44
    %s47 = sphi 0, %s46
    %s61 = sphi 0, %s47
    %s65 = sphi 0, %s65
    %s67 = sphi 0, %s65
    %s68 = sphi 0, %s67
    %s82 = sphi 0, %s68
    %s86 = sphi 0, %s86
    %s88 = sphi 0, %s86
    %s89 = sphi 0, %s88
    %s103 = sphi 0, %s89
    %s109 = sphi 0, %s111
    %s112 = sphi 0, %s109
    %s113 = sphi 0, %s112
    %s129 = sphi 0, %s113
  $region4: #{_lambda_.9} parent=0 // loop_header_branch
    %13 = sbr.rel (%p11) target = $region8
  $region5: #{_lambda_.9} parent=0 // loop_body
    %s15 = ssub.s32 %s10, 1
    %s16 = ssub.s32 %s10, 2
    %s17 = sadd.s32 %s10, 1
    %s18 = ssub.s32 %s10, %s17
    %p19 = scmp.eq.s32.totalorder %s18, 0
    %s21 = sadd.s32 %s20, 1
    %s22 = scalar_select %p19, %s20, %s21
    %p25 = pneg %p19
    %p26 = scmp.eq.s32.totalorder %s10, 1
    %p27 = por %p25, %p26
    %p28 = scmp.ne.s32.totalorder %s20, %s23
    %p29 = scmp.eq.s32.totalorder %s10, 0
    %p30 = por %p28, %p29
    %p31 = scmp.ne.s32.totalorder %s20, %s23
    %p32 = scmp.eq.s32.totalorder %s15, 1
    %p33 = por %p31, %p32
    %p34 = scmp.ne.s32.totalorder %s23, %s24
    %p35 = scmp.eq.s32.totalorder %s15, 0
    %p36 = por %p34, %p35
    %p37 = scmp.ne.s32.totalorder %s23, %s24
    %p38 = scmp.eq.s32.totalorder %s16, 1
    %p39 = por %p37, %p38
    %p41 = scmp.ne.s32.totalorder %s24, %s40
    %p42 = scmp.eq.s32.totalorder %s16, 0
    %p43 = por %p41, %p42
    %s45 = sadd.s32 %s44, 1
    %p48 = scmp.eq.s32.totalorder %s10, 1
    %p49 = scmp.ne.s32.totalorder %s44, %s46
    %p50 = scmp.eq.s32.totalorder %s10, 0
    %p51 = por %p49, %p50
    %p52 = scmp.ne.s32.totalorder %s44, %s46
    %p53 = scmp.eq.s32.totalorder %s15, 1
    %p54 = por %p52, %p53
    %p55 = scmp.ne.s32.totalorder %s46, %s47
    %p56 = scmp.eq.s32.totalorder %s15, 0
    %p57 = por %p55, %p56
    %p58 = scmp.ne.s32.totalorder %s46, %s47
    %p59 = scmp.eq.s32.totalorder %s16, 1
    %p60 = por %p58, %p59
    %p62 = scmp.ne.s32.totalorder %s47, %s61
    %p63 = scmp.eq.s32.totalorder %s16, 0
    %p64 = por %p62, %p63
    %s66 = sadd.s32 %s65, 1
    %p69 = scmp.eq.s32.totalorder %s10, 1
    %p70 = scmp.ne.s32.totalorder %s65, %s67
    %p71 = scmp.eq.s32.totalorder %s10, 0
    %p72 = por %p70, %p71
    %p73 = scmp.ne.s32.totalorder %s65, %s67
    %p74 = scmp.eq.s32.totalorder %s15, 1
    %p75 = por %p73, %p74
    %p76 = scmp.ne.s32.totalorder %s67, %s68
    %p77 = scmp.eq.s32.totalorder %s15, 0
    %p78 = por %p76, %p77
    %p79 = scmp.ne.s32.totalorder %s67, %s68
    %p80 = scmp.eq.s32.totalorder %s16, 1
    %p81 = por %p79, %p80
    %p83 = scmp.ne.s32.totalorder %s68, %s82
    %p84 = scmp.eq.s32.totalorder %s16, 0
    %p85 = por %p83, %p84
    %s87 = sadd.s32 %s86, 1
    %p90 = scmp.eq.s32.totalorder %s10, 1
    %p91 = scmp.ne.s32.totalorder %s86, %s88
    %p92 = scmp.eq.s32.totalorder %s10, 0
    %p93 = por %p91, %p92
    %p94 = scmp.ne.s32.totalorder %s86, %s88
    %p95 = scmp.eq.s32.totalorder %s15, 1
    %p96 = por %p94, %p95
    %p97 = scmp.ne.s32.totalorder %s88, %s89
    %p98 = scmp.eq.s32.totalorder %s15, 0
    %p99 = por %p97, %p98
    %p100 = scmp.ne.s32.totalorder %s88, %s89
    %p101 = scmp.eq.s32.totalorder %s16, 1
    %p102 = por %p100, %p101
    %p104 = scmp.ne.s32.totalorder %s89, %s103
    %p105 = scmp.eq.s32.totalorder %s16, 0
    %p106 = por %p104, %p105
    %s107 = ssub.s32 %s10, %s17
    %p108 = scmp.eq.s32.totalorder %s107, 0
    %s110 = sadd.s32 %s109, 1
    %s111 = scalar_select %p108, %s109, %s110
    %p114 = pneg %p108
    %p115 = scmp.eq.s32.totalorder %s10, 1
    %p116 = por %p114, %p115
    %p117 = scmp.ne.s32.totalorder %s109, %s112
    %p118 = scmp.eq.s32.totalorder %s10, 0
    %p119 = por %p117, %p118
    %p120 = scmp.ne.s32.totalorder %s109, %s112
    %p121 = scmp.eq.s32.totalorder %s15, 1
    %p122 = por %p120, %p121
    %p123 = scmp.ne.s32.totalorder %s112, %s113
    %p124 = scmp.eq.s32.totalorder %s15, 0
    %p125 = por %p123, %p124
    %p126 = scmp.ne.s32.totalorder %s112, %s113
    %p127 = scmp.eq.s32.totalorder %s16, 1
    %p128 = por %p126, %p127
    %p130 = scmp.ne.s32.totalorder %s113, %s129
    %p131 = scmp.eq.s32.totalorder %s16, 0
    %p132 = por %p130, %p131
    %p133 = scmp.le.s32.totalorder 1, %s10
    %p134 = scmp.lt.s32.totalorder %s10, 3
    %p135 = pnand %p133, %p134
    %p136 = pneg %p135
    // Predicated region
    $region9: #{_lambda_.9} parent=5 // pred_check
      _
    $region10: #{_lambda_.9} parent=5 // pred_check_branch
      %138 = sbr.rel (%p135) target = $region12
    $region11: #{_lambda_.9} parent=5 // pred_region
      %s139 = ssub.s32 %s10, 1
      // Predicated region
      $region13: #{_lambda_.9} parent=11 // pred_check
        %p140 = pneg %p57
      $region14: #{_lambda_.9} parent=11 // pred_check_branch
        %142 = sbr.rel (%p140) target = $region16
      $region15: #{_lambda_.9} parent=11 // pred_region
        _
      $region16: #{_lambda_.9} parent=11 // pred_fallthru
        _
      // Predicated region
      $region17: #{_lambda_.9} parent=11 // pred_check
        %p143 = pneg %p78
      $region18: #{_lambda_.9} parent=11 // pred_check_branch
        %145 = sbr.rel (%p143) target = $region20
      $region19: #{_lambda_.9} parent=11 // pred_region
        _
      $region20: #{_lambda_.9} parent=11 // pred_fallthru
        _
      // Predicated region
      $region21: #{_lambda_.9} parent=11 // pred_check
        %p146 = pneg %p99
      $region22: #{_lambda_.9} parent=11 // pred_check_branch
        %148 = sbr.rel (%p146) target = $region24
      $region23: #{_lambda_.9} parent=11 // pred_region
        _
      $region24: #{_lambda_.9} parent=11 // pred_fallthru
        _
    $region12: #{_lambda_.9} parent=5 // pred_fallthru
      _
    %p149 = scmp.lt.s32.totalorder %s10, 2
    // Predicated region
    $region25: #{_lambda_.9} parent=5 // pred_check
      %p150 = pneg %p149
    $region26: #{_lambda_.9} parent=5 // pred_check_branch
      %152 = sbr.rel (%p150) target = $region28
    $region27: #{_lambda_.9} parent=5 // pred_region
      // Predicated region
      $region29: #{_lambda_.9} parent=27 // pred_check
        %p153 = pneg %p30
      $region30: #{_lambda_.9} parent=27 // pred_check_branch
        %155 = sbr.rel (%p153) target = $region32
      $region31: #{_lambda_.9} parent=27 // pred_region
        %p156 = scmp.lt.s32.totalorder %s10, 1
        %s157 = scalar_select %p156, %s10, 1
        %s158 = smul.addr %s157, 8
        %s159 = smul.addr %s158, 4
        %s160 = scalar_lea.vmem %s0, %s159
      $region32: #{_lambda_.9} parent=27 // pred_fallthru
        _
    $region28: #{_lambda_.9} parent=5 // pred_fallthru
      _
    %p161 = scmp.le.s32.totalorder 1, %s10
    %p162 = scmp.lt.s32.totalorder %s10, 3
    %p163 = pnand %p161, %p162
    %p164 = pneg %p163
    // Predicated region
    $region33: #{_lambda_.9} parent=5 // pred_check
      _
    $region34: #{_lambda_.9} parent=5 // pred_check_branch
      %166 = sbr.rel (%p163) target = $region36
    $region35: #{_lambda_.9} parent=5 // pred_region
      %s167 = ssub.s32 %s10, 1
      %p168 = scmp.lt.s32.totalorder %s15, 1
      %s169 = scalar_select %p168, %s15, 1
      %s170 = smul.addr %s169, 8
      %s171 = smul.addr %s170, 4
      %s172 = scalar_lea.vmem %s0, %s171
      %p173 = pneg %p36
      %p174 = pneg %p33
      %p175 = pneg %p57
      %p176 = pneg %p54
      %p177 = pneg %p78
      %p178 = pneg %p75
      %p179 = pneg %p99
      %p180 = pneg %p96
      %p181 = pneg %p125
      %p182 = pneg %p122
      %p183 = scmp.lt.s32.totalorder %s15, 1
      %s184 = scalar_select %p183, %s15, 1
      %s185 = smul.addr %s184, 8
      %s186 = smul.addr %s185, 4
      %s187 = scalar_lea.vmem %s4, %s186
      %p188 = scmp.lt.s32.totalorder %s15, 1
      %s189 = scalar_select %p188, %s15, 1
      %s190 = smul.addr %s189, 8
      %s191 = smul.addr %s190, 4
      %s192 = scalar_lea.vmem %s0, %s191
      %p193 = scmp.lt.s32.totalorder %s15, 1
      %s194 = scalar_select %p193, %s15, 1
      %s195 = smul.addr %s194, 8
      %s196 = smul.addr %s195, 4
      %s197 = scalar_lea.vmem %s4, %s196
      %198 = vst [vmem:[#allocation2] sm:$0xff] 0.0
      %199 = vst [vmem:[#allocation2 + $0x8] sm:$0x3] 0.0
      %200 = vst [vmem:[#allocation2 + $0x10] sm:$0xff] 0.0
      %201 = vst [vmem:[#allocation2 + $0x18] sm:$0x3] 0.0
      %202 = vst [vmem:[#allocation2 + $0x20] sm:$0xff] 0.0
      %203 = vst [vmem:[#allocation2 + $0x28] sm:$0x3] 0.0
      %204 = vst [vmem:[#allocation2 + $0x30] sm:$0xff] 0.0
      %205 = vst [vmem:[#allocation2 + $0x38] sm:$0x3] 0.0
      %206 = vst [vmem:[#allocation2 + $0x40] sm:$0xff] 0.0
      %207 = vst [vmem:[#allocation2 + $0x48] sm:$0x3] 0.0
      %208 = vst [vmem:[#allocation2 + $0x50] sm:$0xff] 0.0
      %209 = vst [vmem:[#allocation2 + $0x58] sm:$0x3] 0.0
      %210 = vst [vmem:[#allocation2 + $0x60] sm:$0xff] 0.0
      %211 = vst [vmem:[#allocation2 + $0x68] sm:$0x3] 0.0
      %212 = vst [vmem:[#allocation2 + $0x70] sm:$0xff] 0.0
      %213 = vst [vmem:[#allocation2 + $0x78] sm:$0x3] 0.0
      %214 = vst [vmem:[#allocation2 + $0x80] sm:$0xff] 0.0
      %215 = vst [vmem:[#allocation2 + $0x88] sm:$0x3] 0.0
      %216 = vst [vmem:[#allocation2 + $0x90] sm:$0xff] 0.0
      %217 = vst [vmem:[#allocation2 + $0x98] sm:$0x3] 0.0
      %v218 = vld [vmem:[%s192] sm:$0xf]
      %v219 = vld [vmem:[%s192 + $0x4] sm:$0xf]
      %v220 = vld [vmem:[%s192 + $0x8] sm:$0xf]
      %v221 = vld [vmem:[%s192 + $0xc] sm:$0xf]
      %v222 = vld [vmem:[%s192 + $0x10] sm:$0xf]
      %v223 = vld [vmem:[%s192 + $0x14] sm:$0xf]
      %v224 = vld [vmem:[%s192 + $0x18] sm:$0xf]
      %v225 = vld [vmem:[%s192 + $0x1c] sm:$0xf]
      %v226 = vunpack.c.l.bf16 %v218
      %v227 = vunpack.c.l.bf16 %v219
      %v228 = vunpack.c.l.bf16 %v220
      %v229 = vunpack.c.l.bf16 %v221
      %v230 = vunpack.c.l.bf16 %v222
      %v231 = vunpack.c.l.bf16 %v223
      %v232 = vunpack.c.l.bf16 %v224
      %v233 = vunpack.c.l.bf16 %v225
      %s234 = scalar_lea.vmem [#allocation2], 16
      %235 = vst [vmem:[%s234 + $0x1] sm:$0xff] %v226
      %236 = vst [vmem:[%s234 + $0x11] sm:$0xff] %v227
      %237 = vst [vmem:[%s234 + $0x21] sm:$0xff] %v228
      %238 = vst [vmem:[%s234 + $0x31] sm:$0xff] %v229
      %239 = vst [vmem:[%s234 + $0x41] sm:$0xff] %v230
      %240 = vst [vmem:[%s234 + $0x51] sm:$0xff] %v231
      %241 = vst [vmem:[%s234 + $0x61] sm:$0xff] %v232
      %242 = vst [vmem:[%s234 + $0x71] sm:$0xff] %v233
      %v243 = vld [vmem:[#allocation2] sm:$0xff]
      %v244 = vld [vmem:[#allocation2 + $0x10] sm:$0xff]
      %v245 = vld [vmem:[#allocation2 + $0x20] sm:$0xff]
      %v246 = vld [vmem:[#allocation2 + $0x30] sm:$0xff]
      %v247 = vld [vmem:[#allocation2 + $0x40] sm:$0xff]
      %v248 = vld [vmem:[#allocation2 + $0x50] sm:$0xff]
      %v249 = vld [vmem:[#allocation2 + $0x60] sm:$0xff]
      %v250 = vld [vmem:[#allocation2 + $0x70] sm:$0xff]
      %v251 = vld [vmem:[%s1] sm:$0x1]
      %v252 = vperm.slane %v251, 0
      %v253 = vmul.f32 %v243, %v252
      %v254 = vmul.f32 %v244, %v252
      %v255 = vmul.f32 %v245, %v252
      %v256 = vmul.f32 %v246, %v252
      %v257 = vmul.f32 %v247, %v252
      %v258 = vmul.f32 %v248, %v252
      %v259 = vmul.f32 %v249, %v252
      %v260 = vmul.f32 %v250, %v252
      %v261 = vadd.f32 %v253, 0.0
      %v262 = vadd.f32 %v254, 0.0
      %v263 = vadd.f32 %v255, 0.0
      %v264 = vadd.f32 %v256, 0.0
      %v265 = vadd.f32 %v257, 0.0
      %v266 = vadd.f32 %v258, 0.0
      %v267 = vadd.f32 %v259, 0.0
      %v268 = vadd.f32 %v260, 0.0
      %v269 = vld [vmem:[#allocation2 + $0x1] sm:$0xff]
      %v270 = vld [vmem:[#allocation2 + $0x11] sm:$0xff]
      %v271 = vld [vmem:[#allocation2 + $0x21] sm:$0xff]
      %v272 = vld [vmem:[#allocation2 + $0x31] sm:$0xff]
      %v273 = vld [vmem:[#allocation2 + $0x41] sm:$0xff]
      %v274 = vld [vmem:[#allocation2 + $0x51] sm:$0xff]
      %v275 = vld [vmem:[#allocation2 + $0x61] sm:$0xff]
      %v276 = vld [vmem:[#allocation2 + $0x71] sm:$0xff]
      %v277 = vld [vmem:[%s1 + $0x1] sm:$0x1]
      %v278 = vperm.slane %v277, 0
      %v279 = vmul.f32 %v269, %v278
      %v280 = vmul.f32 %v270, %v278
      %v281 = vmul.f32 %v271, %v278
      %v282 = vmul.f32 %v272, %v278
      %v283 = vmul.f32 %v273, %v278
      %v284 = vmul.f32 %v274, %v278
      %v285 = vmul.f32 %v275, %v278
      %v286 = vmul.f32 %v276, %v278
      %v287 = vadd.f32 %v261, %v279
      %v288 = vadd.f32 %v262, %v280
      %v289 = vadd.f32 %v263, %v281
      %v290 = vadd.f32 %v264, %v282
      %v291 = vadd.f32 %v265, %v283
      %v292 = vadd.f32 %v266, %v284
      %v293 = vadd.f32 %v267, %v285
      %v294 = vadd.f32 %v268, %v286
      %v295 = vld [vmem:[#allocation2 + $0x2] sm:$0xff]
      %v296 = vld [vmem:[#allocation2 + $0x12] sm:$0xff]
      %v297 = vld [vmem:[#allocation2 + $0x22] sm:$0xff]
      %v298 = vld [vmem:[#allocation2 + $0x32] sm:$0xff]
      %v299 = vld [vmem:[#allocation2 + $0x42] sm:$0xff]
      %v300 = vld [vmem:[#allocation2 + $0x52] sm:$0xff]
      %v301 = vld [vmem:[#allocation2 + $0x62] sm:$0xff]
      %v302 = vld [vmem:[#allocation2 + $0x72] sm:$0xff]
      %v303 = vld [vmem:[%s1 + $0x2] sm:$0x1]
      %v304 = vperm.slane %v303, 0
      %v305 = vmul.f32 %v295, %v304
      %v306 = vmul.f32 %v296, %v304
      %v307 = vmul.f32 %v297, %v304
      %v308 = vmul.f32 %v298, %v304
      %v309 = vmul.f32 %v299, %v304
      %v310 = vmul.f32 %v300, %v304
      %v311 = vmul.f32 %v301, %v304
      %v312 = vmul.f32 %v302, %v304
      %v313 = vadd.f32 %v287, %v305
      %v314 = vadd.f32 %v288, %v306
      %v315 = vadd.f32 %v289, %v307
      %v316 = vadd.f32 %v290, %v308
      %v317 = vadd.f32 %v291, %v309
      %v318 = vadd.f32 %v292, %v310
      %v319 = vadd.f32 %v293, %v311
      %v320 = vadd.f32 %v294, %v312
      %v321 = vld [vmem:[%s234] sm:$0xff]
      %v322 = vld [vmem:[%s234 + $0x10] sm:$0xff]
      %v323 = vld [vmem:[%s234 + $0x20] sm:$0xff]
      %v324 = vld [vmem:[%s234 + $0x30] sm:$0xff]
      %v325 = vld [vmem:[%s234 + $0x40] sm:$0xff]
      %v326 = vld [vmem:[%s234 + $0x50] sm:$0xff]
      %v327 = vld [vmem:[%s234 + $0x60] sm:$0xff]
      %v328 = vld [vmem:[%s234 + $0x70] sm:$0xff]
      %v329 = vld [vmem:[%s1 + $0x3] sm:$0x1]
      %v330 = vperm.slane %v329, 0
      %v331 = vmul.f32 %v321, %v330
      %v332 = vmul.f32 %v322, %v330
      %v333 = vmul.f32 %v323, %v330
      %v334 = vmul.f32 %v324, %v330
      %v335 = vmul.f32 %v325, %v330
      %v336 = vmul.f32 %v326, %v330
      %v337 = vmul.f32 %v327, %v330
      %v338 = vmul.f32 %v328, %v330
      %v339 = vadd.f32 %v313, %v331
      %v340 = vadd.f32 %v314, %v332
      %v341 = vadd.f32 %v315, %v333
      %v342 = vadd.f32 %v316, %v334
      %v343 = vadd.f32 %v317, %v335
      %v344 = vadd.f32 %v318, %v336
      %v345 = vadd.f32 %v319, %v337
      %v346 = vadd.f32 %v320, %v338
      %v347 = vld [vmem:[%s234 + $0x1] sm:$0xff]
      %v348 = vld [vmem:[%s234 + $0x11] sm:$0xff]
      %v349 = vld [vmem:[%s234 + $0x21] sm:$0xff]
      %v350 = vld [vmem:[%s234 + $0x31] sm:$0xff]
      %v351 = vld [vmem:[%s234 + $0x41] sm:$0xff]
      %v352 = vld [vmem:[%s234 + $0x51] sm:$0xff]
      %v353 = vld [vmem:[%s234 + $0x61] sm:$0xff]
      %v354 = vld [vmem:[%s234 + $0x71] sm:$0xff]
      %v355 = vld [vmem:[%s1 + $0x4] sm:$0x1]
      %v356 = vperm.slane %v355, 0
      %v357 = vmul.f32 %v347, %v356
      %v358 = vmul.f32 %v348, %v356
      %v359 = vmul.f32 %v349, %v356
      %v360 = vmul.f32 %v350, %v356
      %v361 = vmul.f32 %v351, %v356
      %v362 = vmul.f32 %v352, %v356
      %v363 = vmul.f32 %v353, %v356
      %v364 = vmul.f32 %v354, %v356
      %v365 = vadd.f32 %v339, %v357
      %v366 = vadd.f32 %v340, %v358
      %v367 = vadd.f32 %v341, %v359
      %v368 = vadd.f32 %v342, %v360
      %v369 = vadd.f32 %v343, %v361
      %v370 = vadd.f32 %v344, %v362
      %v371 = vadd.f32 %v345, %v363
      %v372 = vadd.f32 %v346, %v364
      %v373 = vld [vmem:[%s234 + $0x2] sm:$0xff]
      %v374 = vld [vmem:[%s234 + $0x12] sm:$0xff]
      %v375 = vld [vmem:[%s234 + $0x22] sm:$0xff]
      %v376 = vld [vmem:[%s234 + $0x32] sm:$0xff]
      %v377 = vld [vmem:[%s234 + $0x42] sm:$0xff]
      %v378 = vld [vmem:[%s234 + $0x52] sm:$0xff]
      %v379 = vld [vmem:[%s234 + $0x62] sm:$0xff]
      %v380 = vld [vmem:[%s234 + $0x72] sm:$0xff]
      %v381 = vld [vmem:[%s1 + $0x5] sm:$0x1]
      %v382 = vperm.slane %v381, 0
      %v383 = vmul.f32 %v373, %v382
      %v384 = vmul.f32 %v374, %v382
      %v385 = vmul.f32 %v375, %v382
      %v386 = vmul.f32 %v376, %v382
      %v387 = vmul.f32 %v377, %v382
      %v388 = vmul.f32 %v378, %v382
      %v389 = vmul.f32 %v379, %v382
      %v390 = vmul.f32 %v380, %v382
      %v391 = vadd.f32 %v365, %v383
      %v392 = vadd.f32 %v366, %v384
      %v393 = vadd.f32 %v367, %v385
      %v394 = vadd.f32 %v368, %v386
      %v395 = vadd.f32 %v369, %v387
      %v396 = vadd.f32 %v370, %v388
      %v397 = vadd.f32 %v371, %v389
      %v398 = vadd.f32 %v372, %v390
      %s399 = scalar_lea.vmem [#allocation2], 32
      %v400 = vld [vmem:[%s399] sm:$0xff]
      %v401 = vld [vmem:[%s399 + $0x10] sm:$0xff]
      %v402 = vld [vmem:[%s399 + $0x20] sm:$0xff]
      %v403 = vld [vmem:[%s399 + $0x30] sm:$0xff]
      %v404 = vld [vmem:[%s399 + $0x40] sm:$0xff]
      %v405 = vld [vmem:[%s399 + $0x50] sm:$0xff]
      %v406 = vld [vmem:[%s399 + $0x60] sm:$0xff]
      %v407 = vld [vmem:[%s399 + $0x70] sm:$0xff]
      %v408 = vld [vmem:[%s1 + $0x6] sm:$0x1]
      %v409 = vperm.slane %v408, 0
      %v410 = vmul.f32 %v400, %v409
      %v411 = vmul.f32 %v401, %v409
      %v412 = vmul.f32 %v402, %v409
      %v413 = vmul.f32 %v403, %v409
      %v414 = vmul.f32 %v404, %v409
      %v415 = vmul.f32 %v405, %v409
      %v416 = vmul.f32 %v406, %v409
      %v417 = vmul.f32 %v407, %v409
      %v418 = vadd.f32 %v391, %v410
      %v419 = vadd.f32 %v392, %v411
      %v420 = vadd.f32 %v393, %v412
      %v421 = vadd.f32 %v394, %v413
      %v422 = vadd.f32 %v395, %v414
      %v423 = vadd.f32 %v396, %v415
      %v424 = vadd.f32 %v397, %v416
      %v425 = vadd.f32 %v398, %v417
      %v426 = vld [vmem:[%s399 + $0x1] sm:$0xff]
      %v427 = vld [vmem:[%s399 + $0x11] sm:$0xff]
      %v428 = vld [vmem:[%s399 + $0x21] sm:$0xff]
      %v429 = vld [vmem:[%s399 + $0x31] sm:$0xff]
      %v430 = vld [vmem:[%s399 + $0x41] sm:$0xff]
      %v431 = vld [vmem:[%s399 + $0x51] sm:$0xff]
      %v432 = vld [vmem:[%s399 + $0x61] sm:$0xff]
      %v433 = vld [vmem:[%s399 + $0x71] sm:$0xff]
      %v434 = vld [vmem:[%s1 + $0x7] sm:$0x1]
      %v435 = vperm.slane %v434, 0
      %v436 = vmul.f32 %v426, %v435
      %v437 = vmul.f32 %v427, %v435
      %v438 = vmul.f32 %v428, %v435
      %v439 = vmul.f32 %v429, %v435
      %v440 = vmul.f32 %v430, %v435
      %v441 = vmul.f32 %v431, %v435
      %v442 = vmul.f32 %v432, %v435
      %v443 = vmul.f32 %v433, %v435
      %v444 = vadd.f32 %v418, %v436
      %v445 = vadd.f32 %v419, %v437
      %v446 = vadd.f32 %v420, %v438
      %v447 = vadd.f32 %v421, %v439
      %v448 = vadd.f32 %v422, %v440
      %v449 = vadd.f32 %v423, %v441
      %v450 = vadd.f32 %v424, %v442
      %v451 = vadd.f32 %v425, %v443
      %v452 = vld [vmem:[%s399 + $0x2] sm:$0xff]
      %v453 = vld [vmem:[%s399 + $0x12] sm:$0xff]
      %v454 = vld [vmem:[%s399 + $0x22] sm:$0xff]
      %v455 = vld [vmem:[%s399 + $0x32] sm:$0xff]
      %v456 = vld [vmem:[%s399 + $0x42] sm:$0xff]
      %v457 = vld [vmem:[%s399 + $0x52] sm:$0xff]
      %v458 = vld [vmem:[%s399 + $0x62] sm:$0xff]
      %v459 = vld [vmem:[%s399 + $0x72] sm:$0xff]
      %v460 = vld [vmem:[%s1 + $0x8] sm:$0x1]
      %v461 = vperm.slane %v460, 0
      %v462 = vmul.f32 %v452, %v461
      %v463 = vmul.f32 %v453, %v461
      %v464 = vmul.f32 %v454, %v461
      %v465 = vmul.f32 %v455, %v461
      %v466 = vmul.f32 %v456, %v461
      %v467 = vmul.f32 %v457, %v461
      %v468 = vmul.f32 %v458, %v461
      %v469 = vmul.f32 %v459, %v461
      %v470 = vadd.f32 %v444, %v462
      %v471 = vadd.f32 %v445, %v463
      %v472 = vadd.f32 %v446, %v464
      %v473 = vadd.f32 %v447, %v465
      %v474 = vadd.f32 %v448, %v466
      %v475 = vadd.f32 %v449, %v467
      %v476 = vadd.f32 %v450, %v468
      %v477 = vadd.f32 %v451, %v469
      %v478 = vpack.c.bf16 %v471, %v470
      %v479 = vpack.c.bf16 %v473, %v472
      %v480 = vpack.c.bf16 %v475, %v474
      %v481 = vpack.c.bf16 %v477, %v476
      %v482 = vld [vmem:[%s2] sm:$0xf]
      %v483 = vld [vmem:[%s2 + $0x4] sm:$0xf]
      %v484 = vld [vmem:[%s2 + $0x8] sm:$0xf]
      %v485 = vld [vmem:[%s2 + $0xc] sm:$0xf]
      %v486 = vld [vmem:[%s2 + $0x10] sm:$0xf]
      %v487 = vld [vmem:[%s2 + $0x14] sm:$0xf]
      %v488 = vld [vmem:[%s2 + $0x18] sm:$0xf]
      %v489 = vld [vmem:[%s2 + $0x1c] sm:$0xf]
      %v490 = vld [vmem:[%s2 + $0x20] sm:$0xf]
      %v491 = vld [vmem:[%s2 + $0x24] sm:$0xf]
      %v492 = vld [vmem:[%s2 + $0x28] sm:$0xf]
      %v493 = vld [vmem:[%s2 + $0x2c] sm:$0xf]
      %v494 = vld [vmem:[%s2 + $0x30] sm:$0xf]
      %v495 = vld [vmem:[%s2 + $0x34] sm:$0xf]
      %v496 = vld [vmem:[%s2 + $0x38] sm:$0xf]
      %v497 = vld [vmem:[%s2 + $0x3c] sm:$0xf]
      %v498 = vld [vmem:[%s3] sm:$0x1]
      %v500 = vperm.slane %v498, 0
      %v518 = vunpack.c.l.b16 %v482
      %v519 = vunpack.c.l.b16 %v483
      %v520 = vunpack.c.l.b16 %v484
      %v521 = vunpack.c.l.b16 %v485
      %v522 = vunpack.c.l.b16 %v486
      %v523 = vunpack.c.l.b16 %v487
      %v524 = vunpack.c.l.b16 %v488
      %v525 = vunpack.c.l.b16 %v489
      %v526 = vunpack.c.l.b16 %v490
      %v527 = vunpack.c.l.b16 %v491
      %v528 = vunpack.c.l.b16 %v492
      %v529 = vunpack.c.l.b16 %v493
      %v530 = vunpack.c.l.b16 %v494
      %v531 = vunpack.c.l.b16 %v495
      %v532 = vunpack.c.l.b16 %v496
      %v533 = vunpack.c.l.b16 %v497
      %v534 = vpack.c.b16 %v519, %v518
      %v535 = vpack.c.b16 %v521, %v520
      %v536 = vpack.c.b16 %v523, %v522
      %v537 = vpack.c.b16 %v525, %v524
      %v538 = vpack.c.b16 %v527, %v526
      %v539 = vpack.c.b16 %v529, %v528
      %v540 = vpack.c.b16 %v531, %v530
      %v541 = vpack.c.b16 %v533, %v532
      %550 = vmatpush.bf16.msra.mxu0 %v541
      %551 = vmatpush.bf16.msra.mxu0 %v540
      %552 = vmatpush.bf16.msra.mxu0 %v539
      %553 = vmatpush.bf16.msra.mxu0 %v538
      %554 = vmatpush.bf16.msra.mxu0 %v537
      %555 = vmatpush.bf16.msra.mxu0 %v536
      %556 = vmatpush.bf16.msra.mxu0 %v535
      %557 = vmatpush.bf16.msra.mxu0 %v534
      %558 = vmatmul.bf16.gmra.mxu0 %v478
      %v559 = vpop.f32.mrf.mxu0
      %v560 = vadd.f32 %v500, %v559
      %v561 = vpop.f32.mrf.mxu0
      %v562 = vadd.f32 %v500, %v561
      %563 = vmatmul.bf16.gmra.mxu0 %v479
      %v564 = vpop.f32.mrf.mxu0
      %v565 = vadd.f32 %v500, %v564
      %v566 = vpop.f32.mrf.mxu0
      %v567 = vadd.f32 %v500, %v566
      %568 = vmatmul.bf16.gmra.mxu0 %v480
      %v569 = vpop.f32.mrf.mxu0
      %v570 = vadd.f32 %v500, %v569
      %v571 = vpop.f32.mrf.mxu0
      %v572 = vadd.f32 %v500, %v571
      %573 = vmatmul.bf16.gmra.mxu0 %v481
      %v574 = vpop.f32.mrf.mxu0
      %v575 = vadd.f32 %v500, %v574
      %v576 = vpop.f32.mrf.mxu0
      %v577 = vadd.f32 %v500, %v576
      %578 = vdwg.mxu0
      %v579 = vmax.f32 %v560, 0.0
      %v580 = vmax.f32 %v562, 0.0
      %v581 = vmax.f32 %v565, 0.0
      %v582 = vmax.f32 %v567, 0.0
      %v583 = vmax.f32 %v570, 0.0
      %v584 = vmax.f32 %v572, 0.0
      %v585 = vmax.f32 %v575, 0.0
      %v586 = vmax.f32 %v577, 0.0
      %v587 = vpack.c.bf16 %v579, %v579
      %v588 = vpack.c.bf16 %v580, %v580
      %v589 = vpack.c.bf16 %v581, %v581
      %v590 = vpack.c.bf16 %v582, %v582
      %v591 = vpack.c.bf16 %v583, %v583
      %v592 = vpack.c.bf16 %v584, %v584
      %v593 = vpack.c.bf16 %v585, %v585
      %v594 = vpack.c.bf16 %v586, %v586
      %595 = vst [vmem:[%s197] sm:$0xf] %v587
      %596 = vst [vmem:[%s197 + $0x4] sm:$0xf] %v588
      %597 = vst [vmem:[%s197 + $0x8] sm:$0xf] %v589
      %598 = vst [vmem:[%s197 + $0xc] sm:$0xf] %v590
      %599 = vst [vmem:[%s197 + $0x10] sm:$0xf] %v591
      %600 = vst [vmem:[%s197 + $0x14] sm:$0xf] %v592
      %601 = vst [vmem:[%s197 + $0x18] sm:$0xf] %v593
      %602 = vst [vmem:[%s197 + $0x1c] sm:$0xf] %v594
      %p603 = scmp.lt.s32.totalorder %s15, 1
      %s604 = scalar_select %p603, %s15, 1
      %s605 = smul.addr %s604, 8
      %s606 = smul.addr %s605, 4
      %s607 = scalar_lea.vmem %s4, %s606
      // Predicated region
      $region37: #{_lambda_.9} parent=35 // pred_check
        %p608 = pneg %p122
      $region38: #{_lambda_.9} parent=35 // pred_check_branch
        %610 = sbr.rel (%p608) target = $region40
      $region39: #{_lambda_.9} parent=35 // pred_region
        _
      $region40: #{_lambda_.9} parent=35 // pred_fallthru
        _
    $region36: #{_lambda_.9} parent=5 // pred_fallthru
      _
    %p611 = scmp.le.s32.totalorder 2, %s10
    // Predicated region
    $region41: #{_lambda_.9} parent=5 // pred_check
      %p612 = pneg %p611
    $region42: #{_lambda_.9} parent=5 // pred_check_branch
      %614 = sbr.rel (%p612) target = $region44
    $region43: #{_lambda_.9} parent=5 // pred_region
      %s615 = ssub.s32 %s10, 2
      // Predicated region
      $region45: #{_lambda_.9} parent=43 // pred_check
        %p616 = pneg %p128
      $region46: #{_lambda_.9} parent=43 // pred_check_branch
        %618 = sbr.rel (%p616) target = $region48
      $region47: #{_lambda_.9} parent=43 // pred_region
        %p619 = scmp.lt.s32.totalorder %s16, 1
        %s620 = scalar_select %p619, %s16, 1
        %s621 = smul.addr %s620, 8
        %s622 = smul.addr %s621, 4
        %s623 = scalar_lea.vmem %s4, %s622
      $region48: #{_lambda_.9} parent=43 // pred_fallthru
        _
    $region44: #{_lambda_.9} parent=5 // pred_fallthru
      _
  $region6: #{_lambda_.9} parent=0 // loop_footer
    %s14 = sadd.s32 1, %s10
  $region7: #{_lambda_.9} parent=0 // loop_footer_branch
    %9 = sbr.rel target = $region3
  $region8: #{_lambda_.9} parent=0 // loop_exit
    _

// kernel: _lambda_.7
$region0: #{_lambda_.7}
  #allocation0 [shape = 'u32[]', space=smem, size = 0x4, offset = 0x4, fixed_abs, tag = 'smem constant byte address 0x4 - core index']
  #allocation1 [shape = 'u32[72,128]{1,0:T(1,128)}', space=vmem, size = 0x9000, scoped, tag = 'internal scratch']
  #allocation2 [shape = 'f32[18,18,128]{2,1,0:T(8,128)}', space=vmem, size = 0x36000, scoped, tag = 'scratch operand']
  %s0 = inlined_call_operand.vmem [shape: bf16[2,16,16,128], index: 0, kind: input, shape index: {}]
  %s1 = inlined_call_operand.vmem [shape: f32[16,128], index: 1, kind: input, shape index: {}]
  %s2 = inlined_call_operand.vmem [shape: bf16[128,128], index: 2, kind: input, shape index: {}]
  %s3 = inlined_call_operand.vmem [shape: f32[1,128], index: 3, kind: input, shape index: {}]
  %s4 = inlined_call_operand.vmem [shape: bf16[2,8,8,128], index: 4, kind: output, shape index: {}]
  %s5 = sld [smem:[#allocation0]]
  $region49: #{_lambda_.7} parent=0
    _
  %s7 = ssub.s32 1, %s5
  %s8 = scalar_select 0, %s7, %s5
  loop: start=0, step=1, limit=4
  $region2: #{_lambda_.7} parent=0 // loop_pre_header
    _
  $region3: #{_lambda_.7} parent=0 // loop_header
    %s10 = sphi 0, %s14
    %p11 = scmp.ge.s32.totalorder %s10, 4
    %s20 = sphi 0, %s22
    %s23 = sphi 0, %s20
    %s24 = sphi 0, %s23
    %s40 = sphi 0, %s24
    %s44 = sphi 0, %s44
    %s46 = sphi 0, %s44
    %s47 = sphi 0, %s46
    %s61 = sphi 0, %s47
    %s65 = sphi 0, %s65
    %s67 = sphi 0, %s65
    %s68 = sphi 0, %s67
    %s82 = sphi 0, %s68
    %s86 = sphi 0, %s86
    %s88 = sphi 0, %s86
    %s89 = sphi 0, %s88
    %s103 = sphi 0, %s89
    %s109 = sphi 0, %s111
    %s112 = sphi 0, %s109
    %s113 = sphi 0, %s112
    %s129 = sphi 0, %s113
  $region4: #{_lambda_.7} parent=0 // loop_header_branch
    %13 = sbr.rel (%p11) target = $region8
  $region5: #{_lambda_.7} parent=0 // loop_body
    %s15 = ssub.s32 %s10, 1
    %s16 = ssub.s32 %s10, 2
    %s17 = sadd.s32 %s10, 1
    %s18 = ssub.s32 %s10, %s17
    %p19 = scmp.eq.s32.totalorder %s18, 0
    %s21 = sadd.s32 %s20, 1
    %s22 = scalar_select %p19, %s20, %s21
    %p25 = pneg %p19
    %p26 = scmp.eq.s32.totalorder %s10, 1
    %p27 = por %p25, %p26
    %p28 = scmp.ne.s32.totalorder %s20, %s23
    %p29 = scmp.eq.s32.totalorder %s10, 0
    %p30 = por %p28, %p29
    %p31 = scmp.ne.s32.totalorder %s20, %s23
    %p32 = scmp.eq.s32.totalorder %s15, 1
    %p33 = por %p31, %p32
    %p34 = scmp.ne.s32.totalorder %s23, %s24
    %p35 = scmp.eq.s32.totalorder %s15, 0
    %p36 = por %p34, %p35
    %p37 = scmp.ne.s32.totalorder %s23, %s24
    %p38 = scmp.eq.s32.totalorder %s16, 1
    %p39 = por %p37, %p38
    %p41 = scmp.ne.s32.totalorder %s24, %s40
    %p42 = scmp.eq.s32.totalorder %s16, 0
    %p43 = por %p41, %p42
    %s45 = sadd.s32 %s44, 1
    %p48 = scmp.eq.s32.totalorder %s10, 1
    %p49 = scmp.ne.s32.totalorder %s44, %s46
    %p50 = scmp.eq.s32.totalorder %s10, 0
    %p51 = por %p49, %p50
    %p52 = scmp.ne.s32.totalorder %s44, %s46
    %p53 = scmp.eq.s32.totalorder %s15, 1
    %p54 = por %p52, %p53
    %p55 = scmp.ne.s32.totalorder %s46, %s47
    %p56 = scmp.eq.s32.totalorder %s15, 0
    %p57 = por %p55, %p56
    %p58 = scmp.ne.s32.totalorder %s46, %s47
    %p59 = scmp.eq.s32.totalorder %s16, 1
    %p60 = por %p58, %p59
    %p62 = scmp.ne.s32.totalorder %s47, %s61
    %p63 = scmp.eq.s32.totalorder %s16, 0
    %p64 = por %p62, %p63
    %s66 = sadd.s32 %s65, 1
    %p69 = scmp.eq.s32.totalorder %s10, 1
    %p70 = scmp.ne.s32.totalorder %s65, %s67
    %p71 = scmp.eq.s32.totalorder %s10, 0
    %p72 = por %p70, %p71
    %p73 = scmp.ne.s32.totalorder %s65, %s67
    %p74 = scmp.eq.s32.totalorder %s15, 1
    %p75 = por %p73, %p74
    %p76 = scmp.ne.s32.totalorder %s67, %s68
    %p77 = scmp.eq.s32.totalorder %s15, 0
    %p78 = por %p76, %p77
    %p79 = scmp.ne.s32.totalorder %s67, %s68
    %p80 = scmp.eq.s32.totalorder %s16, 1
    %p81 = por %p79, %p80
    %p83 = scmp.ne.s32.totalorder %s68, %s82
    %p84 = scmp.eq.s32.totalorder %s16, 0
    %p85 = por %p83, %p84
    %s87 = sadd.s32 %s86, 1
    %p90 = scmp.eq.s32.totalorder %s10, 1
    %p91 = scmp.ne.s32.totalorder %s86, %s88
    %p92 = scmp.eq.s32.totalorder %s10, 0
    %p93 = por %p91, %p92
    %p94 = scmp.ne.s32.totalorder %s86, %s88
    %p95 = scmp.eq.s32.totalorder %s15, 1
    %p96 = por %p94, %p95
    %p97 = scmp.ne.s32.totalorder %s88, %s89
    %p98 = scmp.eq.s32.totalorder %s15, 0
    %p99 = por %p97, %p98
    %p100 = scmp.ne.s32.totalorder %s88, %s89
    %p101 = scmp.eq.s32.totalorder %s16, 1
    %p102 = por %p100, %p101
    %p104 = scmp.ne.s32.totalorder %s89, %s103
    %p105 = scmp.eq.s32.totalorder %s16, 0
    %p106 = por %p104, %p105
    %s107 = ssub.s32 %s10, %s17
    %p108 = scmp.eq.s32.totalorder %s107, 0
    %s110 = sadd.s32 %s109, 1
    %s111 = scalar_select %p108, %s109, %s110
    %p114 = pneg %p108
    %p115 = scmp.eq.s32.totalorder %s10, 1
    %p116 = por %p114, %p115
    %p117 = scmp.ne.s32.totalorder %s109, %s112
    %p118 = scmp.eq.s32.totalorder %s10, 0
    %p119 = por %p117, %p118
    %p120 = scmp.ne.s32.totalorder %s109, %s112
    %p121 = scmp.eq.s32.totalorder %s15, 1
    %p122 = por %p120, %p121
    %p123 = scmp.ne.s32.totalorder %s112, %s113
    %p124 = scmp.eq.s32.totalorder %s15, 0
    %p125 = por %p123, %p124
    %p126 = scmp.ne.s32.totalorder %s112, %s113
    %p127 = scmp.eq.s32.totalorder %s16, 1
    %p128 = por %p126, %p127
    %p130 = scmp.ne.s32.totalorder %s113, %s129
    %p131 = scmp.eq.s32.totalorder %s16, 0
    %p132 = por %p130, %p131
    %p133 = scmp.le.s32.totalorder 1, %s10
    %p134 = scmp.lt.s32.totalorder %s10, 3
    %p135 = pnand %p133, %p134
    %p136 = pneg %p135
    // Predicated region
    $region9: #{_lambda_.7} parent=5 // pred_check
      _
    $region10: #{_lambda_.7} parent=5 // pred_check_branch
      %138 = sbr.rel (%p135) target = $region12
    $region11: #{_lambda_.7} parent=5 // pred_region
      %s139 = ssub.s32 %s10, 1
      // Predicated region
      $region13: #{_lambda_.7} parent=11 // pred_check
        %p140 = pneg %p57
      $region14: #{_lambda_.7} parent=11 // pred_check_branch
        %142 = sbr.rel (%p140) target = $region16
      $region15: #{_lambda_.7} parent=11 // pred_region
        _
      $region16: #{_lambda_.7} parent=11 // pred_fallthru
        _
      // Predicated region
      $region17: #{_lambda_.7} parent=11 // pred_check
        %p143 = pneg %p78
      $region18: #{_lambda_.7} parent=11 // pred_check_branch
        %145 = sbr.rel (%p143) target = $region20
      $region19: #{_lambda_.7} parent=11 // pred_region
        _
      $region20: #{_lambda_.7} parent=11 // pred_fallthru
        _
      // Predicated region
      $region21: #{_lambda_.7} parent=11 // pred_check
        %p146 = pneg %p99
      $region22: #{_lambda_.7} parent=11 // pred_check_branch
        %148 = sbr.rel (%p146) target = $region24
      $region23: #{_lambda_.7} parent=11 // pred_region
        _
      $region24: #{_lambda_.7} parent=11 // pred_fallthru
        _
    $region12: #{_lambda_.7} parent=5 // pred_fallthru
      _
    %p149 = scmp.lt.s32.totalorder %s10, 2
    // Predicated region
    $region25: #{_lambda_.7} parent=5 // pred_check
      %p150 = pneg %p149
    $region26: #{_lambda_.7} parent=5 // pred_check_branch
      %152 = sbr.rel (%p150) target = $region28
    $region27: #{_lambda_.7} parent=5 // pred_region
      // Predicated region
      $region29: #{_lambda_.7} parent=27 // pred_check
        %p153 = pneg %p30
      $region30: #{_lambda_.7} parent=27 // pred_check_branch
        %155 = sbr.rel (%p153) target = $region32
      $region31: #{_lambda_.7} parent=27 // pred_region
        %p156 = scmp.lt.s32.totalorder %s10, 1
        %s157 = scalar_select %p156, %s10, 1
        %s158 = smul.addr %s157, 32
        %s159 = smul.addr %s158, 4
        %s160 = scalar_lea.vmem %s0, %s159
      $region32: #{_lambda_.7} parent=27 // pred_fallthru
        _
    $region28: #{_lambda_.7} parent=5 // pred_fallthru
      _
    %p161 = scmp.le.s32.totalorder 1, %s10
    %p162 = scmp.lt.s32.totalorder %s10, 3
    %p163 = pnand %p161, %p162
    %p164 = pneg %p163
    // Predicated region
    $region33: #{_lambda_.7} parent=5 // pred_check
      _
    $region34: #{_lambda_.7} parent=5 // pred_check_branch
      %166 = sbr.rel (%p163) target = $region36
    $region35: #{_lambda_.7} parent=5 // pred_region
      %s167 = ssub.s32 %s10, 1
      %p168 = scmp.lt.s32.totalorder %s15, 1
      %s169 = scalar_select %p168, %s15, 1
      %s170 = smul.addr %s169, 32
      %s171 = smul.addr %s170, 4
      %s172 = scalar_lea.vmem %s0, %s171
      %p173 = pneg %p36
      %p174 = pneg %p33
      %p175 = pneg %p57
      %p176 = pneg %p54
      %p177 = pneg %p78
      %p178 = pneg %p75
      %p179 = pneg %p99
      %p180 = pneg %p96
      %p181 = pneg %p125
      %p182 = pneg %p122
      %p183 = scmp.lt.s32.totalorder %s15, 1
      %s184 = scalar_select %p183, %s15, 1
      %s185 = smul.addr %s184, 8
      %s186 = smul.addr %s185, 4
      %s187 = scalar_lea.vmem %s4, %s186
      %p188 = scmp.lt.s32.totalorder %s15, 1
      %s189 = scalar_select %p188, %s15, 1
      %s190 = smul.addr %s189, 32
      %s191 = smul.addr %s190, 4
      %s192 = scalar_lea.vmem %s0, %s191
      %p193 = scmp.lt.s32.totalorder %s15, 1
      %s194 = scalar_select %p193, %s15, 1
      %s195 = smul.addr %s194, 8
      %s196 = smul.addr %s195, 4
      %s197 = scalar_lea.vmem %s4, %s196
      %198 = vst [vmem:[#allocation2] sm:$0xff] 0.0
      %199 = vst [vmem:[#allocation2 + $0x8] sm:$0xff] 0.0
      %200 = vst [vmem:[#allocation2 + $0x10] sm:$0x3] 0.0
      %201 = vst [vmem:[#allocation2 + $0x18] sm:$0xff] 0.0
      %202 = vst [vmem:[#allocation2 + $0x20] sm:$0xff] 0.0
      %203 = vst [vmem:[#allocation2 + $0x28] sm:$0x3] 0.0
      %204 = vst [vmem:[#allocation2 + $0x30] sm:$0xff] 0.0
      %205 = vst [vmem:[#allocation2 + $0x38] sm:$0xff] 0.0
      %206 = vst [vmem:[#allocation2 + $0x40] sm:$0x3] 0.0
      %207 = vst [vmem:[#allocation2 + $0x48] sm:$0xff] 0.0
      %208 = vst [vmem:[#allocation2 + $0x50] sm:$0xff] 0.0
      %209 = vst [vmem:[#allocation2 + $0x58] sm:$0x3] 0.0
      %210 = vst [vmem:[#allocation2 + $0x60] sm:$0xff] 0.0
      %211 = vst [vmem:[#allocation2 + $0x68] sm:$0xff] 0.0
      %212 = vst [vmem:[#allocation2 + $0x70] sm:$0x3] 0.0
      %213 = vst [vmem:[#allocation2 + $0x78] sm:$0xff] 0.0
      %214 = vst [vmem:[#allocation2 + $0x80] sm:$0xff] 0.0
      %215 = vst [vmem:[#allocation2 + $0x88] sm:$0x3] 0.0
      %216 = vst [vmem:[#allocation2 + $0x90] sm:$0xff] 0.0
      %217 = vst [vmem:[#allocation2 + $0x98] sm:$0xff] 0.0
      %218 = vst [vmem:[#allocation2 + $0xa0] sm:$0x3] 0.0
      %219 = vst [vmem:[#allocation2 + $0xa8] sm:$0xff] 0.0
      %220 = vst [vmem:[#allocation2 + $0xb0] sm:$0xff] 0.0
      %221 = vst [vmem:[#allocation2 + $0xb8] sm:$0x3] 0.0
      %222 = vst [vmem:[#allocation2 + $0xc0] sm:$0xff] 0.0
      %223 = vst [vmem:[#allocation2 + $0xc8] sm:$0xff] 0.0
      %224 = vst [vmem:[#allocation2 + $0xd0] sm:$0x3] 0.0
      %225 = vst [vmem:[#allocation2 + $0xd8] sm:$0xff] 0.0
      %226 = vst [vmem:[#allocation2 + $0xe0] sm:$0xff] 0.0
      %227 = vst [vmem:[#allocation2 + $0xe8] sm:$0x3] 0.0
      %228 = vst [vmem:[#allocation2 + $0xf0] sm:$0xff] 0.0
      %229 = vst [vmem:[#allocation2 + $0xf8] sm:$0xff] 0.0
      %230 = vst [vmem:[#allocation2 + $0x100] sm:$0x3] 0.0
      %231 = vst [vmem:[#allocation2 + $0x108] sm:$0xff] 0.0
      %232 = vst [vmem:[#allocation2 + $0x110] sm:$0xff] 0.0
      %233 = vst [vmem:[#allocation2 + $0x118] sm:$0x3] 0.0
      %234 = vst [vmem:[#allocation2 + $0x120] sm:$0xff] 0.0
      %235 = vst [vmem:[#allocation2 + $0x128] sm:$0xff] 0.0
      %236 = vst [vmem:[#allocation2 + $0x130] sm:$0x3] 0.0
      %237 = vst [vmem:[#allocation2 + $0x138] sm:$0xff] 0.0
      %238 = vst [vmem:[#allocation2 + $0x140] sm:$0xff] 0.0
      %239 = vst [vmem:[#allocation2 + $0x148] sm:$0x3] 0.0
      %240 = vst [vmem:[#allocation2 + $0x150] sm:$0xff] 0.0
      %241 = vst [vmem:[#allocation2 + $0x158] sm:$0xff] 0.0
      %242 = vst [vmem:[#allocation2 + $0x160] sm:$0x3] 0.0
      %243 = vst [vmem:[#allocation2 + $0x168] sm:$0xff] 0.0
      %244 = vst [vmem:[#allocation2 + $0x170] sm:$0xff] 0.0
      %245 = vst [vmem:[#allocation2 + $0x178] sm:$0x3] 0.0
      %246 = vst [vmem:[#allocation2 + $0x180] sm:$0xff] 0.0
      %247 = vst [vmem:[#allocation2 + $0x188] sm:$0xff] 0.0
      %248 = vst [vmem:[#allocation2 + $0x190] sm:$0x3] 0.0
      %249 = vst [vmem:[#allocation2 + $0x198] sm:$0xff] 0.0
      %250 = vst [vmem:[#allocation2 + $0x1a0] sm:$0xff] 0.0
      %251 = vst [vmem:[#allocation2 + $0x1a8] sm:$0x3] 0.0
      %v252 = vld [vmem:[%s192] sm:$0xf]
      %v253 = vld [vmem:[%s192 + $0x4] sm:$0xf]
      %v254 = vld [vmem:[%s192 + $0x8] sm:$0xf]
      %v255 = vld [vmem:[%s192 + $0xc] sm:$0xf]
      %v256 = vld [vmem:[%s192 + $0x10] sm:$0xf]
      %v257 = vld [vmem:[%s192 + $0x14] sm:$0xf]
      %v258 = vld [vmem:[%s192 + $0x18] sm:$0xf]
      %v259 = vld [vmem:[%s192 + $0x1c] sm:$0xf]
      %v260 = vld [vmem:[%s192 + $0x20] sm:$0xf]
      %v261 = vld [vmem:[%s192 + $0x24] sm:$0xf]
      %v262 = vld [vmem:[%s192 + $0x28] sm:$0xf]
      %v263 = vld [vmem:[%s192 + $0x2c] sm:$0xf]
      %v264 = vld [vmem:[%s192 + $0x30] sm:$0xf]
      %v265 = vld [vmem:[%s192 + $0x34] sm:$0xf]
      %v266 = vld [vmem:[%s192 + $0x38] sm:$0xf]
      %v267 = vld [vmem:[%s192 + $0x3c] sm:$0xf]
      %v268 = vld [vmem:[%s192 + $0x40] sm:$0xf]
      %v269 = vld [vmem:[%s192 + $0x44] sm:$0xf]
      %v270 = vld [vmem:[%s192 + $0x48] sm:$0xf]
      %v271 = vld [vmem:[%s192 + $0x4c] sm:$0xf]
      %v272 = vld [vmem:[%s192 + $0x50] sm:$0xf]
      %v273 = vld [vmem:[%s192 + $0x54] sm:$0xf]
      %v274 = vld [vmem:[%s192 + $0x58] sm:$0xf]
      %v275 = vld [vmem:[%s192 + $0x5c] sm:$0xf]
      %v276 = vld [vmem:[%s192 + $0x60] sm:$0xf]
      %v277 = vld [vmem:[%s192 + $0x64] sm:$0xf]
      %v278 = vld [vmem:[%s192 + $0x68] sm:$0xf]
      %v279 = vld [vmem:[%s192 + $0x6c] sm:$0xf]
      %v280 = vld [vmem:[%s192 + $0x70] sm:$0xf]
      %v281 = vld [vmem:[%s192 + $0x74] sm:$0xf]
      %v282 = vld [vmem:[%s192 + $0x78] sm:$0xf]
      %v283 = vld [vmem:[%s192 + $0x7c] sm:$0xf]
      %v284 = vunpack.c.l.bf16 %v252
      %v285 = vunpack.c.l.bf16 %v253
      %v286 = vunpack.c.l.bf16 %v254
      %v287 = vunpack.c.l.bf16 %v255
      %v288 = vunpack.c.l.bf16 %v256
      %v289 = vunpack.c.l.bf16 %v257
      %v290 = vunpack.c.l.bf16 %v258
      %v291 = vunpack.c.l.bf16 %v259
      %v292 = vunpack.c.l.bf16 %v260
      %v293 = vunpack.c.l.bf16 %v261
      %v294 = vunpack.c.l.bf16 %v262
      %v295 = vunpack.c.l.bf16 %v263
      %v296 = vunpack.c.l.bf16 %v264
      %v297 = vunpack.c.l.bf16 %v265
      %v298 = vunpack.c.l.bf16 %v266
      %v299 = vunpack.c.l.bf16 %v267
      %v300 = vunpack.c.l.bf16 %v268
      %v301 = vunpack.c.l.bf16 %v269
      %v302 = vunpack.c.l.bf16 %v270
      %v303 = vunpack.c.l.bf16 %v271
      %v304 = vunpack.c.l.bf16 %v272
      %v305 = vunpack.c.l.bf16 %v273
      %v306 = vunpack.c.l.bf16 %v274
      %v307 = vunpack.c.l.bf16 %v275
      %v308 = vunpack.c.l.bf16 %v276
      %v309 = vunpack.c.l.bf16 %v277
      %v310 = vunpack.c.l.bf16 %v278
      %v311 = vunpack.c.l.bf16 %v279
      %v312 = vunpack.c.l.bf16 %v280
      %v313 = vunpack.c.l.bf16 %v281
      %v314 = vunpack.c.l.bf16 %v282
      %v315 = vunpack.c.l.bf16 %v283
      %s316 = scalar_lea.vmem [#allocation2], 24
      %317 = vst [vmem:[%s316 + $0x1] sm:$0xff] %v284
      %318 = vst [vmem:[%s316 + $0x9] sm:$0xff] %v285
      %319 = vst [vmem:[%s316 + $0x19] sm:$0xff] %v286
      %320 = vst [vmem:[%s316 + $0x21] sm:$0xff] %v287
      %321 = vst [vmem:[%s316 + $0x31] sm:$0xff] %v288
      %322 = vst [vmem:[%s316 + $0x39] sm:$0xff] %v289
      %323 = vst [vmem:[%s316 + $0x49] sm:$0xff] %v290
      %324 = vst [vmem:[%s316 + $0x51] sm:$0xff] %v291
      %325 = vst [vmem:[%s316 + $0x61] sm:$0xff] %v292
      %326 = vst [vmem:[%s316 + $0x69] sm:$0xff] %v293
      %327 = vst [vmem:[%s316 + $0x79] sm:$0xff] %v294
      %328 = vst [vmem:[%s316 + $0x81] sm:$0xff] %v295
      %329 = vst [vmem:[%s316 + $0x91] sm:$0xff] %v296
      %330 = vst [vmem:[%s316 + $0x99] sm:$0xff] %v297
      %331 = vst [vmem:[%s316 + $0xa9] sm:$0xff] %v298
      %332 = vst [vmem:[%s316 + $0xb1] sm:$0xff] %v299
      %333 = vst [vmem:[%s316 + $0xc1] sm:$0xff] %v300
      %334 = vst [vmem:[%s316 + $0xc9] sm:$0xff] %v301
      %335 = vst [vmem:[%s316 + $0xd9] sm:$0xff] %v302
      %336 = vst [vmem:[%s316 + $0xe1] sm:$0xff] %v303
      %337 = vst [vmem:[%s316 + $0xf1] sm:$0xff] %v304
      %338 = vst [vmem:[%s316 + $0xf9] sm:$0xff] %v305
      %339 = vst [vmem:[%s316 + $0x109] sm:$0xff] %v306
      %340 = vst [vmem:[%s316 + $0x111] sm:$0xff] %v307
      %341 = vst [vmem:[%s316 + $0x121] sm:$0xff] %v308
      %342 = vst [vmem:[%s316 + $0x129] sm:$0xff] %v309
      %343 = vst [vmem:[%s316 + $0x139] sm:$0xff] %v310
      %344 = vst [vmem:[%s316 + $0x141] sm:$0xff] %v311
      %345 = vst [vmem:[%s316 + $0x151] sm:$0xff] %v312
      %346 = vst [vmem:[%s316 + $0x159] sm:$0xff] %v313
      %347 = vst [vmem:[%s316 + $0x169] sm:$0xff] %v314
      %348 = vst [vmem:[%s316 + $0x171] sm:$0xff] %v315
      %v349 = vld [vmem:[#allocation2] ss:$2 sm:$0xff]
      %s350 = scalar_lea.vmem [#allocation2], 48
      %v351 = vld [vmem:[%s350] ss:$2 sm:$0xff]
      %s352 = scalar_lea.vmem [#allocation2], 96
      %v353 = vld [vmem:[%s352] ss:$2 sm:$0xff]
      %s354 = scalar_lea.vmem [#allocation2], 144
      %v355 = vld [vmem:[%s354] ss:$2 sm:$0xff]
      %s356 = scalar_lea.vmem [#allocation2], 192
      %v357 = vld [vmem:[%s356] ss:$2 sm:$0xff]
      %s358 = scalar_lea.vmem [#allocation2], 240
      %v359 = vld [vmem:[%s358] ss:$2 sm:$0xff]
      %s360 = scalar_lea.vmem [#allocation2], 288
      %v361 = vld [vmem:[%s360] ss:$2 sm:$0xff]
      %s362 = scalar_lea.vmem [#allocation2], 336
      %v363 = vld [vmem:[%s362] ss:$2 sm:$0xff]
      %v364 = vld [vmem:[%s1] sm:$0x1]
      %v365 = vperm.slane %v364, 0
      %v366 = vmul.f32 %v349, %v365
      %v367 = vmul.f32 %v351, %v365
      %v368 = vmul.f32 %v353, %v365
      %v369 = vmul.f32 %v355, %v365
      %v370 = vmul.f32 %v357, %v365
      %v371 = vmul.f32 %v359, %v365
      %v372 = vmul.f32 %v361, %v365
      %v373 = vmul.f32 %v363, %v365
      %v374 = vadd.f32 %v366, 0.0
      %v375 = vadd.f32 %v367, 0.0
      %v376 = vadd.f32 %v368, 0.0
      %v377 = vadd.f32 %v369, 0.0
      %v378 = vadd.f32 %v370, 0.0
      %v379 = vadd.f32 %v371, 0.0
      %v380 = vadd.f32 %v372, 0.0
      %v381 = vadd.f32 %v373, 0.0
      %s382 = scalar_lea.vmem [#allocation2], 1
      %v383 = vld [vmem:[%s382] ss:$2 sm:$0xff]
      %s384 = scalar_lea.vmem [#allocation2], 49
      %v385 = vld [vmem:[%s384] ss:$2 sm:$0xff]
      %s386 = scalar_lea.vmem [#allocation2], 97
      %v387 = vld [vmem:[%s386] ss:$2 sm:$0xff]
      %s388 = scalar_lea.vmem [#allocation2], 145
      %v389 = vld [vmem:[%s388] ss:$2 sm:$0xff]
      %s390 = scalar_lea.vmem [#allocation2], 193
      %v391 = vld [vmem:[%s390] ss:$2 sm:$0xff]
      %s392 = scalar_lea.vmem [#allocation2], 241
      %v393 = vld [vmem:[%s392] ss:$2 sm:$0xff]
      %s394 = scalar_lea.vmem [#allocation2], 289
      %v395 = vld [vmem:[%s394] ss:$2 sm:$0xff]
      %s396 = scalar_lea.vmem [#allocation2], 337
      %v397 = vld [vmem:[%s396] ss:$2 sm:$0xff]
      %v398 = vld [vmem:[%s1 + $0x1] sm:$0x1]
      %v399 = vperm.slane %v398, 0
      %v400 = vmul.f32 %v383, %v399
      %v401 = vmul.f32 %v385, %v399
      %v402 = vmul.f32 %v387, %v399
      %v403 = vmul.f32 %v389, %v399
      %v404 = vmul.f32 %v391, %v399
      %v405 = vmul.f32 %v393, %v399
      %v406 = vmul.f32 %v395, %v399
      %v407 = vmul.f32 %v397, %v399
      %v408 = vadd.f32 %v374, %v400
      %v409 = vadd.f32 %v375, %v401
      %v410 = vadd.f32 %v376, %v402
      %v411 = vadd.f32 %v377, %v403
      %v412 = vadd.f32 %v378, %v404
      %v413 = vadd.f32 %v379, %v405
      %v414 = vadd.f32 %v380, %v406
      %v415 = vadd.f32 %v381, %v407
      %s416 = scalar_lea.vmem [#allocation2], 2
      %v417 = vld [vmem:[%s416] ss:$2 sm:$0xff]
      %s418 = scalar_lea.vmem [#allocation2], 50
      %v419 = vld [vmem:[%s418] ss:$2 sm:$0xff]
      %s420 = scalar_lea.vmem [#allocation2], 98
      %v421 = vld [vmem:[%s420] ss:$2 sm:$0xff]
      %s422 = scalar_lea.vmem [#allocation2], 146
      %v423 = vld [vmem:[%s422] ss:$2 sm:$0xff]
      %s424 = scalar_lea.vmem [#allocation2], 194
      %v425 = vld [vmem:[%s424] ss:$2 sm:$0xff]
      %s426 = scalar_lea.vmem [#allocation2], 242
      %v427 = vld [vmem:[%s426] ss:$2 sm:$0xff]
      %s428 = scalar_lea.vmem [#allocation2], 290
      %v429 = vld [vmem:[%s428] ss:$2 sm:$0xff]
      %s430 = scalar_lea.vmem [#allocation2], 338
      %v431 = vld [vmem:[%s430] ss:$2 sm:$0xff]
      %v432 = vld [vmem:[%s1 + $0x2] sm:$0x1]
      %v433 = vperm.slane %v432, 0
      %v434 = vmul.f32 %v417, %v433
      %v435 = vmul.f32 %v419, %v433
      %v436 = vmul.f32 %v421, %v433
      %v437 = vmul.f32 %v423, %v433
      %v438 = vmul.f32 %v425, %v433
      %v439 = vmul.f32 %v427, %v433
      %v440 = vmul.f32 %v429, %v433
      %v441 = vmul.f32 %v431, %v433
      %v442 = vadd.f32 %v408, %v434
      %v443 = vadd.f32 %v409, %v435
      %v444 = vadd.f32 %v410, %v436
      %v445 = vadd.f32 %v411, %v437
      %v446 = vadd.f32 %v412, %v438
      %v447 = vadd.f32 %v413, %v439
      %v448 = vadd.f32 %v414, %v440
      %v449 = vadd.f32 %v415, %v441
      %v450 = vld [vmem:[%s316] ss:$2 sm:$0xff]
      %s451 = scalar_lea.vmem %s316, 48 [#allocation2]
      %v452 = vld [vmem:[%s451] ss:$2 sm:$0xff]
      %s453 = scalar_lea.vmem %s316, 96 [#allocation2]
      %v454 = vld [vmem:[%s453] ss:$2 sm:$0xff]
      %s455 = scalar_lea.vmem %s316, 144 [#allocation2]
      %v456 = vld [vmem:[%s455] ss:$2 sm:$0xff]
      %s457 = scalar_lea.vmem %s316, 192 [#allocation2]
      %v458 = vld [vmem:[%s457] ss:$2 sm:$0xff]
      %s459 = scalar_lea.vmem %s316, 240 [#allocation2]
      %v460 = vld [vmem:[%s459] ss:$2 sm:$0xff]
      %s461 = scalar_lea.vmem %s316, 288 [#allocation2]
      %v462 = vld [vmem:[%s461] ss:$2 sm:$0xff]
      %s463 = scalar_lea.vmem %s316, 336 [#allocation2]
      %v464 = vld [vmem:[%s463] ss:$2 sm:$0xff]
      %v465 = vld [vmem:[%s1 + $0x3] sm:$0x1]
      %v466 = vperm.slane %v465, 0
      %v467 = vmul.f32 %v450, %v466
      %v468 = vmul.f32 %v452, %v466
      %v469 = vmul.f32 %v454, %v466
      %v470 = vmul.f32 %v456, %v466
      %v471 = vmul.f32 %v458, %v466
      %v472 = vmul.f32 %v460, %v466
      %v473 = vmul.f32 %v462, %v466
      %v474 = vmul.f32 %v464, %v466
      %v475 = vadd.f32 %v442, %v467
      %v476 = vadd.f32 %v443, %v468
      %v477 = vadd.f32 %v444, %v469
      %v478 = vadd.f32 %v445, %v470
      %v479 = vadd.f32 %v446, %v471
      %v480 = vadd.f32 %v447, %v472
      %v481 = vadd.f32 %v448, %v473
      %v482 = vadd.f32 %v449, %v474
      %s483 = scalar_lea.vmem %s316, 1 [#allocation2]
      %v484 = vld [vmem:[%s483] ss:$2 sm:$0xff]
      %s485 = scalar_lea.vmem %s316, 49 [#allocation2]
      %v486 = vld [vmem:[%s485] ss:$2 sm:$0xff]
      %s487 = scalar_lea.vmem %s316, 97 [#allocation2]
      %v488 = vld [vmem:[%s487] ss:$2 sm:$0xff]
      %s489 = scalar_lea.vmem %s316, 145 [#allocation2]
      %v490 = vld [vmem:[%s489] ss:$2 sm:$0xff]
      %s491 = scalar_lea.vmem %s316, 193 [#allocation2]
      %v492 = vld [vmem:[%s491] ss:$2 sm:$0xff]
      %s493 = scalar_lea.vmem %s316, 241 [#allocation2]
      %v494 = vld [vmem:[%s493] ss:$2 sm:$0xff]
      %s495 = scalar_lea.vmem %s316, 289 [#allocation2]
      %v496 = vld [vmem:[%s495] ss:$2 sm:$0xff]
      %s497 = scalar_lea.vmem %s316, 337 [#allocation2]
      %v498 = vld [vmem:[%s497] ss:$2 sm:$0xff]
      %v499 = vld [vmem:[%s1 + $0x4] sm:$0x1]
      %v500 = vperm.slane %v499, 0
      %v501 = vmul.f32 %v484, %v500
      %v502 = vmul.f32 %v486, %v500
      %v503 = vmul.f32 %v488, %v500
      %v504 = vmul.f32 %v490, %v500
      %v505 = vmul.f32 %v492, %v500
      %v506 = vmul.f32 %v494, %v500
      %v507 = vmul.f32 %v496, %v500
      %v508 = vmul.f32 %v498, %v500
      %v509 = vadd.f32 %v475, %v501
      %v510 = vadd.f32 %v476, %v502
      %v511 = vadd.f32 %v477, %v503
      %v512 = vadd.f32 %v478, %v504
      %v513 = vadd.f32 %v479, %v505
      %v514 = vadd.f32 %v480, %v506
      %v515 = vadd.f32 %v481, %v507
      %v516 = vadd.f32 %v482, %v508
      %s517 = scalar_lea.vmem %s316, 2 [#allocation2]
      %v518 = vld [vmem:[%s517] ss:$2 sm:$0xff]
      %s519 = scalar_lea.vmem %s316, 50 [#allocation2]
      %v520 = vld [vmem:[%s519] ss:$2 sm:$0xff]
      %s521 = scalar_lea.vmem %s316, 98 [#allocation2]
      %v522 = vld [vmem:[%s521] ss:$2 sm:$0xff]
      %s523 = scalar_lea.vmem %s316, 146 [#allocation2]
      %v524 = vld [vmem:[%s523] ss:$2 sm:$0xff]
      %s525 = scalar_lea.vmem %s316, 194 [#allocation2]
      %v526 = vld [vmem:[%s525] ss:$2 sm:$0xff]
      %s527 = scalar_lea.vmem %s316, 242 [#allocation2]
      %v528 = vld [vmem:[%s527] ss:$2 sm:$0xff]
      %s529 = scalar_lea.vmem %s316, 290 [#allocation2]
      %v530 = vld [vmem:[%s529] ss:$2 sm:$0xff]
      %s531 = scalar_lea.vmem %s316, 338 [#allocation2]
      %v532 = vld [vmem:[%s531] ss:$2 sm:$0xff]
      %v533 = vld [vmem:[%s1 + $0x5] sm:$0x1]
      %v534 = vperm.slane %v533, 0
      %v535 = vmul.f32 %v518, %v534
      %v536 = vmul.f32 %v520, %v534
      %v537 = vmul.f32 %v522, %v534
      %v538 = vmul.f32 %v524, %v534
      %v539 = vmul.f32 %v526, %v534
      %v540 = vmul.f32 %v528, %v534
      %v541 = vmul.f32 %v530, %v534
      %v542 = vmul.f32 %v532, %v534
      %v543 = vadd.f32 %v509, %v535
      %v544 = vadd.f32 %v510, %v536
      %v545 = vadd.f32 %v511, %v537
      %v546 = vadd.f32 %v512, %v538
      %v547 = vadd.f32 %v513, %v539
      %v548 = vadd.f32 %v514, %v540
      %v549 = vadd.f32 %v515, %v541
      %v550 = vadd.f32 %v516, %v542
      %s551 = scalar_lea.vmem [#allocation2], 48
      %v552 = vld [vmem:[%s551] ss:$2 sm:$0xff]
      %s553 = scalar_lea.vmem %s551, 48 [#allocation2]
      %v554 = vld [vmem:[%s553] ss:$2 sm:$0xff]
      %s555 = scalar_lea.vmem %s551, 96 [#allocation2]
      %v556 = vld [vmem:[%s555] ss:$2 sm:$0xff]
      %s557 = scalar_lea.vmem %s551, 144 [#allocation2]
      %v558 = vld [vmem:[%s557] ss:$2 sm:$0xff]
      %s559 = scalar_lea.vmem %s551, 192 [#allocation2]
      %v560 = vld [vmem:[%s559] ss:$2 sm:$0xff]
      %s561 = scalar_lea.vmem %s551, 240 [#allocation2]
      %v562 = vld [vmem:[%s561] ss:$2 sm:$0xff]
      %s563 = scalar_lea.vmem %s551, 288 [#allocation2]
      %v564 = vld [vmem:[%s563] ss:$2 sm:$0xff]
      %s565 = scalar_lea.vmem %s551, 336 [#allocation2]
      %v566 = vld [vmem:[%s565] ss:$2 sm:$0xff]
      %v567 = vld [vmem:[%s1 + $0x6] sm:$0x1]
      %v568 = vperm.slane %v567, 0
      %v569 = vmul.f32 %v552, %v568
      %v570 = vmul.f32 %v554, %v568
      %v571 = vmul.f32 %v556, %v568
      %v572 = vmul.f32 %v558, %v568
      %v573 = vmul.f32 %v560, %v568
      %v574 = vmul.f32 %v562, %v568
      %v575 = vmul.f32 %v564, %v568
      %v576 = vmul.f32 %v566, %v568
      %v577 = vadd.f32 %v543, %v569
      %v578 = vadd.f32 %v544, %v570
      %v579 = vadd.f32 %v545, %v571
      %v580 = vadd.f32 %v546, %v572
      %v581 = vadd.f32 %v547, %v573
      %v582 = vadd.f32 %v548, %v574
      %v583 = vadd.f32 %v549, %v575
      %v584 = vadd.f32 %v550, %v576
      %s585 = scalar_lea.vmem %s551, 1 [#allocation2]
      %v586 = vld [vmem:[%s585] ss:$2 sm:$0xff]
      %s587 = scalar_lea.vmem %s551, 49 [#allocation2]
      %v588 = vld [vmem:[%s587] ss:$2 sm:$0xff]
      %s589 = scalar_lea.vmem %s551, 97 [#allocation2]
      %v590 = vld [vmem:[%s589] ss:$2 sm:$0xff]
      %s591 = scalar_lea.vmem %s551, 145 [#allocation2]
      %v592 = vld [vmem:[%s591] ss:$2 sm:$0xff]
      %s593 = scalar_lea.vmem %s551, 193 [#allocation2]
      %v594 = vld [vmem:[%s593] ss:$2 sm:$0xff]
      %s595 = scalar_lea.vmem %s551, 241 [#allocation2]
      %v596 = vld [vmem:[%s595] ss:$2 sm:$0xff]
      %s597 = scalar_lea.vmem %s551, 289 [#allocation2]
      %v598 = vld [vmem:[%s597] ss:$2 sm:$0xff]
      %s599 = scalar_lea.vmem %s551, 337 [#allocation2]
      %v600 = vld [vmem:[%s599] ss:$2 sm:$0xff]
      %v601 = vld [vmem:[%s1 + $0x7] sm:$0x1]
      %v602 = vperm.slane %v601, 0
      %v603 = vmul.f32 %v586, %v602
      %v604 = vmul.f32 %v588, %v602
      %v605 = vmul.f32 %v590, %v602
      %v606 = vmul.f32 %v592, %v602
      %v607 = vmul.f32 %v594, %v602
      %v608 = vmul.f32 %v596, %v602
      %v609 = vmul.f32 %v598, %v602
      %v610 = vmul.f32 %v600, %v602
      %v611 = vadd.f32 %v577, %v603
      %v612 = vadd.f32 %v578, %v604
      %v613 = vadd.f32 %v579, %v605
      %v614 = vadd.f32 %v580, %v606
      %v615 = vadd.f32 %v581, %v607
      %v616 = vadd.f32 %v582, %v608
      %v617 = vadd.f32 %v583, %v609
      %v618 = vadd.f32 %v584, %v610
      %s619 = scalar_lea.vmem %s551, 2 [#allocation2]
      %v620 = vld [vmem:[%s619] ss:$2 sm:$0xff]
      %s621 = scalar_lea.vmem %s551, 50 [#allocation2]
      %v622 = vld [vmem:[%s621] ss:$2 sm:$0xff]
      %s623 = scalar_lea.vmem %s551, 98 [#allocation2]
      %v624 = vld [vmem:[%s623] ss:$2 sm:$0xff]
      %s625 = scalar_lea.vmem %s551, 146 [#allocation2]
      %v626 = vld [vmem:[%s625] ss:$2 sm:$0xff]
      %s627 = scalar_lea.vmem %s551, 194 [#allocation2]
      %v628 = vld [vmem:[%s627] ss:$2 sm:$0xff]
      %s629 = scalar_lea.vmem %s551, 242 [#allocation2]
      %v630 = vld [vmem:[%s629] ss:$2 sm:$0xff]
      %s631 = scalar_lea.vmem %s551, 290 [#allocation2]
      %v632 = vld [vmem:[%s631] ss:$2 sm:$0xff]
      %s633 = scalar_lea.vmem %s551, 338 [#allocation2]
      %v634 = vld [vmem:[%s633] ss:$2 sm:$0xff]
      %v635 = vld [vmem:[%s1 + $0x8] sm:$0x1]
      %v636 = vperm.slane %v635, 0
      %v637 = vmul.f32 %v620, %v636
      %v638 = vmul.f32 %v622, %v636
      %v639 = vmul.f32 %v624, %v636
      %v640 = vmul.f32 %v626, %v636
      %v641 = vmul.f32 %v628, %v636
      %v642 = vmul.f32 %v630, %v636
      %v643 = vmul.f32 %v632, %v636
      %v644 = vmul.f32 %v634, %v636
      %v645 = vadd.f32 %v611, %v637
      %v646 = vadd.f32 %v612, %v638
      %v647 = vadd.f32 %v613, %v639
      %v648 = vadd.f32 %v614, %v640
      %v649 = vadd.f32 %v615, %v641
      %v650 = vadd.f32 %v616, %v642
      %v651 = vadd.f32 %v617, %v643
      %v652 = vadd.f32 %v618, %v644
      %v653 = vpack.c.bf16 %v646, %v645
      %v654 = vpack.c.bf16 %v648, %v647
      %v655 = vpack.c.bf16 %v650, %v649
      %v656 = vpack.c.bf16 %v652, %v651
      %v657 = vld [vmem:[%s2] sm:$0xf]
      %v658 = vld [vmem:[%s2 + $0x4] sm:$0xf]
      %v659 = vld [vmem:[%s2 + $0x8] sm:$0xf]
      %v660 = vld [vmem:[%s2 + $0xc] sm:$0xf]
      %v661 = vld [vmem:[%s2 + $0x10] sm:$0xf]
      %v662 = vld [vmem:[%s2 + $0x14] sm:$0xf]
      %v663 = vld [vmem:[%s2 + $0x18] sm:$0xf]
      %v664 = vld [vmem:[%s2 + $0x1c] sm:$0xf]
      %v665 = vld [vmem:[%s2 + $0x20] sm:$0xf]
      %v666 = vld [vmem:[%s2 + $0x24] sm:$0xf]
      %v667 = vld [vmem:[%s2 + $0x28] sm:$0xf]
      %v668 = vld [vmem:[%s2 + $0x2c] sm:$0xf]
      %v669 = vld [vmem:[%s2 + $0x30] sm:$0xf]
      %v670 = vld [vmem:[%s2 + $0x34] sm:$0xf]
      %v671 = vld [vmem:[%s2 + $0x38] sm:$0xf]
      %v672 = vld [vmem:[%s2 + $0x3c] sm:$0xf]
      %v673 = vld [vmem:[%s3] sm:$0x1]
      %v675 = vperm.slane %v673, 0
      %v693 = vunpack.c.l.b16 %v657
      %v694 = vunpack.c.l.b16 %v658
      %v695 = vunpack.c.l.b16 %v659
      %v696 = vunpack.c.l.b16 %v660
      %v697 = vunpack.c.l.b16 %v661
      %v698 = vunpack.c.l.b16 %v662
      %v699 = vunpack.c.l.b16 %v663
      %v700 = vunpack.c.l.b16 %v664
      %v701 = vunpack.c.l.b16 %v665
      %v702 = vunpack.c.l.b16 %v666
      %v703 = vunpack.c.l.b16 %v667
      %v704 = vunpack.c.l.b16 %v668
      %v705 = vunpack.c.l.b16 %v669
      %v706 = vunpack.c.l.b16 %v670
      %v707 = vunpack.c.l.b16 %v671
      %v708 = vunpack.c.l.b16 %v672
      %v709 = vpack.c.b16 %v694, %v693
      %v710 = vpack.c.b16 %v696, %v695
      %v711 = vpack.c.b16 %v698, %v697
      %v712 = vpack.c.b16 %v700, %v699
      %v713 = vpack.c.b16 %v702, %v701
      %v714 = vpack.c.b16 %v704, %v703
      %v715 = vpack.c.b16 %v706, %v705
      %v716 = vpack.c.b16 %v708, %v707
      %725 = vmatpush.bf16.msra.mxu0 %v716
      %726 = vmatpush.bf16.msra.mxu0 %v715
      %727 = vmatpush.bf16.msra.mxu0 %v714
      %728 = vmatpush.bf16.msra.mxu0 %v713
      %729 = vmatpush.bf16.msra.mxu0 %v712
      %730 = vmatpush.bf16.msra.mxu0 %v711
      %731 = vmatpush.bf16.msra.mxu0 %v710
      %732 = vmatpush.bf16.msra.mxu0 %v709
      %733 = vmatmul.bf16.gmra.mxu0 %v653
      %v734 = vpop.f32.mrf.mxu0
      %v735 = vadd.f32 %v675, %v734
      %v736 = vpop.f32.mrf.mxu0
      %v737 = vadd.f32 %v675, %v736
      %738 = vmatmul.bf16.gmra.mxu0 %v654
      %v739 = vpop.f32.mrf.mxu0
      %v740 = vadd.f32 %v675, %v739
      %v741 = vpop.f32.mrf.mxu0
      %v742 = vadd.f32 %v675, %v741
      %743 = vmatmul.bf16.gmra.mxu0 %v655
      %v744 = vpop.f32.mrf.mxu0
      %v745 = vadd.f32 %v675, %v744
      %v746 = vpop.f32.mrf.mxu0
      %v747 = vadd.f32 %v675, %v746
      %748 = vmatmul.bf16.gmra.mxu0 %v656
      %v749 = vpop.f32.mrf.mxu0
      %v750 = vadd.f32 %v675, %v749
      %v751 = vpop.f32.mrf.mxu0
      %v752 = vadd.f32 %v675, %v751
      %753 = vdwg.mxu0
      %v754 = vmax.f32 %v735, 0.0
      %v755 = vmax.f32 %v737, 0.0
      %v756 = vmax.f32 %v740, 0.0
      %v757 = vmax.f32 %v742, 0.0
      %v758 = vmax.f32 %v745, 0.0
      %v759 = vmax.f32 %v747, 0.0
      %v760 = vmax.f32 %v750, 0.0
      %v761 = vmax.f32 %v752, 0.0
      %v762 = vpack.c.bf16 %v754, %v754
      %v763 = vpack.c.bf16 %v755, %v755
      %v764 = vpack.c.bf16 %v756, %v756
      %v765 = vpack.c.bf16 %v757, %v757
      %v766 = vpack.c.bf16 %v758, %v758
      %v767 = vpack.c.bf16 %v759, %v759
      %v768 = vpack.c.bf16 %v760, %v760
      %v769 = vpack.c.bf16 %v761, %v761
      %770 = vst [vmem:[%s197] sm:$0xf] %v762
      %771 = vst [vmem:[%s197 + $0x4] sm:$0xf] %v763
      %772 = vst [vmem:[%s197 + $0x8] sm:$0xf] %v764
      %773 = vst [vmem:[%s197 + $0xc] sm:$0xf] %v765
      %774 = vst [vmem:[%s197 + $0x10] sm:$0xf] %v766
      %775 = vst [vmem:[%s197 + $0x14] sm:$0xf] %v767
      %776 = vst [vmem:[%s197 + $0x18] sm:$0xf] %v768
      %777 = vst [vmem:[%s197 + $0x1c] sm:$0xf] %v769
      %p778 = scmp.lt.s32.totalorder %s15, 1
      %s779 = scalar_select %p778, %s15, 1
      %s780 = smul.addr %s779, 8
      %s781 = smul.addr %s780, 4
      %s782 = scalar_lea.vmem %s4, %s781
      // Predicated region
      $region37: #{_lambda_.7} parent=35 // pred_check
        %p783 = pneg %p122
      $region38: #{_lambda_.7} parent=35 // pred_check_branch
        %785 = sbr.rel (%p783) target = $region40
      $region39: #{_lambda_.7} parent=35 // pred_region
        _
      $region40: #{_lambda_.7} parent=35 // pred_fallthru
        _
    $region36: #{_lambda_.7} parent=5 // pred_fallthru
      _
    %p786 = scmp.le.s32.totalorder 2, %s10
    // Predicated region
    $region41: #{_lambda_.7} parent=5 // pred_check
      %p787 = pneg %p786
    $region42: #{_lambda_.7} parent=5 // pred_check_branch
      %789 = sbr.rel (%p787) target = $region44
    $region43: #{_lambda_.7} parent=5 // pred_region
      %s790 = ssub.s32 %s10, 2
      // Predicated region
      $region45: #{_lambda_.7} parent=43 // pred_check
        %p791 = pneg %p128
      $region46: #{_lambda_.7} parent=43 // pred_check_branch
        %793 = sbr.rel (%p791) target = $region48
      $region47: #{_lambda_.7} parent=43 // pred_region
        %p794 = scmp.lt.s32.totalorder %s16, 1
        %s795 = scalar_select %p794, %s16, 1
        %s796 = smul.addr %s795, 8
        %s797 = smul.addr %s796, 4
        %s798 = scalar_lea.vmem %s4, %s797
      $region48: #{_lambda_.7} parent=43 // pred_fallthru
        _
    $region44: #{_lambda_.7} parent=5 // pred_fallthru
      _
  $region6: #{_lambda_.7} parent=0 // loop_footer
    %s14 = sadd.s32 1, %s10
  $region7: #{_lambda_.7} parent=0 // loop_footer_branch
    %9 = sbr.rel target = $region3
  $region8: #{_lambda_.7} parent=0 // loop_exit
    _

</llo_original>
